<compile_context>
chip_gen: v7x
topology: tpu7x:2x2x1
jax: 0.10.0
libtpu: 0.0.40
codegen_flags: <defaults>
</compile_context>

<pallas_src>
import functools

import jax
import jax.numpy as jnp
from jax.experimental import pallas as pl
from jax.experimental.pallas import tpu as pltpu


def _round_up(x, m):
    return (x + m - 1) // m * m


# ---------------------------------------------------------------------------
# Fused kernel: LSTM stack (single time step) on vocab-tile 0, classifier
# tiled over the vocab with online logsumexp carried in VMEM scratch, and the
# log-softmax subtraction applied in place on the resident logits block.
# ---------------------------------------------------------------------------
def _decoder_kernel(emb_ref, h0_ref, c0_ref, wx_ref, wh_ref, b_ref,
                    wcls_ref, bcls_ref,
                    out_ref, hout_ref, cout_ref,
                    x_scr, m_scr, l_scr,
                    *, n_layers, hid_dim, tile_v, w_dtype):
    Hp = hid_dim
    j = pl.program_id(0)

    # --- LSTM phase: only on the first vocab tile --------------------------
    @pl.when(j == 0)
    def _lstm():
        x = emb_ref[...].astype(w_dtype)                    # (Bp, Hp)
        for l in range(n_layers):
            h_prev = h0_ref[l]                               # (Bp, Hp) f32
            c_prev = c0_ref[l]
            gates = (jnp.dot(x, wx_ref[l],
                             preferred_element_type=jnp.float32)
                     + jnp.dot(h_prev.astype(w_dtype), wh_ref[l],
                               preferred_element_type=jnp.float32)
                     + b_ref[l])                             # (Bp, 4Hp) f32
            i_g = jax.nn.sigmoid(gates[:, 0 * Hp:1 * Hp])
            f_g = jax.nn.sigmoid(gates[:, 1 * Hp:2 * Hp])
            g_g = jnp.tanh(gates[:, 2 * Hp:3 * Hp])
            o_g = jax.nn.sigmoid(gates[:, 3 * Hp:4 * Hp])
            c_new = f_g * c_prev + i_g * g_g
            h_new = o_g * jnp.tanh(c_new)
            hout_ref[l] = h_new
            cout_ref[l] = c_new
            x = h_new.astype(w_dtype)
        x_scr[...] = x                                       # top-layer h (bf16)
        m_scr[...] = jnp.full(m_scr.shape, -jnp.inf, jnp.float32)
        l_scr[...] = jnp.zeros(l_scr.shape, jnp.float32)

    # --- classifier tile: raw logits + online logsumexp ---------------------
    logits = (jnp.dot(x_scr[...], wcls_ref[0],
                      preferred_element_type=jnp.float32)
              + bcls_ref[0])                                 # (Bp, TILE_V) f32
    col = pl.multiple_of(j * tile_v, tile_v)
    out_ref[:, pl.ds(col, tile_v)] = logits

    m_prev = m_scr[...]
    m_new = jnp.maximum(m_prev, jnp.max(logits, axis=-1, keepdims=True))
    l_scr[...] = (l_scr[...] * jnp.exp(m_prev - m_new)
                  + jnp.sum(jnp.exp(logits - m_new), axis=-1, keepdims=True))
    m_scr[...] = m_new

    # --- last tile: subtract lse in place -> HBM writeback is log_probs -----
    @pl.when(j == pl.num_programs(0) - 1)
    def _finalize():
        lse = m_scr[...] + jnp.log(l_scr[...])               # (Bp, 1)
        out_ref[...] = out_ref[...] - lse


# ---------------------------------------------------------------------------
# One-time parameter preparation (fusing / transposing / padding / casting).
# ---------------------------------------------------------------------------
def prepare_decoder_params(params, weight_dtype=jnp.bfloat16, tile_v=2048):
    emb = params["embedding"].astype(jnp.float32)            # (V, H)
    w_ih, w_hh = params["w_ih"], params["w_hh"]               # (L, 4H, H)
    b_ih, b_hh = params["b_ih"], params["b_hh"]               # (L, 4H)
    w_cls, b_cls = params["w_cls"], params["b_cls"]           # (V, H), (V,)

    L, four_h, H = w_ih.shape
    V = w_cls.shape[0]
    Hp = _round_up(H, 128)
    tile_v = _round_up(min(tile_v, _round_up(V, 128)), 128)
    Vp = _round_up(V, tile_v)
    n_tiles = Vp // tile_v

    # embedding: pad hidden dim with zeros (padded lanes stay exactly zero).
    emb_p = jnp.pad(emb, ((0, 0), (0, Hp - H)))

    # per-gate padding so the i/f/g/o blocks land on Hp boundaries.
    def pad_gate_w(w):  # (L, 4H, H) -> (L, 4Hp, Hp)
        w4 = w.astype(jnp.float32).reshape(L, 4, H, H)
        w4 = jnp.pad(w4, ((0, 0), (0, 0), (0, Hp - H), (0, Hp - H)))
        return w4.reshape(L, 4 * Hp, Hp)

    def pad_gate_b(b):  # (L, 4H) -> (L, 4Hp)
        b4 = b.astype(jnp.float32).reshape(L, 4, H)
        b4 = jnp.pad(b4, ((0, 0), (0, 0), (0, Hp - H)))
        return b4.reshape(L, 4 * Hp)

    # pre-transposed: (L, Hp, 4Hp) so the MXU is fed in (K, N) orientation.
    w_x = jnp.transpose(pad_gate_w(w_ih), (0, 2, 1)).astype(weight_dtype)
    w_h = jnp.transpose(pad_gate_w(w_hh), (0, 2, 1)).astype(weight_dtype)
    b_fused = (pad_gate_b(b_ih) + pad_gate_b(b_hh)).reshape(L, 1, 4 * Hp)

    # classifier: (V, H) -> contiguous per-tile slabs (n_tiles, Hp, TILE_V);
    # padded vocab columns are masked via a -1e30 bias so they vanish under
    # the (online) log-softmax.  Do NOT use -inf (0 * inf NaN in the online
    # lse update).
    w_cls_p = jnp.pad(w_cls.astype(jnp.float32), ((0, Vp - V), (0, Hp - H)))
    w_cls_t = jnp.transpose(w_cls_p)                          # (Hp, Vp)
    w_cls_tiles = jnp.transpose(
        w_cls_t.reshape(Hp, n_tiles, tile_v), (1, 0, 2)).astype(weight_dtype)
    b_cls_p = jnp.pad(b_cls.astype(jnp.float32), ((0, Vp - V),),
                      constant_values=-1e30).reshape(n_tiles, 1, tile_v)

    return {
        "emb": emb_p, "w_x": w_x, "w_h": w_h, "b_lstm": b_fused,
        "w_cls": w_cls_tiles, "b_cls": b_cls_p,
        "dims": dict(L=L, H=H, Hp=Hp, V=V, Vp=Vp, TILE_V=tile_v,
                     n_tiles=n_tiles, w_dtype=weight_dtype),
    }


# ---------------------------------------------------------------------------
# Forward pass (matches Decoder.forward; enc_outputs is unused by the spec).
# ---------------------------------------------------------------------------
def decoder_forward(enc_outputs, x_tokens, state, prep):
    del enc_outputs
    d = prep["dims"]
    L, H, Hp = d["L"], d["H"], d["Hp"]
    V, Vp, TILE_V, n_tiles = d["V"], d["Vp"], d["TILE_V"], d["n_tiles"]
    w_dtype = d["w_dtype"]
    B = x_tokens.shape[0]
    Bp = _round_up(B, 8)

    h0, c0 = state                                            # (L, B, H)

    # Glue: embedding gather (x.unsqueeze(1) -> T == 1). Dropout == identity.
    x_emb = jnp.take(prep["emb"], x_tokens, axis=0)           # (B, Hp) f32
    x_emb = jnp.pad(x_emb, ((0, Bp - B), (0, 0)))
    h0_p = jnp.pad(h0.astype(jnp.float32), ((0, 0), (0, Bp - B), (0, Hp - H)))
    c0_p = jnp.pad(c0.astype(jnp.float32), ((0, 0), (0, Bp - B), (0, Hp - H)))

    kernel = functools.partial(_decoder_kernel, n_layers=L, hid_dim=Hp,
                               tile_v=TILE_V, w_dtype=w_dtype)

    out_shapes = (
        jax.ShapeDtypeStruct((Bp, Vp), jnp.float32),          # log_probs
        jax.ShapeDtypeStruct((L, Bp, Hp), jnp.float32),       # h_out
        jax.ShapeDtypeStruct((L, Bp, Hp), jnp.float32),       # c_out
    )

    log_probs_p, h_out_p, c_out_p = pl.pallas_call(
        kernel,
        out_shape=out_shapes,
        grid=(n_tiles,),
        in_specs=[
            pl.BlockSpec((Bp, Hp), lambda j: (0, 0)),                 # emb row
            pl.BlockSpec((L, Bp, Hp), lambda j: (0, 0, 0)),           # h0
            pl.BlockSpec((L, Bp, Hp), lambda j: (0, 0, 0)),           # c0
            pl.BlockSpec((L, Hp, 4 * Hp), lambda j: (0, 0, 0)),       # W_x
            pl.BlockSpec((L, Hp, 4 * Hp), lambda j: (0, 0, 0)),       # W_h
            pl.BlockSpec((L, 1, 4 * Hp), lambda j: (0, 0, 0)),        # bias
            pl.BlockSpec((1, Hp, TILE_V), lambda j: (j, 0, 0)),       # W_cls tile
            pl.BlockSpec((1, 1, TILE_V), lambda j: (j, 0, 0)),        # b_cls tile
        ],
        out_specs=(
            pl.BlockSpec((Bp, Vp), lambda j: (0, 0)),                 # log_probs (resident)
            pl.BlockSpec((L, Bp, Hp), lambda j: (0, 0, 0)),           # h_out
            pl.BlockSpec((L, Bp, Hp), lambda j: (0, 0, 0)),           # c_out
        ),
        scratch_shapes=[
            pltpu.VMEM((Bp, Hp), w_dtype),       # top-layer h (classifier input)
            pltpu.VMEM((Bp, 1), jnp.float32),    # running max m
            pltpu.VMEM((Bp, 1), jnp.float32),    # running sum l
        ],
        # Recurrent state updated in place (h0 -> h_out, c0 -> c_out).
        input_output_aliases={1: 1, 2: 2},
        compiler_params=pltpu.CompilerParams(
            dimension_semantics=("arbitrary",),
            vmem_limit_bytes=64 * 1024 * 1024),
    )(x_emb, h0_p, c0_p, prep["w_x"], prep["w_h"], prep["b_lstm"],
      prep["w_cls"], prep["b_cls"])

    log_probs = log_probs_p[:B, :V]
    h_out = h_out_p[:, :B, :H]
    c_out = c_out_p[:, :B, :H]
    return log_probs, (h_out, c_out)


# ---------------------------------------------------------------------------
# Pure-JAX reference (PyTorch semantics, f32 throughout) and demo params.
# ---------------------------------------------------------------------------
def decoder_reference(x_tokens, state, params):
    L, _, H = params["w_ih"].shape
    h0, c0 = state
    x = jnp.take(params["embedding"], x_tokens, axis=0)
    hs, cs = [], []
    for l in range(L):
        gates = (x @ params["w_ih"][l].T + h0[l] @ params["w_hh"][l].T
                 + params["b_ih"][l] + params["b_hh"][l])
        i = jax.nn.sigmoid(gates[:, 0 * H:1 * H])
        f = jax.nn.sigmoid(gates[:, 1 * H:2 * H])
        g = jnp.tanh(gates[:, 2 * H:3 * H])
        o = jax.nn.sigmoid(gates[:, 3 * H:4 * H])
        c = f * c0[l] + i * g
        h = o * jnp.tanh(c)
        hs.append(h)
        cs.append(c)
        x = h
    logits = x @ params["w_cls"].T + params["b_cls"]
    return jax.nn.log_softmax(logits, axis=-1), (jnp.stack(hs), jnp.stack(cs))


def make_params(key, vocab_size, hid_dim, n_layers):
    ks = jax.random.split(key, 8)
    V, H, L = vocab_size, hid_dim, n_layers
    scale = 0.1
    return {
        "embedding": scale * jax.random.normal(ks[0], (V, H), jnp.float32),
        "w_ih": scale * jax.random.normal(ks[1], (L, 4 * H, H), jnp.float32),
        "w_hh": scale * jax.random.normal(ks[2], (L, 4 * H, H), jnp.float32),
        "b_ih": scale * jax.random.normal(ks[3], (L, 4 * H), jnp.float32),
        "b_hh": scale * jax.random.normal(ks[4], (L, 4 * H), jnp.float32),
        "w_cls": scale * jax.random.normal(ks[5], (V, H), jnp.float32),
        "b_cls": scale * jax.random.normal(ks[6], (V,), jnp.float32),
    }


if __name__ == "__main__":
    key = jax.random.PRNGKey(0)
    B, V, H, L, S = 2, 16, 32, 4, 8   # batch, vocab, hidden, layers, enc seq len

    k_par, k_tok, k_h, k_c, k_enc = jax.random.split(key, 5)
    params = make_params(k_par, V, H, L)

    x_tokens = jax.random.randint(k_tok, (B,), 0, V, dtype=jnp.int32)
    h0 = 0.1 * jax.random.normal(k_h, (L, B, H), jnp.float32)
    c0 = 0.1 * jax.random.normal(k_c, (L, B, H), jnp.float32)
    enc_outputs = jax.random.normal(k_enc, (B, S, H), jnp.float32)  # unused

    prep = prepare_decoder_params(params)   # one-time layout plumbing

    @jax.jit
    def fwd(tok, h, c):
        return decoder_forward(enc_outputs, tok, (h, c), prep)

    log_probs, (h_out, c_out) = fwd(x_tokens, h0, c0)
    jax.block_until_ready((log_probs, h_out, c_out))

    assert log_probs.shape == (B, V)
    assert h_out.shape == (L, B, H) and c_out.shape == (L, B, H)
    # log-softmax rows must sum to 1 in prob space
    assert jnp.allclose(jnp.sum(jnp.exp(log_probs), axis=-1), 1.0, atol=1e-5)

    # compare against the pure-JAX f32 reference (bf16 weights => loose tol)
    ref_lp, (ref_h, ref_c) = decoder_reference(x_tokens, (h0, c0), params)
    assert jnp.allclose(log_probs, ref_lp, atol=2e-2), "log_probs mismatch"
    assert jnp.allclose(h_out, ref_h, atol=2e-2), "h_out mismatch"
    assert jnp.allclose(c_out, ref_c, atol=2e-2), "c_out mismatch"

    print("KERNEL_OK")
</pallas_src>

<mosaic_0001>
module attributes {stable_mosaic.version = 11 : i64} {
  func.func @_decoder_kernel(%arg0: i32, %arg1: memref<8x128xf32, #tpu.memory_space<vmem>>, %arg2: memref<4x8x128xf32, #tpu.memory_space<vmem>>, %arg3: memref<4x8x128xf32, #tpu.memory_space<vmem>>, %arg4: memref<4x128x512xbf16, #tpu.memory_space<vmem>>, %arg5: memref<4x128x512xbf16, #tpu.memory_space<vmem>>, %arg6: memref<4x1x512xf32, #tpu.memory_space<vmem>>, %arg7: memref<1x128x128xbf16, #tpu.memory_space<vmem>>, %arg8: memref<1x1x128xf32, #tpu.memory_space<vmem>>, %arg9: memref<8x128xf32, #tpu.memory_space<vmem>>, %arg10: memref<4x8x128xf32, #tpu.memory_space<vmem>>, %arg11: memref<4x8x128xf32, #tpu.memory_space<vmem>>, %arg12: memref<8x128xbf16, #tpu.memory_space<vmem>>, %arg13: memref<8x1xf32, #tpu.memory_space<vmem>>, %arg14: memref<8x1xf32, #tpu.memory_space<vmem>>) attributes {dimension_semantics = [#tpu.dimension_semantics<arbitrary>], iteration_bounds = array<i64: 1>, scalar_prefetch = 0 : i64, scratch_operands = 3 : i64, tpu.core_type = #tpu.core_type<tc>, window_params = [{pipeline_mode = #tpu.pipeline_mode<synchronous>, transform_indices = @transform_0, window_bounds = array<i64: 8, 128>}, {pipeline_mode = #tpu.pipeline_mode<synchronous>, transform_indices = @transform_1, window_bounds = array<i64: 4, 8, 128>}, {pipeline_mode = #tpu.pipeline_mode<synchronous>, transform_indices = @transform_2, window_bounds = array<i64: 4, 8, 128>}, {pipeline_mode = #tpu.pipeline_mode<synchronous>, transform_indices = @transform_3, window_bounds = array<i64: 4, 128, 512>}, {pipeline_mode = #tpu.pipeline_mode<synchronous>, transform_indices = @transform_4, window_bounds = array<i64: 4, 128, 512>}, {pipeline_mode = #tpu.pipeline_mode<synchronous>, transform_indices = @transform_5, window_bounds = array<i64: 4, 1, 512>}, {transform_indices = @transform_6, window_bounds = array<i64: 1, 128, 128>}, {transform_indices = @transform_7, window_bounds = array<i64: 1, 1, 128>}, {pipeline_mode = #tpu.pipeline_mode<synchronous>, transform_indices = @transform_8, window_bounds = array<i64: 8, 128>}, {pipeline_mode = #tpu.pipeline_mode<synchronous>, transform_indices = @transform_9, window_bounds = array<i64: 4, 8, 128>}, {pipeline_mode = #tpu.pipeline_mode<synchronous>, transform_indices = @transform_10, window_bounds = array<i64: 4, 8, 128>}]} {
    %c0_i32 = arith.constant 0 : i32
    %0 = arith.cmpi eq, %arg0, %c0_i32 : i32
    %1 = arith.extui %0 : i1 to i32
    %c0_i32_0 = arith.constant 0 : i32
    %2 = arith.cmpi ne, %1, %c0_i32_0 : i32
    scf.if %2 {
      %c0_21 = arith.constant 0 : index
      %c0_22 = arith.constant 0 : index
      %34 = vector.load %arg1[%c0_21, %c0_22] : memref<8x128xf32, #tpu.memory_space<vmem>>, vector<8x128xf32>
      %35 = arith.truncf %34 : vector<8x128xf32> to vector<8x128xbf16>
      %c0_23 = arith.constant 0 : index
      %c0_24 = arith.constant 0 : index
      %c0_25 = arith.constant 0 : index
      %36 = vector.load %arg2[%c0_23, %c0_24, %c0_25] : memref<4x8x128xf32, #tpu.memory_space<vmem>>, vector<1x8x128xf32>
      %37 = vector.shape_cast %36 : vector<1x8x128xf32> to vector<8x128xf32>
      %c0_26 = arith.constant 0 : index
      %c0_27 = arith.constant 0 : index
      %c0_28 = arith.constant 0 : index
      %38 = vector.load %arg3[%c0_26, %c0_27, %c0_28] : memref<4x8x128xf32, #tpu.memory_space<vmem>>, vector<1x8x128xf32>
      %39 = vector.shape_cast %38 : vector<1x8x128xf32> to vector<8x128xf32>
      %c0_29 = arith.constant 0 : index
      %c0_30 = arith.constant 0 : index
      %c0_31 = arith.constant 0 : index
      %40 = vector.load %arg4[%c0_29, %c0_30, %c0_31] : memref<4x128x512xbf16, #tpu.memory_space<vmem>>, vector<1x128x512xbf16>
      %41 = vector.shape_cast %40 : vector<1x128x512xbf16> to vector<128x512xbf16>
      %cst_32 = arith.constant dense<0.000000e+00> : vector<8x512xf32>
      %42 = tpu.matmul %35, %41, %cst_32 {dimension_numbers = #tpu.dot_dimension_numbers<[1], [0], [0], [1], [0, 0, 1, 1], [], []>} : vector<8x128xbf16>, vector<128x512xbf16>, vector<8x512xf32> -> vector<8x512xf32>
      %43 = arith.truncf %37 : vector<8x128xf32> to vector<8x128xbf16>
      %c0_33 = arith.constant 0 : index
      %c0_34 = arith.constant 0 : index
      %c0_35 = arith.constant 0 : index
      %44 = vector.load %arg5[%c0_33, %c0_34, %c0_35] : memref<4x128x512xbf16, #tpu.memory_space<vmem>>, vector<1x128x512xbf16>
      %45 = vector.shape_cast %44 : vector<1x128x512xbf16> to vector<128x512xbf16>
      %cst_36 = arith.constant dense<0.000000e+00> : vector<8x512xf32>
      %46 = tpu.matmul %43, %45, %cst_36 {dimension_numbers = #tpu.dot_dimension_numbers<[1], [0], [0], [1], [0, 0, 1, 1], [], []>} : vector<8x128xbf16>, vector<128x512xbf16>, vector<8x512xf32> -> vector<8x512xf32>
      %47 = arith.addf %42, %46 : vector<8x512xf32>
      %c0_37 = arith.constant 0 : index
      %c0_38 = arith.constant 0 : index
      %c0_39 = arith.constant 0 : index
      %48 = vector.load %arg6[%c0_37, %c0_38, %c0_39] : memref<4x1x512xf32, #tpu.memory_space<vmem>>, vector<1x1x512xf32>
      %49 = vector.shape_cast %48 : vector<1x1x512xf32> to vector<1x512xf32>
      %50 = vector.broadcast %49 : vector<1x512xf32> to vector<8x512xf32>
      %51 = arith.addf %47, %50 : vector<8x512xf32>
      %52 = vector.extract_strided_slice %51 {offsets = [0, 0], sizes = [8, 128], strides = [1, 1]} : vector<8x512xf32> to vector<8x128xf32>
      %53 = arith.negf %52 : vector<8x128xf32>
      %54 = math.exp %53 : vector<8x128xf32>
      %cst_40 = arith.constant 1.000000e+00 : f32
      %55 = vector.broadcast %cst_40 : f32 to vector<8x128xf32>
      %56 = arith.addf %55, %54 : vector<8x128xf32>
      %57 = arith.divf %55, %56 : vector<8x128xf32>
      %58 = vector.extract_strided_slice %51 {offsets = [0, 128], sizes = [8, 128], strides = [1, 1]} : vector<8x512xf32> to vector<8x128xf32>
      %59 = arith.negf %58 : vector<8x128xf32>
      %60 = math.exp %59 : vector<8x128xf32>
      %cst_41 = arith.constant 1.000000e+00 : f32
      %61 = vector.broadcast %cst_41 : f32 to vector<8x128xf32>
      %62 = arith.addf %61, %60 : vector<8x128xf32>
      %63 = arith.divf %61, %62 : vector<8x128xf32>
      %64 = vector.extract_strided_slice %51 {offsets = [0, 256], sizes = [8, 128], strides = [1, 1]} : vector<8x512xf32> to vector<8x128xf32>
      %65 = math.tanh %64 : vector<8x128xf32>
      %66 = vector.extract_strided_slice %51 {offsets = [0, 384], sizes = [8, 128], strides = [1, 1]} : vector<8x512xf32> to vector<8x128xf32>
      %67 = arith.negf %66 : vector<8x128xf32>
      %68 = math.exp %67 : vector<8x128xf32>
      %cst_42 = arith.constant 1.000000e+00 : f32
      %69 = vector.broadcast %cst_42 : f32 to vector<8x128xf32>
      %70 = arith.addf %69, %68 : vector<8x128xf32>
      %71 = arith.divf %69, %70 : vector<8x128xf32>
      %72 = arith.mulf %63, %39 : vector<8x128xf32>
      %73 = arith.mulf %57, %65 : vector<8x128xf32>
      %74 = arith.addf %72, %73 : vector<8x128xf32>
      %75 = math.tanh %74 : vector<8x128xf32>
      %76 = arith.mulf %71, %75 : vector<8x128xf32>
      %c0_43 = arith.constant 0 : index
      %c0_44 = arith.constant 0 : index
      %c0_45 = arith.constant 0 : index
      %77 = vector.load %arg10[%c0_43, %c0_44, %c0_45] : memref<4x8x128xf32, #tpu.memory_space<vmem>>, vector<1x8x128xf32>
      %78 = vector.shape_cast %77 : vector<1x8x128xf32> to vector<8x128xf32>
      %79 = vector.shape_cast %76 : vector<8x128xf32> to vector<1x8x128xf32>
      tpu.vector_store %arg10[%c0_43, %c0_44, %c0_45], %79 {strides = array<i32>} : memref<4x8x128xf32, #tpu.memory_space<vmem>>, vector<1x8x128xf32>,
      %c0_46 = arith.constant 0 : index
      %c0_47 = arith.constant 0 : index
      %c0_48 = arith.constant 0 : index
      %80 = vector.load %arg11[%c0_46, %c0_47, %c0_48] : memref<4x8x128xf32, #tpu.memory_space<vmem>>, vector<1x8x128xf32>
      %81 = vector.shape_cast %80 : vector<1x8x128xf32> to vector<8x128xf32>
      %82 = vector.shape_cast %74 : vector<8x128xf32> to vector<1x8x128xf32>
      tpu.vector_store %arg11[%c0_46, %c0_47, %c0_48], %82 {strides = array<i32>} : memref<4x8x128xf32, #tpu.memory_space<vmem>>, vector<1x8x128xf32>,
      %83 = arith.truncf %76 : vector<8x128xf32> to vector<8x128xbf16>
      %c1 = arith.constant 1 : index
      %c0_49 = arith.constant 0 : index
      %c0_50 = arith.constant 0 : index
      %84 = vector.load %arg2[%c1, %c0_49, %c0_50] : memref<4x8x128xf32, #tpu.memory_space<vmem>>, vector<1x8x128xf32>
      %85 = vector.shape_cast %84 : vector<1x8x128xf32> to vector<8x128xf32>
      %c1_51 = arith.constant 1 : index
      %c0_52 = arith.constant 0 : index
      %c0_53 = arith.constant 0 : index
      %86 = vector.load %arg3[%c1_51, %c0_52, %c0_53] : memref<4x8x128xf32, #tpu.memory_space<vmem>>, vector<1x8x128xf32>
      %87 = vector.shape_cast %86 : vector<1x8x128xf32> to vector<8x128xf32>
      %c1_54 = arith.constant 1 : index
      %c0_55 = arith.constant 0 : index
      %c0_56 = arith.constant 0 : index
      %88 = vector.load %arg4[%c1_54, %c0_55, %c0_56] : memref<4x128x512xbf16, #tpu.memory_space<vmem>>, vector<1x128x512xbf16>
      %89 = vector.shape_cast %88 : vector<1x128x512xbf16> to vector<128x512xbf16>
      %cst_57 = arith.constant dense<0.000000e+00> : vector<8x512xf32>
      %90 = tpu.matmul %83, %89, %cst_57 {dimension_numbers = #tpu.dot_dimension_numbers<[1], [0], [0], [1], [0, 0, 1, 1], [], []>} : vector<8x128xbf16>, vector<128x512xbf16>, vector<8x512xf32> -> vector<8x512xf32>
      %91 = arith.truncf %85 : vector<8x128xf32> to vector<8x128xbf16>
      %c1_58 = arith.constant 1 : index
      %c0_59 = arith.constant 0 : index
      %c0_60 = arith.constant 0 : index
      %92 = vector.load %arg5[%c1_58, %c0_59, %c0_60] : memref<4x128x512xbf16, #tpu.memory_space<vmem>>, vector<1x128x512xbf16>
      %93 = vector.shape_cast %92 : vector<1x128x512xbf16> to vector<128x512xbf16>
      %cst_61 = arith.constant dense<0.000000e+00> : vector<8x512xf32>
      %94 = tpu.matmul %91, %93, %cst_61 {dimension_numbers = #tpu.dot_dimension_numbers<[1], [0], [0], [1], [0, 0, 1, 1], [], []>} : vector<8x128xbf16>, vector<128x512xbf16>, vector<8x512xf32> -> vector<8x512xf32>
      %95 = arith.addf %90, %94 : vector<8x512xf32>
      %c1_62 = arith.constant 1 : index
      %c0_63 = arith.constant 0 : index
      %c0_64 = arith.constant 0 : index
      %96 = vector.load %arg6[%c1_62, %c0_63, %c0_64] : memref<4x1x512xf32, #tpu.memory_space<vmem>>, vector<1x1x512xf32>
      %97 = vector.shape_cast %96 : vector<1x1x512xf32> to vector<1x512xf32>
      %98 = vector.broadcast %97 : vector<1x512xf32> to vector<8x512xf32>
      %99 = arith.addf %95, %98 : vector<8x512xf32>
      %100 = vector.extract_strided_slice %99 {offsets = [0, 0], sizes = [8, 128], strides = [1, 1]} : vector<8x512xf32> to vector<8x128xf32>
      %101 = arith.negf %100 : vector<8x128xf32>
      %102 = math.exp %101 : vector<8x128xf32>
      %cst_65 = arith.constant 1.000000e+00 : f32
      %103 = vector.broadcast %cst_65 : f32 to vector<8x128xf32>
      %104 = arith.addf %103, %102 : vector<8x128xf32>
      %105 = arith.divf %103, %104 : vector<8x128xf32>
      %106 = vector.extract_strided_slice %99 {offsets = [0, 128], sizes = [8, 128], strides = [1, 1]} : vector<8x512xf32> to vector<8x128xf32>
      %107 = arith.negf %106 : vector<8x128xf32>
      %108 = math.exp %107 : vector<8x128xf32>
      %cst_66 = arith.constant 1.000000e+00 : f32
      %109 = vector.broadcast %cst_66 : f32 to vector<8x128xf32>
      %110 = arith.addf %109, %108 : vector<8x128xf32>
      %111 = arith.divf %109, %110 : vector<8x128xf32>
      %112 = vector.extract_strided_slice %99 {offsets = [0, 256], sizes = [8, 128], strides = [1, 1]} : vector<8x512xf32> to vector<8x128xf32>
      %113 = math.tanh %112 : vector<8x128xf32>
      %114 = vector.extract_strided_slice %99 {offsets = [0, 384], sizes = [8, 128], strides = [1, 1]} : vector<8x512xf32> to vector<8x128xf32>
      %115 = arith.negf %114 : vector<8x128xf32>
      %116 = math.exp %115 : vector<8x128xf32>
      %cst_67 = arith.constant 1.000000e+00 : f32
      %117 = vector.broadcast %cst_67 : f32 to vector<8x128xf32>
      %118 = arith.addf %117, %116 : vector<8x128xf32>
      %119 = arith.divf %117, %118 : vector<8x128xf32>
      %120 = arith.mulf %111, %87 : vector<8x128xf32>
      %121 = arith.mulf %105, %113 : vector<8x128xf32>
      %122 = arith.addf %120, %121 : vector<8x128xf32>
      %123 = math.tanh %122 : vector<8x128xf32>
      %124 = arith.mulf %119, %123 : vector<8x128xf32>
      %c1_68 = arith.constant 1 : index
      %c0_69 = arith.constant 0 : index
      %c0_70 = arith.constant 0 : index
      %125 = vector.load %arg10[%c1_68, %c0_69, %c0_70] : memref<4x8x128xf32, #tpu.memory_space<vmem>>, vector<1x8x128xf32>
      %126 = vector.shape_cast %125 : vector<1x8x128xf32> to vector<8x128xf32>
      %127 = vector.shape_cast %124 : vector<8x128xf32> to vector<1x8x128xf32>
      tpu.vector_store %arg10[%c1_68, %c0_69, %c0_70], %127 {strides = array<i32>} : memref<4x8x128xf32, #tpu.memory_space<vmem>>, vector<1x8x128xf32>,
      %c1_71 = arith.constant 1 : index
      %c0_72 = arith.constant 0 : index
      %c0_73 = arith.constant 0 : index
      %128 = vector.load %arg11[%c1_71, %c0_72, %c0_73] : memref<4x8x128xf32, #tpu.memory_space<vmem>>, vector<1x8x128xf32>
      %129 = vector.shape_cast %128 : vector<1x8x128xf32> to vector<8x128xf32>
      %130 = vector.shape_cast %122 : vector<8x128xf32> to vector<1x8x128xf32>
      tpu.vector_store %arg11[%c1_71, %c0_72, %c0_73], %130 {strides = array<i32>} : memref<4x8x128xf32, #tpu.memory_space<vmem>>, vector<1x8x128xf32>,
      %131 = arith.truncf %124 : vector<8x128xf32> to vector<8x128xbf16>
      %c2 = arith.constant 2 : index
      %c0_74 = arith.constant 0 : index
      %c0_75 = arith.constant 0 : index
      %132 = vector.load %arg2[%c2, %c0_74, %c0_75] : memref<4x8x128xf32, #tpu.memory_space<vmem>>, vector<1x8x128xf32>
      %133 = vector.shape_cast %132 : vector<1x8x128xf32> to vector<8x128xf32>
      %c2_76 = arith.constant 2 : index
      %c0_77 = arith.constant 0 : index
      %c0_78 = arith.constant 0 : index
      %134 = vector.load %arg3[%c2_76, %c0_77, %c0_78] : memref<4x8x128xf32, #tpu.memory_space<vmem>>, vector<1x8x128xf32>
      %135 = vector.shape_cast %134 : vector<1x8x128xf32> to vector<8x128xf32>
      %c2_79 = arith.constant 2 : index
      %c0_80 = arith.constant 0 : index
      %c0_81 = arith.constant 0 : index
      %136 = vector.load %arg4[%c2_79, %c0_80, %c0_81] : memref<4x128x512xbf16, #tpu.memory_space<vmem>>, vector<1x128x512xbf16>
      %137 = vector.shape_cast %136 : vector<1x128x512xbf16> to vector<128x512xbf16>
      %cst_82 = arith.constant dense<0.000000e+00> : vector<8x512xf32>
      %138 = tpu.matmul %131, %137, %cst_82 {dimension_numbers = #tpu.dot_dimension_numbers<[1], [0], [0], [1], [0, 0, 1, 1], [], []>} : vector<8x128xbf16>, vector<128x512xbf16>, vector<8x512xf32> -> vector<8x512xf32>
      %139 = arith.truncf %133 : vector<8x128xf32> to vector<8x128xbf16>
      %c2_83 = arith.constant 2 : index
      %c0_84 = arith.constant 0 : index
      %c0_85 = arith.constant 0 : index
      %140 = vector.load %arg5[%c2_83, %c0_84, %c0_85] : memref<4x128x512xbf16, #tpu.memory_space<vmem>>, vector<1x128x512xbf16>
      %141 = vector.shape_cast %140 : vector<1x128x512xbf16> to vector<128x512xbf16>
      %cst_86 = arith.constant dense<0.000000e+00> : vector<8x512xf32>
      %142 = tpu.matmul %139, %141, %cst_86 {dimension_numbers = #tpu.dot_dimension_numbers<[1], [0], [0], [1], [0, 0, 1, 1], [], []>} : vector<8x128xbf16>, vector<128x512xbf16>, vector<8x512xf32> -> vector<8x512xf32>
      %143 = arith.addf %138, %142 : vector<8x512xf32>
      %c2_87 = arith.constant 2 : index
      %c0_88 = arith.constant 0 : index
      %c0_89 = arith.constant 0 : index
      %144 = vector.load %arg6[%c2_87, %c0_88, %c0_89] : memref<4x1x512xf32, #tpu.memory_space<vmem>>, vector<1x1x512xf32>
      %145 = vector.shape_cast %144 : vector<1x1x512xf32> to vector<1x512xf32>
      %146 = vector.broadcast %145 : vector<1x512xf32> to vector<8x512xf32>
      %147 = arith.addf %143, %146 : vector<8x512xf32>
      %148 = vector.extract_strided_slice %147 {offsets = [0, 0], sizes = [8, 128], strides = [1, 1]} : vector<8x512xf32> to vector<8x128xf32>
      %149 = arith.negf %148 : vector<8x128xf32>
      %150 = math.exp %149 : vector<8x128xf32>
      %cst_90 = arith.constant 1.000000e+00 : f32
      %151 = vector.broadcast %cst_90 : f32 to vector<8x128xf32>
      %152 = arith.addf %151, %150 : vector<8x128xf32>
      %153 = arith.divf %151, %152 : vector<8x128xf32>
      %154 = vector.extract_strided_slice %147 {offsets = [0, 128], sizes = [8, 128], strides = [1, 1]} : vector<8x512xf32> to vector<8x128xf32>
      %155 = arith.negf %154 : vector<8x128xf32>
      %156 = math.exp %155 : vector<8x128xf32>
      %cst_91 = arith.constant 1.000000e+00 : f32
      %157 = vector.broadcast %cst_91 : f32 to vector<8x128xf32>
      %158 = arith.addf %157, %156 : vector<8x128xf32>
      %159 = arith.divf %157, %158 : vector<8x128xf32>
      %160 = vector.extract_strided_slice %147 {offsets = [0, 256], sizes = [8, 128], strides = [1, 1]} : vector<8x512xf32> to vector<8x128xf32>
      %161 = math.tanh %160 : vector<8x128xf32>
      %162 = vector.extract_strided_slice %147 {offsets = [0, 384], sizes = [8, 128], strides = [1, 1]} : vector<8x512xf32> to vector<8x128xf32>
      %163 = arith.negf %162 : vector<8x128xf32>
      %164 = math.exp %163 : vector<8x128xf32>
      %cst_92 = arith.constant 1.000000e+00 : f32
      %165 = vector.broadcast %cst_92 : f32 to vector<8x128xf32>
      %166 = arith.addf %165, %164 : vector<8x128xf32>
      %167 = arith.divf %165, %166 : vector<8x128xf32>
      %168 = arith.mulf %159, %135 : vector<8x128xf32>
      %169 = arith.mulf %153, %161 : vector<8x128xf32>
      %170 = arith.addf %168, %169 : vector<8x128xf32>
      %171 = math.tanh %170 : vector<8x128xf32>
      %172 = arith.mulf %167, %171 : vector<8x128xf32>
      %c2_93 = arith.constant 2 : index
      %c0_94 = arith.constant 0 : index
      %c0_95 = arith.constant 0 : index
      %173 = vector.load %arg10[%c2_93, %c0_94, %c0_95] : memref<4x8x128xf32, #tpu.memory_space<vmem>>, vector<1x8x128xf32>
      %174 = vector.shape_cast %173 : vector<1x8x128xf32> to vector<8x128xf32>
      %175 = vector.shape_cast %172 : vector<8x128xf32> to vector<1x8x128xf32>
      tpu.vector_store %arg10[%c2_93, %c0_94, %c0_95], %175 {strides = array<i32>} : memref<4x8x128xf32, #tpu.memory_space<vmem>>, vector<1x8x128xf32>,
      %c2_96 = arith.constant 2 : index
      %c0_97 = arith.constant 0 : index
      %c0_98 = arith.constant 0 : index
      %176 = vector.load %arg11[%c2_96, %c0_97, %c0_98] : memref<4x8x128xf32, #tpu.memory_space<vmem>>, vector<1x8x128xf32>
      %177 = vector.shape_cast %176 : vector<1x8x128xf32> to vector<8x128xf32>
      %178 = vector.shape_cast %170 : vector<8x128xf32> to vector<1x8x128xf32>
      tpu.vector_store %arg11[%c2_96, %c0_97, %c0_98], %178 {strides = array<i32>} : memref<4x8x128xf32, #tpu.memory_space<vmem>>, vector<1x8x128xf32>,
      %179 = arith.truncf %172 : vector<8x128xf32> to vector<8x128xbf16>
      %c3 = arith.constant 3 : index
      %c0_99 = arith.constant 0 : index
      %c0_100 = arith.constant 0 : index
      %180 = vector.load %arg2[%c3, %c0_99, %c0_100] : memref<4x8x128xf32, #tpu.memory_space<vmem>>, vector<1x8x128xf32>
      %181 = vector.shape_cast %180 : vector<1x8x128xf32> to vector<8x128xf32>
      %c3_101 = arith.constant 3 : index
      %c0_102 = arith.constant 0 : index
      %c0_103 = arith.constant 0 : index
      %182 = vector.load %arg3[%c3_101, %c0_102, %c0_103] : memref<4x8x128xf32, #tpu.memory_space<vmem>>, vector<1x8x128xf32>
      %183 = vector.shape_cast %182 : vector<1x8x128xf32> to vector<8x128xf32>
      %c3_104 = arith.constant 3 : index
      %c0_105 = arith.constant 0 : index
      %c0_106 = arith.constant 0 : index
      %184 = vector.load %arg4[%c3_104, %c0_105, %c0_106] : memref<4x128x512xbf16, #tpu.memory_space<vmem>>, vector<1x128x512xbf16>
      %185 = vector.shape_cast %184 : vector<1x128x512xbf16> to vector<128x512xbf16>
      %cst_107 = arith.constant dense<0.000000e+00> : vector<8x512xf32>
      %186 = tpu.matmul %179, %185, %cst_107 {dimension_numbers = #tpu.dot_dimension_numbers<[1], [0], [0], [1], [0, 0, 1, 1], [], []>} : vector<8x128xbf16>, vector<128x512xbf16>, vector<8x512xf32> -> vector<8x512xf32>
      %187 = arith.truncf %181 : vector<8x128xf32> to vector<8x128xbf16>
      %c3_108 = arith.constant 3 : index
      %c0_109 = arith.constant 0 : index
      %c0_110 = arith.constant 0 : index
      %188 = vector.load %arg5[%c3_108, %c0_109, %c0_110] : memref<4x128x512xbf16, #tpu.memory_space<vmem>>, vector<1x128x512xbf16>
      %189 = vector.shape_cast %188 : vector<1x128x512xbf16> to vector<128x512xbf16>
      %cst_111 = arith.constant dense<0.000000e+00> : vector<8x512xf32>
      %190 = tpu.matmul %187, %189, %cst_111 {dimension_numbers = #tpu.dot_dimension_numbers<[1], [0], [0], [1], [0, 0, 1, 1], [], []>} : vector<8x128xbf16>, vector<128x512xbf16>, vector<8x512xf32> -> vector<8x512xf32>
      %191 = arith.addf %186, %190 : vector<8x512xf32>
      %c3_112 = arith.constant 3 : index
      %c0_113 = arith.constant 0 : index
      %c0_114 = arith.constant 0 : index
      %192 = vector.load %arg6[%c3_112, %c0_113, %c0_114] : memref<4x1x512xf32, #tpu.memory_space<vmem>>, vector<1x1x512xf32>
      %193 = vector.shape_cast %192 : vector<1x1x512xf32> to vector<1x512xf32>
      %194 = vector.broadcast %193 : vector<1x512xf32> to vector<8x512xf32>
      %195 = arith.addf %191, %194 : vector<8x512xf32>
      %196 = vector.extract_strided_slice %195 {offsets = [0, 0], sizes = [8, 128], strides = [1, 1]} : vector<8x512xf32> to vector<8x128xf32>
      %197 = arith.negf %196 : vector<8x128xf32>
      %198 = math.exp %197 : vector<8x128xf32>
      %cst_115 = arith.constant 1.000000e+00 : f32
      %199 = vector.broadcast %cst_115 : f32 to vector<8x128xf32>
      %200 = arith.addf %199, %198 : vector<8x128xf32>
      %201 = arith.divf %199, %200 : vector<8x128xf32>
      %202 = vector.extract_strided_slice %195 {offsets = [0, 128], sizes = [8, 128], strides = [1, 1]} : vector<8x512xf32> to vector<8x128xf32>
      %203 = arith.negf %202 : vector<8x128xf32>
      %204 = math.exp %203 : vector<8x128xf32>
      %cst_116 = arith.constant 1.000000e+00 : f32
      %205 = vector.broadcast %cst_116 : f32 to vector<8x128xf32>
      %206 = arith.addf %205, %204 : vector<8x128xf32>
      %207 = arith.divf %205, %206 : vector<8x128xf32>
      %208 = vector.extract_strided_slice %195 {offsets = [0, 256], sizes = [8, 128], strides = [1, 1]} : vector<8x512xf32> to vector<8x128xf32>
      %209 = math.tanh %208 : vector<8x128xf32>
      %210 = vector.extract_strided_slice %195 {offsets = [0, 384], sizes = [8, 128], strides = [1, 1]} : vector<8x512xf32> to vector<8x128xf32>
      %211 = arith.negf %210 : vector<8x128xf32>
      %212 = math.exp %211 : vector<8x128xf32>
      %cst_117 = arith.constant 1.000000e+00 : f32
      %213 = vector.broadcast %cst_117 : f32 to vector<8x128xf32>
      %214 = arith.addf %213, %212 : vector<8x128xf32>
      %215 = arith.divf %213, %214 : vector<8x128xf32>
      %216 = arith.mulf %207, %183 : vector<8x128xf32>
      %217 = arith.mulf %201, %209 : vector<8x128xf32>
      %218 = arith.addf %216, %217 : vector<8x128xf32>
      %219 = math.tanh %218 : vector<8x128xf32>
      %220 = arith.mulf %215, %219 : vector<8x128xf32>
      %c3_118 = arith.constant 3 : index
      %c0_119 = arith.constant 0 : index
      %c0_120 = arith.constant 0 : index
      %221 = vector.load %arg10[%c3_118, %c0_119, %c0_120] : memref<4x8x128xf32, #tpu.memory_space<vmem>>, vector<1x8x128xf32>
      %222 = vector.shape_cast %221 : vector<1x8x128xf32> to vector<8x128xf32>
      %223 = vector.shape_cast %220 : vector<8x128xf32> to vector<1x8x128xf32>
      tpu.vector_store %arg10[%c3_118, %c0_119, %c0_120], %223 {strides = array<i32>} : memref<4x8x128xf32, #tpu.memory_space<vmem>>, vector<1x8x128xf32>,
      %c3_121 = arith.constant 3 : index
      %c0_122 = arith.constant 0 : index
      %c0_123 = arith.constant 0 : index
      %224 = vector.load %arg11[%c3_121, %c0_122, %c0_123] : memref<4x8x128xf32, #tpu.memory_space<vmem>>, vector<1x8x128xf32>
      %225 = vector.shape_cast %224 : vector<1x8x128xf32> to vector<8x128xf32>
      %226 = vector.shape_cast %218 : vector<8x128xf32> to vector<1x8x128xf32>
      tpu.vector_store %arg11[%c3_121, %c0_122, %c0_123], %226 {strides = array<i32>} : memref<4x8x128xf32, #tpu.memory_space<vmem>>, vector<1x8x128xf32>,
      %227 = arith.truncf %220 : vector<8x128xf32> to vector<8x128xbf16>
      %c0_124 = arith.constant 0 : index
      %c0_125 = arith.constant 0 : index
      %228 = vector.load %arg12[%c0_124, %c0_125] : memref<8x128xbf16, #tpu.memory_space<vmem>>, vector<8x128xbf16>
      tpu.vector_store %arg12[%c0_124, %c0_125], %227 {strides = array<i32>} : memref<8x128xbf16, #tpu.memory_space<vmem>>, vector<8x128xbf16>,
      %cst_126 = arith.constant 0xFF800000 : f32
      %229 = vector.broadcast %cst_126 : f32 to vector<8x1xf32>
      %c0_127 = arith.constant 0 : index
      %c0_128 = arith.constant 0 : index
      %230 = vector.load %arg13[%c0_127, %c0_128] : memref<8x1xf32, #tpu.memory_space<vmem>>, vector<8x1xf32>
      tpu.vector_store %arg13[%c0_127, %c0_128], %229 {strides = array<i32>} : memref<8x1xf32, #tpu.memory_space<vmem>>, vector<8x1xf32>,
      %cst_129 = arith.constant 0.000000e+00 : f32
      %231 = vector.broadcast %cst_129 : f32 to vector<8x1xf32>
      %c0_130 = arith.constant 0 : index
      %c0_131 = arith.constant 0 : index
      %232 = vector.load %arg14[%c0_130, %c0_131] : memref<8x1xf32, #tpu.memory_space<vmem>>, vector<8x1xf32>
      tpu.vector_store %arg14[%c0_130, %c0_131], %231 {strides = array<i32>} : memref<8x1xf32, #tpu.memory_space<vmem>>, vector<8x1xf32>,
    } else {
    }
    %c0 = arith.constant 0 : index
    %c0_1 = arith.constant 0 : index
    %3 = vector.load %arg12[%c0, %c0_1] : memref<8x128xbf16, #tpu.memory_space<vmem>>, vector<8x128xbf16>
    %c0_2 = arith.constant 0 : index
    %c0_3 = arith.constant 0 : index
    %c0_4 = arith.constant 0 : index
    %4 = vector.load %arg7[%c0_2, %c0_3, %c0_4] : memref<1x128x128xbf16, #tpu.memory_space<vmem>>, vector<1x128x128xbf16>
    %5 = vector.shape_cast %4 : vector<1x128x128xbf16> to vector<128x128xbf16>
    %cst = arith.constant dense<0.000000e+00> : vector<8x128xf32>
    %6 = tpu.matmul %3, %5, %cst {dimension_numbers = #tpu.dot_dimension_numbers<[1], [0], [0], [1], [0, 0, 1, 1], [], []>} : vector<8x128xbf16>, vector<128x128xbf16>, vector<8x128xf32> -> vector<8x128xf32>
    %c0_5 = arith.constant 0 : index
    %c0_6 = arith.constant 0 : index
    %c0_7 = arith.constant 0 : index
    %7 = vector.load %arg8[%c0_5, %c0_6, %c0_7] : memref<1x1x128xf32, #tpu.memory_space<vmem>>, vector<1x1x128xf32>
    %8 = vector.shape_cast %7 : vector<1x1x128xf32> to vector<1x128xf32>
    %9 = vector.broadcast %8 : vector<1x128xf32> to vector<8x128xf32>
    %10 = arith.addf %6, %9 : vector<8x128xf32>
    %c128_i32 = arith.constant 128 : i32
    %11 = arith.muli %arg0, %c128_i32 : i32
    %12 = tpu.assume_multiple %11, 128 : i32
    %c0_8 = arith.constant 0 : index
    %13 = arith.index_cast %12 : i32 to index
    %14 = vector.load %arg9[%c0_8, %13] : memref<8x128xf32, #tpu.memory_space<vmem>>, vector<8x128xf32>
    tpu.vector_store %arg9[%c0_8, %13], %10 {strides = array<i32>} : memref<8x128xf32, #tpu.memory_space<vmem>>, vector<8x128xf32>,
    %c0_9 = arith.constant 0 : index
    %c0_10 = arith.constant 0 : index
    %15 = vector.load %arg13[%c0_9, %c0_10] : memref<8x1xf32, #tpu.memory_space<vmem>>, vector<8x1xf32>
    %cst_11 = arith.constant dense<0xFF800000> : vector<8xf32>
    %16 = vector.multi_reduction <maximumf>, %10, %cst_11 [1] : vector<8x128xf32> to vector<8xf32>
    %17 = vector.shape_cast %16 : vector<8xf32> to vector<8x1xf32>
    %18 = arith.maximumf %15, %17 : vector<8x1xf32>
    %c0_12 = arith.constant 0 : index
    %c0_13 = arith.constant 0 : index
    %19 = vector.load %arg14[%c0_12, %c0_13] : memref<8x1xf32, #tpu.memory_space<vmem>>, vector<8x1xf32>
    %20 = arith.subf %15, %18 : vector<8x1xf32>
    %21 = math.exp %20 : vector<8x1xf32>
    %22 = arith.mulf %19, %21 : vector<8x1xf32>
    %23 = vector.broadcast %18 : vector<8x1xf32> to vector<8x128xf32>
    %24 = arith.subf %10, %23 : vector<8x128xf32>
    %25 = math.exp %24 : vector<8x128xf32>
    %cst_14 = arith.constant dense<0.000000e+00> : vector<8xf32>
    %26 = vector.multi_reduction <add>, %25, %cst_14 [1] : vector<8x128xf32> to vector<8xf32>
    %27 = vector.shape_cast %26 : vector<8xf32> to vector<8x1xf32>
    %28 = arith.addf %22, %27 : vector<8x1xf32>
    %c0_15 = arith.constant 0 : index
    %c0_16 = arith.constant 0 : index
    %29 = vector.load %arg14[%c0_15, %c0_16] : memref<8x1xf32, #tpu.memory_space<vmem>>, vector<8x1xf32>
    tpu.vector_store %arg14[%c0_15, %c0_16], %28 {strides = array<i32>} : memref<8x1xf32, #tpu.memory_space<vmem>>, vector<8x1xf32>,
    %c0_17 = arith.constant 0 : index
    %c0_18 = arith.constant 0 : index
    %30 = vector.load %arg13[%c0_17, %c0_18] : memref<8x1xf32, #tpu.memory_space<vmem>>, vector<8x1xf32>
    tpu.vector_store %arg13[%c0_17, %c0_18], %18 {strides = array<i32>} : memref<8x1xf32, #tpu.memory_space<vmem>>, vector<8x1xf32>,
    %c0_i32_19 = arith.constant 0 : i32
    %31 = arith.cmpi eq, %arg0, %c0_i32_19 : i32
    %32 = arith.extui %31 : i1 to i32
    %c0_i32_20 = arith.constant 0 : i32
    %33 = arith.cmpi ne, %32, %c0_i32_20 : i32
    scf.if %33 {
      %c0_21 = arith.constant 0 : index
      %c0_22 = arith.constant 0 : index
      %34 = vector.load %arg13[%c0_21, %c0_22] : memref<8x1xf32, #tpu.memory_space<vmem>>, vector<8x1xf32>
      %c0_23 = arith.constant 0 : index
      %c0_24 = arith.constant 0 : index
      %35 = vector.load %arg14[%c0_23, %c0_24] : memref<8x1xf32, #tpu.memory_space<vmem>>, vector<8x1xf32>
      %36 = math.log %35 : vector<8x1xf32>
      %37 = arith.addf %34, %36 : vector<8x1xf32>
      %c0_25 = arith.constant 0 : index
      %c0_26 = arith.constant 0 : index
      %38 = vector.load %arg9[%c0_25, %c0_26] : memref<8x128xf32, #tpu.memory_space<vmem>>, vector<8x128xf32>
      %39 = vector.broadcast %37 : vector<8x1xf32> to vector<8x128xf32>
      %40 = arith.subf %38, %39 : vector<8x128xf32>
      %c0_27 = arith.constant 0 : index
      %c0_28 = arith.constant 0 : index
      %41 = vector.load %arg9[%c0_27, %c0_28] : memref<8x128xf32, #tpu.memory_space<vmem>>, vector<8x128xf32>
      tpu.vector_store %arg9[%c0_27, %c0_28], %40 {strides = array<i32>} : memref<8x128xf32, #tpu.memory_space<vmem>>, vector<8x128xf32>,
    } else {
    }
    return
  }
  func.func @transform_0(%arg0: i32) -> (i32, i32) {
    %c0_i32 = arith.constant 0 : i32
    %c0_i32_0 = arith.constant 0 : i32
    %c0_i32_1 = arith.constant 0 : i32
    return %c0_i32, %c0_i32_0 : i32, i32
  }
  func.func @transform_1(%arg0: i32) -> (i32, i32, i32) {
    %c0_i32 = arith.constant 0 : i32
    %c0_i32_0 = arith.constant 0 : i32
    %c0_i32_1 = arith.constant 0 : i32
    %c0_i32_2 = arith.constant 0 : i32
    return %c0_i32, %c0_i32_0, %c0_i32_1 : i32, i32, i32
  }
  func.func @transform_2(%arg0: i32) -> (i32, i32, i32) {
    %c0_i32 = arith.constant 0 : i32
    %c0_i32_0 = arith.constant 0 : i32
    %c0_i32_1 = arith.constant 0 : i32
    %c0_i32_2 = arith.constant 0 : i32
    return %c0_i32, %c0_i32_0, %c0_i32_1 : i32, i32, i32
  }
  func.func @transform_3(%arg0: i32) -> (i32, i32, i32) {
    %c0_i32 = arith.constant 0 : i32
    %c0_i32_0 = arith.constant 0 : i32
    %c0_i32_1 = arith.constant 0 : i32
    %c0_i32_2 = arith.constant 0 : i32
    return %c0_i32, %c0_i32_0, %c0_i32_1 : i32, i32, i32
  }
  func.func @transform_4(%arg0: i32) -> (i32, i32, i32) {
    %c0_i32 = arith.constant 0 : i32
    %c0_i32_0 = arith.constant 0 : i32
    %c0_i32_1 = arith.constant 0 : i32
    %c0_i32_2 = arith.constant 0 : i32
    return %c0_i32, %c0_i32_0, %c0_i32_1 : i32, i32, i32
  }
  func.func @transform_5(%arg0: i32) -> (i32, i32, i32) {
    %c0_i32 = arith.constant 0 : i32
    %c0_i32_0 = arith.constant 0 : i32
    %c0_i32_1 = arith.constant 0 : i32
    %c0_i32_2 = arith.constant 0 : i32
    return %c0_i32, %c0_i32_0, %c0_i32_1 : i32, i32, i32
  }
  func.func @transform_6(%arg0: i32) -> (i32, i32, i32) {
    %c0_i32 = arith.constant 0 : i32
    %c0_i32_0 = arith.constant 0 : i32
    %c0_i32_1 = arith.constant 0 : i32
    return %arg0, %c0_i32, %c0_i32_0 : i32, i32, i32
  }
  func.func @transform_7(%arg0: i32) -> (i32, i32, i32) {
    %c0_i32 = arith.constant 0 : i32
    %c0_i32_0 = arith.constant 0 : i32
    %c0_i32_1 = arith.constant 0 : i32
    return %arg0, %c0_i32, %c0_i32_0 : i32, i32, i32
  }
  func.func @transform_8(%arg0: i32) -> (i32, i32) {
    %c0_i32 = arith.constant 0 : i32
    %c0_i32_0 = arith.constant 0 : i32
    %c0_i32_1 = arith.constant 0 : i32
    return %c0_i32, %c0_i32_0 : i32, i32
  }
  func.func @transform_9(%arg0: i32) -> (i32, i32, i32) {
    %c0_i32 = arith.constant 0 : i32
    %c0_i32_0 = arith.constant 0 : i32
    %c0_i32_1 = arith.constant 0 : i32
    %c0_i32_2 = arith.constant 0 : i32
    return %c0_i32, %c0_i32_0, %c0_i32_1 : i32, i32, i32
  }
  func.func @transform_10(%arg0: i32) -> (i32, i32, i32) {
    %c0_i32 = arith.constant 0 : i32
    %c0_i32_0 = arith.constant 0 : i32
    %c0_i32_1 = arith.constant 0 : i32
    %c0_i32_2 = arith.constant 0 : i32
    return %c0_i32, %c0_i32_0, %c0_i32_1 : i32, i32, i32
  }
}

</mosaic_0001>

<llo_original>
// kernel: fwd.1
$region0: #{fwd.1}
  #allocation0 [shape = 'u32[]', space=smem, size = 0x4, offset = 0x4, fixed_abs, tag = 'smem constant byte address 0x4 - core index']
  #allocation1 [shape = 'u32[144,128]{1,0:T(1,128)}', space=vmem, size = 0x12000, scoped, tag = 'internal scratch']
  #allocation2 [shape = 'bf16[8,128]{1,0:T(8,128)(2,1)}', space=vmem, size = 0x800, scoped, tag = 'scratch operand']
  #allocation3 [shape = 'f32[8,1]{1,0:T(8,128)}', space=vmem, size = 0x1000, scoped, tag = 'scratch operand']
  #allocation4 [shape = 'f32[8,1]{1,0:T(8,128)}', space=vmem, size = 0x1000, scoped, tag = 'scratch operand']
  %s0 = inlined_call_operand.hbm [shape: f32[8,128], index: 0, kind: input, shape index: {}]
  %s1 = inlined_call_operand.hbm [shape: f32[4,8,128], index: 1, kind: input, shape index: {}, may-alias: {1,9}]
  %s2 = inlined_call_operand.hbm [shape: f32[4,8,128], index: 2, kind: input, shape index: {}, may-alias: {2,10}]
  %s3 = inlined_call_operand.hbm [shape: bf16[4,128,512], index: 3, kind: input, shape index: {}]
  %s4 = inlined_call_operand.hbm [shape: bf16[4,128,512], index: 4, kind: input, shape index: {}]
  %s5 = inlined_call_operand.hbm [shape: f32[4,1,512], index: 5, kind: input, shape index: {}]
  %s6 = inlined_call_operand.hbm [shape: bf16[1,128,128], index: 6, kind: input, shape index: {}]
  %s7 = inlined_call_operand.hbm [shape: f32[1,1,128], index: 7, kind: input, shape index: {}]
  %s8 = inlined_call_operand.hbm [shape: f32[8,128], index: 8, kind: output, shape index: {0}]
  %s9 = inlined_call_operand.hbm [shape: f32[4,8,128], index: 9, kind: output, shape index: {1}, may-alias: {1,9}]
  %s10 = inlined_call_operand.hbm [shape: f32[4,8,128], index: 10, kind: output, shape index: {2}, may-alias: {2,10}]
  %11 = xla_tuple %s8, %s9, %s10
  %s12 = sld [smem:[#allocation0]]
  $region98: #{fwd.1} parent=0
    _
  %s14 = ssub.s32 1, %s12
  %s15 = scalar_select 0, %s14, %s12
  $region1: #{fwd.1} parent=0
    #allocation5 [shape = 'u8[4096]{0}', space=vmem, size = 0x1000, scoped, tag = 'input window, operand 0, single buffered']
    #allocation6 [shape = 's32[1]{0}', space=sflag, size = 0x4, scoped, tag = 'scoped memory for fwd.1']
    #allocation7 [shape = 's32[1]{0}', space=sflag, size = 0x4, scoped, tag = 'scoped memory for fwd.1']
    #allocation8 [shape = 'u8[16384]{0}', space=vmem, size = 0x4000, scoped, tag = 'input window, operand 1, single buffered']
    #allocation9 [shape = 's32[1]{0}', space=sflag, size = 0x4, scoped, tag = 'scoped memory for fwd.1']
    #allocation10 [shape = 'u8[16384]{0}', space=vmem, size = 0x4000, scoped, tag = 'input window, operand 2, single buffered']
    #allocation11 [shape = 'u8[524288]{0}', space=vmem, size = 0x80000, scoped, tag = 'input window, operand 3, single buffered']
    #allocation12 [shape = 's32[1]{0}', space=sflag, size = 0x4, scoped, tag = 'scoped memory for fwd.1']
    #allocation13 [shape = 'u8[524288]{0}', space=vmem, size = 0x80000, scoped, tag = 'input window, operand 4, single buffered']
    #allocation14 [shape = 'u8[8192]{0}', space=vmem, size = 0x2000, scoped, tag = 'input window, operand 5, single buffered']
    #allocation15 [shape = 's32[1]{0}', space=sflag, size = 0x4, scoped, tag = 'scoped memory for fwd.1']
    #allocation16 [shape = 'u8[32768]{0}', space=vmem, size = 0x8000, scoped, tag = 'input window, operand 6, single buffered']
    #allocation17 [shape = 'u8[512]{0}', space=vmem, size = 0x400, scoped, tag = 'input window, operand 7, single buffered']
    #allocation18 [shape = 's32[1]{0}', space=sflag, size = 0x4, scoped, tag = 'scoped memory for fwd.1']
    #allocation19 [shape = 'u8[4096]{0}', space=vmem, size = 0x1000, scoped, tag = 'output window, operand 0, single buffered']
    #allocation20 [shape = 'u8[16384]{0}', space=vmem, size = 0x4000, scoped, tag = 'output window, operand 1, single buffered']
    #allocation21 [shape = 's32[1]{0}', space=sflag, size = 0x4, scoped, tag = 'scoped memory for fwd.1']
    #allocation22 [shape = 'u8[16384]{0}', space=vmem, size = 0x4000, scoped, tag = 'output window, operand 2, single buffered']
    %16 = vsyncpa [#allocation6], 0
    %17 = vsyncpa [#allocation9], 0
    %18 = vsyncpa [#allocation12], 0
    %19 = vsyncpa [#allocation15], 0
    %20 = vsyncpa [#allocation18], 0
    %21 = vsyncpa [#allocation7], 0
    %22 = vsyncpa [#allocation21], 0
    // Predicated region
    $region2: #{fwd.1} parent=1 // pred_check
      _
    $region3: #{fwd.1} parent=1 // pred_check_branch
      %24 = sbr.rel (0) target = $region5
    $region4: #{fwd.1} parent=1 // pred_region
      %s26 = ssub.s32 128, 128
      %27 = vsyncadd [#allocation6], %s26
      %s29 = sshll.u32 [#allocation5], 4
      %s30 = int_to_ptr.vmem [resolvable:$true] %s29
      %32 = dma.hbm_to_vmem [thread:$0]  %s0, 128, %s30, [#allocation6]
    $region5: #{fwd.1} parent=1 // pred_fallthru
      _
    // Predicated region
    $region6: #{fwd.1} parent=1 // pred_check
      _
    $region7: #{fwd.1} parent=1 // pred_check_branch
      %34 = sbr.rel (0) target = $region9
    $region8: #{fwd.1} parent=1 // pred_region
      %s36 = ssub.s32 512, 512
      %37 = vsyncadd [#allocation9], %s36
      %s38 = sshll.u32 [#allocation8], 4
      %s39 = int_to_ptr.vmem [resolvable:$true] %s38
      %44 = dma.hbm_to_vmem [thread:$0]  %s1, 512, %s39, [#allocation9], 128, 128, 8
    $region9: #{fwd.1} parent=1 // pred_fallthru
      _
    // Predicated region
    $region10: #{fwd.1} parent=1 // pred_check
      _
    $region11: #{fwd.1} parent=1 // pred_check_branch
      %46 = sbr.rel (0) target = $region13
    $region12: #{fwd.1} parent=1 // pred_region
      %s48 = ssub.s32 512, 512
      %49 = vsyncadd [#allocation9], %s48
      %s50 = sshll.u32 [#allocation10], 4
      %s51 = int_to_ptr.vmem [resolvable:$true] %s50
      %56 = dma.hbm_to_vmem [thread:$0]  %s2, 512, %s51, [#allocation9], 128, 128, 8
    $region13: #{fwd.1} parent=1 // pred_fallthru
      _
    // Predicated region
    $region14: #{fwd.1} parent=1 // pred_check
      _
    $region15: #{fwd.1} parent=1 // pred_check_branch
      %58 = sbr.rel (0) target = $region17
    $region16: #{fwd.1} parent=1 // pred_region
      %s60 = ssub.s32 16384, 16384
      %61 = vsyncadd [#allocation12], %s60
      %s62 = sshll.u32 [#allocation11], 4
      %s63 = int_to_ptr.vmem [resolvable:$true] %s62
      %68 = dma.hbm_to_vmem [thread:$0]  %s3, 16384, %s63, [#allocation12], 256, 256, 16
    $region17: #{fwd.1} parent=1 // pred_fallthru
      _
    // Predicated region
    $region18: #{fwd.1} parent=1 // pred_check
      _
    $region19: #{fwd.1} parent=1 // pred_check_branch
      %70 = sbr.rel (0) target = $region21
    $region20: #{fwd.1} parent=1 // pred_region
      %s72 = ssub.s32 16384, 16384
      %73 = vsyncadd [#allocation12], %s72
      %s74 = sshll.u32 [#allocation13], 4
      %s75 = int_to_ptr.vmem [resolvable:$true] %s74
      %80 = dma.hbm_to_vmem [thread:$0]  %s4, 16384, %s75, [#allocation12], 256, 256, 16
    $region21: #{fwd.1} parent=1 // pred_fallthru
      _
    // Predicated region
    $region22: #{fwd.1} parent=1 // pred_check
      _
    $region23: #{fwd.1} parent=1 // pred_check_branch
      %82 = sbr.rel (0) target = $region25
    $region24: #{fwd.1} parent=1 // pred_region
      %s84 = ssub.s32 256, 256
      %85 = vsyncadd [#allocation15], %s84
      %s86 = sshll.u32 [#allocation14], 4
      %s87 = int_to_ptr.vmem [resolvable:$true] %s86
      %92 = dma.hbm_to_vmem [thread:$0]  %s5, 256, %s87, [#allocation15], 64, 64, 4
    $region25: #{fwd.1} parent=1 // pred_fallthru
      _
    // Predicated region
    $region26: #{fwd.1} parent=1 // pred_check
      _
    $region27: #{fwd.1} parent=1 // pred_check_branch
      %94 = sbr.rel (0) target = $region29
    $region28: #{fwd.1} parent=1 // pred_region
      %s96 = ssub.s32 1024, 1024
      %97 = vsyncadd [#allocation15], %s96
      %s98 = sshll.u32 [#allocation16], 4
      %s99 = int_to_ptr.vmem [resolvable:$true] %s98
      %104 = dma.hbm_to_vmem [thread:$0]  %s6, 1024, %s99, [#allocation15], 64, 64, 4
    $region29: #{fwd.1} parent=1 // pred_fallthru
      _
    // Predicated region
    $region30: #{fwd.1} parent=1 // pred_check
      _
    $region31: #{fwd.1} parent=1 // pred_check_branch
      %106 = sbr.rel (0) target = $region33
    $region32: #{fwd.1} parent=1 // pred_region
      %s108 = ssub.s32 16, 16
      %109 = vsyncadd [#allocation18], %s108
      %s111 = sshll.u32 [#allocation17], 4
      %s112 = int_to_ptr.vmem [resolvable:$true] %s111
      %114 = dma.hbm_to_vmem [thread:$0]  %s7, 16, %s112, [#allocation18]
    $region33: #{fwd.1} parent=1 // pred_fallthru
      _
    // Predicated region
    $region34: #{fwd.1} parent=1 // pred_check
      _
    $region35: #{fwd.1} parent=1 // pred_check_branch
      %116 = sbr.rel (0) target = $region37
    $region36: #{fwd.1} parent=1 // pred_region
      %117 = dma.done [#allocation6], 128
    $region37: #{fwd.1} parent=1 // pred_fallthru
      _
    // Predicated region
    $region38: #{fwd.1} parent=1 // pred_check
      _
    $region39: #{fwd.1} parent=1 // pred_check_branch
      %119 = sbr.rel (0) target = $region41
    $region40: #{fwd.1} parent=1 // pred_region
      %120 = dma.done [#allocation9], 512
    $region41: #{fwd.1} parent=1 // pred_fallthru
      _
    // Predicated region
    $region42: #{fwd.1} parent=1 // pred_check
      _
    $region43: #{fwd.1} parent=1 // pred_check_branch
      %122 = sbr.rel (0) target = $region45
    $region44: #{fwd.1} parent=1 // pred_region
      %123 = dma.done [#allocation9], 512
    $region45: #{fwd.1} parent=1 // pred_fallthru
      _
    // Predicated region
    $region46: #{fwd.1} parent=1 // pred_check
      _
    $region47: #{fwd.1} parent=1 // pred_check_branch
      %125 = sbr.rel (0) target = $region49
    $region48: #{fwd.1} parent=1 // pred_region
      %126 = dma.done [#allocation12], 16384
    $region49: #{fwd.1} parent=1 // pred_fallthru
      _
    // Predicated region
    $region50: #{fwd.1} parent=1 // pred_check
      _
    $region51: #{fwd.1} parent=1 // pred_check_branch
      %128 = sbr.rel (0) target = $region53
    $region52: #{fwd.1} parent=1 // pred_region
      %129 = dma.done [#allocation12], 16384
    $region53: #{fwd.1} parent=1 // pred_fallthru
      _
    // Predicated region
    $region54: #{fwd.1} parent=1 // pred_check
      _
    $region55: #{fwd.1} parent=1 // pred_check_branch
      %131 = sbr.rel (0) target = $region57
    $region56: #{fwd.1} parent=1 // pred_region
      %132 = dma.done [#allocation15], 256
    $region57: #{fwd.1} parent=1 // pred_fallthru
      _
    // Predicated region
    $region58: #{fwd.1} parent=1 // pred_check
      _
    $region59: #{fwd.1} parent=1 // pred_check_branch
      %134 = sbr.rel (0) target = $region61
    $region60: #{fwd.1} parent=1 // pred_region
      %135 = dma.done [#allocation15], 1024
    $region61: #{fwd.1} parent=1 // pred_fallthru
      _
    // Predicated region
    $region62: #{fwd.1} parent=1 // pred_check
      _
    $region63: #{fwd.1} parent=1 // pred_check_branch
      %137 = sbr.rel (0) target = $region65
    $region64: #{fwd.1} parent=1 // pred_region
      %138 = dma.done [#allocation18], 16
    $region65: #{fwd.1} parent=1 // pred_fallthru
      _
    %p140 = scmp.eq.s32.totalorder 0, 0
    // Predicated region
    $region66: #{fwd.1} parent=1 // pred_check
      %p141 = pneg %p140
    $region67: #{fwd.1} parent=1 // pred_check_branch
      %143 = sbr.rel (%p141) target = $region69
    $region68: #{fwd.1} parent=1 // pred_region
      %v144 = vld [vmem:[#allocation5] sm:$0xff]
      %v145 = vpack.c.bf16 %v144, %v144
      %v146 = vld [vmem:[#allocation8] sm:$0xff]
      %v147 = vld [vmem:[#allocation10] sm:$0xff]
      %v148 = vld [vmem:[#allocation11] sm:$0xff]
      %v149 = vld [vmem:[#allocation11 + $0x8] sm:$0xff]
      %v150 = vld [vmem:[#allocation11 + $0x10] sm:$0xff]
      %v151 = vld [vmem:[#allocation11 + $0x18] sm:$0xff]
      %v152 = vld [vmem:[#allocation11 + $0x20] sm:$0xff]
      %v153 = vld [vmem:[#allocation11 + $0x28] sm:$0xff]
      %v154 = vld [vmem:[#allocation11 + $0x30] sm:$0xff]
      %v155 = vld [vmem:[#allocation11 + $0x38] sm:$0xff]
      %v156 = vld [vmem:[#allocation11 + $0x40] sm:$0xff]
      %v157 = vld [vmem:[#allocation11 + $0x48] sm:$0xff]
      %v158 = vld [vmem:[#allocation11 + $0x50] sm:$0xff]
      %v159 = vld [vmem:[#allocation11 + $0x58] sm:$0xff]
      %v160 = vld [vmem:[#allocation11 + $0x60] sm:$0xff]
      %v161 = vld [vmem:[#allocation11 + $0x68] sm:$0xff]
      %v162 = vld [vmem:[#allocation11 + $0x70] sm:$0xff]
      %v163 = vld [vmem:[#allocation11 + $0x78] sm:$0xff]
      %v164 = vld [vmem:[#allocation11 + $0x80] sm:$0xff]
      %v165 = vld [vmem:[#allocation11 + $0x88] sm:$0xff]
      %v166 = vld [vmem:[#allocation11 + $0x90] sm:$0xff]
      %v167 = vld [vmem:[#allocation11 + $0x98] sm:$0xff]
      %v168 = vld [vmem:[#allocation11 + $0xa0] sm:$0xff]
      %v169 = vld [vmem:[#allocation11 + $0xa8] sm:$0xff]
      %v170 = vld [vmem:[#allocation11 + $0xb0] sm:$0xff]
      %v171 = vld [vmem:[#allocation11 + $0xb8] sm:$0xff]
      %v172 = vld [vmem:[#allocation11 + $0xc0] sm:$0xff]
      %v173 = vld [vmem:[#allocation11 + $0xc8] sm:$0xff]
      %v174 = vld [vmem:[#allocation11 + $0xd0] sm:$0xff]
      %v175 = vld [vmem:[#allocation11 + $0xd8] sm:$0xff]
      %v176 = vld [vmem:[#allocation11 + $0xe0] sm:$0xff]
      %v177 = vld [vmem:[#allocation11 + $0xe8] sm:$0xff]
      %v178 = vld [vmem:[#allocation11 + $0xf0] sm:$0xff]
      %v179 = vld [vmem:[#allocation11 + $0xf8] sm:$0xff]
      %v180 = vpack.c.bf16 %v146, %v146
      %v181 = vld [vmem:[#allocation13] sm:$0xff]
      %v182 = vld [vmem:[#allocation13 + $0x8] sm:$0xff]
      %v183 = vld [vmem:[#allocation13 + $0x10] sm:$0xff]
      %v184 = vld [vmem:[#allocation13 + $0x18] sm:$0xff]
      %v185 = vld [vmem:[#allocation13 + $0x20] sm:$0xff]
      %v186 = vld [vmem:[#allocation13 + $0x28] sm:$0xff]
      %v187 = vld [vmem:[#allocation13 + $0x30] sm:$0xff]
      %v188 = vld [vmem:[#allocation13 + $0x38] sm:$0xff]
      %v189 = vld [vmem:[#allocation13 + $0x40] sm:$0xff]
      %v190 = vld [vmem:[#allocation13 + $0x48] sm:$0xff]
      %v191 = vld [vmem:[#allocation13 + $0x50] sm:$0xff]
      %v192 = vld [vmem:[#allocation13 + $0x58] sm:$0xff]
      %v193 = vld [vmem:[#allocation13 + $0x60] sm:$0xff]
      %v194 = vld [vmem:[#allocation13 + $0x68] sm:$0xff]
      %v195 = vld [vmem:[#allocation13 + $0x70] sm:$0xff]
      %v196 = vld [vmem:[#allocation13 + $0x78] sm:$0xff]
      %v197 = vld [vmem:[#allocation13 + $0x80] sm:$0xff]
      %v198 = vld [vmem:[#allocation13 + $0x88] sm:$0xff]
      %v199 = vld [vmem:[#allocation13 + $0x90] sm:$0xff]
      %v200 = vld [vmem:[#allocation13 + $0x98] sm:$0xff]
      %v201 = vld [vmem:[#allocation13 + $0xa0] sm:$0xff]
      %v202 = vld [vmem:[#allocation13 + $0xa8] sm:$0xff]
      %v203 = vld [vmem:[#allocation13 + $0xb0] sm:$0xff]
      %v204 = vld [vmem:[#allocation13 + $0xb8] sm:$0xff]
      %v205 = vld [vmem:[#allocation13 + $0xc0] sm:$0xff]
      %v206 = vld [vmem:[#allocation13 + $0xc8] sm:$0xff]
      %v207 = vld [vmem:[#allocation13 + $0xd0] sm:$0xff]
      %v208 = vld [vmem:[#allocation13 + $0xd8] sm:$0xff]
      %v209 = vld [vmem:[#allocation13 + $0xe0] sm:$0xff]
      %v210 = vld [vmem:[#allocation13 + $0xe8] sm:$0xff]
      %v211 = vld [vmem:[#allocation13 + $0xf0] sm:$0xff]
      %v212 = vld [vmem:[#allocation13 + $0xf8] sm:$0xff]
      %v245 = vunpack.c.l.b16 %v181
      %v246 = vunpack.c.h.b16 %v181
      %v247 = vunpack.c.l.b16 %v182
      %v248 = vunpack.c.h.b16 %v182
      %v249 = vunpack.c.l.b16 %v183
      %v250 = vunpack.c.h.b16 %v183
      %v251 = vunpack.c.l.b16 %v184
      %v252 = vunpack.c.h.b16 %v184
      %v253 = vunpack.c.l.b16 %v185
      %v254 = vunpack.c.h.b16 %v185
      %v255 = vunpack.c.l.b16 %v186
      %v256 = vunpack.c.h.b16 %v186
      %v257 = vunpack.c.l.b16 %v187
      %v258 = vunpack.c.h.b16 %v187
      %v259 = vunpack.c.l.b16 %v188
      %v260 = vunpack.c.h.b16 %v188
      %v261 = vunpack.c.l.b16 %v189
      %v262 = vunpack.c.h.b16 %v189
      %v263 = vunpack.c.l.b16 %v190
      %v264 = vunpack.c.h.b16 %v190
      %v265 = vunpack.c.l.b16 %v191
      %v266 = vunpack.c.h.b16 %v191
      %v267 = vunpack.c.l.b16 %v192
      %v268 = vunpack.c.h.b16 %v192
      %v269 = vunpack.c.l.b16 %v193
      %v270 = vunpack.c.h.b16 %v193
      %v271 = vunpack.c.l.b16 %v194
      %v272 = vunpack.c.h.b16 %v194
      %v273 = vunpack.c.l.b16 %v195
      %v274 = vunpack.c.h.b16 %v195
      %v275 = vunpack.c.l.b16 %v196
      %v276 = vunpack.c.h.b16 %v196
      %v277 = vunpack.c.l.b16 %v197
      %v278 = vunpack.c.h.b16 %v197
      %v279 = vunpack.c.l.b16 %v198
      %v280 = vunpack.c.h.b16 %v198
      %v281 = vunpack.c.l.b16 %v199
      %v282 = vunpack.c.h.b16 %v199
      %v283 = vunpack.c.l.b16 %v200
      %v284 = vunpack.c.h.b16 %v200
      %v285 = vunpack.c.l.b16 %v201
      %v286 = vunpack.c.h.b16 %v201
      %v287 = vunpack.c.l.b16 %v202
      %v288 = vunpack.c.h.b16 %v202
      %v289 = vunpack.c.l.b16 %v203
      %v290 = vunpack.c.h.b16 %v203
      %v291 = vunpack.c.l.b16 %v204
      %v292 = vunpack.c.h.b16 %v204
      %v293 = vunpack.c.l.b16 %v205
      %v294 = vunpack.c.h.b16 %v205
      %v295 = vunpack.c.l.b16 %v206
      %v296 = vunpack.c.h.b16 %v206
      %v297 = vunpack.c.l.b16 %v207
      %v298 = vunpack.c.h.b16 %v207
      %v299 = vunpack.c.l.b16 %v208
      %v300 = vunpack.c.h.b16 %v208
      %v301 = vunpack.c.l.b16 %v209
      %v302 = vunpack.c.h.b16 %v209
      %v303 = vunpack.c.l.b16 %v210
      %v304 = vunpack.c.h.b16 %v210
      %v305 = vunpack.c.l.b16 %v211
      %v306 = vunpack.c.h.b16 %v211
      %v307 = vunpack.c.l.b16 %v212
      %v308 = vunpack.c.h.b16 %v212
      %v309 = vpack.c.b16 %v249, %v245
      %v310 = vpack.c.b16 %v250, %v246
      %v311 = vpack.c.b16 %v251, %v247
      %v312 = vpack.c.b16 %v252, %v248
      %v313 = vpack.c.b16 %v257, %v253
      %v314 = vpack.c.b16 %v258, %v254
      %v315 = vpack.c.b16 %v259, %v255
      %v316 = vpack.c.b16 %v260, %v256
      %v317 = vpack.c.b16 %v265, %v261
      %v318 = vpack.c.b16 %v266, %v262
      %v319 = vpack.c.b16 %v267, %v263
      %v320 = vpack.c.b16 %v268, %v264
      %v321 = vpack.c.b16 %v273, %v269
      %v322 = vpack.c.b16 %v274, %v270
      %v323 = vpack.c.b16 %v275, %v271
      %v324 = vpack.c.b16 %v276, %v272
      %v325 = vpack.c.b16 %v281, %v277
      %v326 = vpack.c.b16 %v282, %v278
      %v327 = vpack.c.b16 %v283, %v279
      %v328 = vpack.c.b16 %v284, %v280
      %v329 = vpack.c.b16 %v289, %v285
      %v330 = vpack.c.b16 %v290, %v286
      %v331 = vpack.c.b16 %v291, %v287
      %v332 = vpack.c.b16 %v292, %v288
      %v333 = vpack.c.b16 %v297, %v293
      %v334 = vpack.c.b16 %v298, %v294
      %v335 = vpack.c.b16 %v299, %v295
      %v336 = vpack.c.b16 %v300, %v296
      %v337 = vpack.c.b16 %v305, %v301
      %v338 = vpack.c.b16 %v306, %v302
      %v339 = vpack.c.b16 %v307, %v303
      %v340 = vpack.c.b16 %v308, %v304
      %373 = vmatprep.subr.bf16.mxu0 %v310
      %374 = vmatpush1.bf16.msra.mxu0 %v309
      %375 = vmatprep.subr.bf16.mxu0 %v314
      %376 = vmatpush1.bf16.msra.mxu0 %v313
      %377 = vmatprep.subr.bf16.mxu0 %v318
      %378 = vmatpush1.bf16.msra.mxu0 %v317
      %379 = vmatprep.subr.bf16.mxu0 %v322
      %380 = vmatpush1.bf16.msra.mxu0 %v321
      %381 = vmatprep.subr.bf16.mxu0 %v326
      %382 = vmatpush1.bf16.msra.mxu0 %v325
      %383 = vmatprep.subr.bf16.mxu0 %v330
      %384 = vmatpush1.bf16.msra.mxu0 %v329
      %385 = vmatprep.subr.bf16.mxu0 %v334
      %386 = vmatpush1.bf16.msra.mxu0 %v333
      %387 = vmatprep.subr.bf16.mxu0 %v338
      %388 = vmatpush1.bf16.msra.mxu0 %v337
      %389 = vmatprep.subr.bf16.mxu0 0
      %390 = vmatpush1.bf16.msra.mxu0 0
      %391 = vmatprep.subr.bf16.mxu0 0
      %392 = vmatpush1.bf16.msra.mxu0 0
      %393 = vmatprep.subr.bf16.mxu0 0
      %394 = vmatpush1.bf16.msra.mxu0 0
      %395 = vmatprep.subr.bf16.mxu0 0
      %396 = vmatpush1.bf16.msra.mxu0 0
      %397 = vmatprep.subr.bf16.mxu0 0
      %398 = vmatpush1.bf16.msra.mxu0 0
      %399 = vmatprep.subr.bf16.mxu0 0
      %400 = vmatpush1.bf16.msra.mxu0 0
      %401 = vmatprep.subr.bf16.mxu0 0
      %402 = vmatpush1.bf16.msra.mxu0 0
      %403 = vmatprep.subr.bf16.mxu0 0
      %404 = vmatpush1.bf16.msra.mxu0 0
      %405 = vmatprep.mubr.bf16.mxu0 0
      %406 = vmatmul.mubr.bf16.gmra.mrb[0].mxu0 %v180
      %v407 = vpop.f32.mrb[0].mxu0
      %v408 = vadd.f32 0.0, %v407
      %v409 = vpop.f32.mrb[0].mxu0
      %v410 = vadd.f32 0.0, %v409
      %v411 = vpop.f32.mrb[0].mxu0
      %v412 = vpop.f32.mrb[0].mxu0
      %413 = vdwg.mxu0
      %414 = vmatprep.subr.bf16.mxu0 %v312
      %415 = vmatpush1.bf16.msra.mxu0 %v311
      %416 = vmatprep.subr.bf16.mxu0 %v316
      %417 = vmatpush1.bf16.msra.mxu0 %v315
      %418 = vmatprep.subr.bf16.mxu0 %v320
      %419 = vmatpush1.bf16.msra.mxu0 %v319
      %420 = vmatprep.subr.bf16.mxu0 %v324
      %421 = vmatpush1.bf16.msra.mxu0 %v323
      %422 = vmatprep.subr.bf16.mxu0 %v328
      %423 = vmatpush1.bf16.msra.mxu0 %v327
      %424 = vmatprep.subr.bf16.mxu0 %v332
      %425 = vmatpush1.bf16.msra.mxu0 %v331
      %426 = vmatprep.subr.bf16.mxu0 %v336
      %427 = vmatpush1.bf16.msra.mxu0 %v335
      %428 = vmatprep.subr.bf16.mxu0 %v340
      %429 = vmatpush1.bf16.msra.mxu0 %v339
      %430 = vmatprep.subr.bf16.mxu0 0
      %431 = vmatpush1.bf16.msra.mxu0 0
      %432 = vmatprep.subr.bf16.mxu0 0
      %433 = vmatpush1.bf16.msra.mxu0 0
      %434 = vmatprep.subr.bf16.mxu0 0
      %435 = vmatpush1.bf16.msra.mxu0 0
      %436 = vmatprep.subr.bf16.mxu0 0
      %437 = vmatpush1.bf16.msra.mxu0 0
      %438 = vmatprep.subr.bf16.mxu0 0
      %439 = vmatpush1.bf16.msra.mxu0 0
      %440 = vmatprep.subr.bf16.mxu0 0
      %441 = vmatpush1.bf16.msra.mxu0 0
      %442 = vmatprep.subr.bf16.mxu0 0
      %443 = vmatpush1.bf16.msra.mxu0 0
      %444 = vmatprep.subr.bf16.mxu0 0
      %445 = vmatpush1.bf16.msra.mxu0 0
      %446 = vmatprep.mubr.bf16.mxu0 0
      %447 = vmatmul.mubr.bf16.gmra.mrb[0].mxu0 %v180
      %v448 = vpop.f32.mrb[0].mxu0
      %v449 = vadd.f32 0.0, %v448
      %v450 = vpop.f32.mrb[0].mxu0
      %v451 = vadd.f32 0.0, %v450
      %v452 = vpop.f32.mrb[0].mxu0
      %v453 = vpop.f32.mrb[0].mxu0
      %454 = vdwg.mxu0
      %v487 = vunpack.c.l.b16 %v148
      %v488 = vunpack.c.h.b16 %v148
      %v489 = vunpack.c.l.b16 %v149
      %v490 = vunpack.c.h.b16 %v149
      %v491 = vunpack.c.l.b16 %v150
      %v492 = vunpack.c.h.b16 %v150
      %v493 = vunpack.c.l.b16 %v151
      %v494 = vunpack.c.h.b16 %v151
      %v495 = vunpack.c.l.b16 %v152
      %v496 = vunpack.c.h.b16 %v152
      %v497 = vunpack.c.l.b16 %v153
      %v498 = vunpack.c.h.b16 %v153
      %v499 = vunpack.c.l.b16 %v154
      %v500 = vunpack.c.h.b16 %v154
      %v501 = vunpack.c.l.b16 %v155
      %v502 = vunpack.c.h.b16 %v155
      %v503 = vunpack.c.l.b16 %v156
      %v504 = vunpack.c.h.b16 %v156
      %v505 = vunpack.c.l.b16 %v157
      %v506 = vunpack.c.h.b16 %v157
      %v507 = vunpack.c.l.b16 %v158
      %v508 = vunpack.c.h.b16 %v158
      %v509 = vunpack.c.l.b16 %v159
      %v510 = vunpack.c.h.b16 %v159
      %v511 = vunpack.c.l.b16 %v160
      %v512 = vunpack.c.h.b16 %v160
      %v513 = vunpack.c.l.b16 %v161
      %v514 = vunpack.c.h.b16 %v161
      %v515 = vunpack.c.l.b16 %v162
      %v516 = vunpack.c.h.b16 %v162
      %v517 = vunpack.c.l.b16 %v163
      %v518 = vunpack.c.h.b16 %v163
      %v519 = vunpack.c.l.b16 %v164
      %v520 = vunpack.c.h.b16 %v164
      %v521 = vunpack.c.l.b16 %v165
      %v522 = vunpack.c.h.b16 %v165
      %v523 = vunpack.c.l.b16 %v166
      %v524 = vunpack.c.h.b16 %v166
      %v525 = vunpack.c.l.b16 %v167
      %v526 = vunpack.c.h.b16 %v167
      %v527 = vunpack.c.l.b16 %v168
      %v528 = vunpack.c.h.b16 %v168
      %v529 = vunpack.c.l.b16 %v169
      %v530 = vunpack.c.h.b16 %v169
      %v531 = vunpack.c.l.b16 %v170
      %v532 = vunpack.c.h.b16 %v170
      %v533 = vunpack.c.l.b16 %v171
      %v534 = vunpack.c.h.b16 %v171
      %v535 = vunpack.c.l.b16 %v172
      %v536 = vunpack.c.h.b16 %v172
      %v537 = vunpack.c.l.b16 %v173
      %v538 = vunpack.c.h.b16 %v173
      %v539 = vunpack.c.l.b16 %v174
      %v540 = vunpack.c.h.b16 %v174
      %v541 = vunpack.c.l.b16 %v175
      %v542 = vunpack.c.h.b16 %v175
      %v543 = vunpack.c.l.b16 %v176
      %v544 = vunpack.c.h.b16 %v176
      %v545 = vunpack.c.l.b16 %v177
      %v546 = vunpack.c.h.b16 %v177
      %v547 = vunpack.c.l.b16 %v178
      %v548 = vunpack.c.h.b16 %v178
      %v549 = vunpack.c.l.b16 %v179
      %v550 = vunpack.c.h.b16 %v179
      %v551 = vpack.c.b16 %v491, %v487
      %v552 = vpack.c.b16 %v492, %v488
      %v553 = vpack.c.b16 %v493, %v489
      %v554 = vpack.c.b16 %v494, %v490
      %v555 = vpack.c.b16 %v499, %v495
      %v556 = vpack.c.b16 %v500, %v496
      %v557 = vpack.c.b16 %v501, %v497
      %v558 = vpack.c.b16 %v502, %v498
      %v559 = vpack.c.b16 %v507, %v503
      %v560 = vpack.c.b16 %v508, %v504
      %v561 = vpack.c.b16 %v509, %v505
      %v562 = vpack.c.b16 %v510, %v506
      %v563 = vpack.c.b16 %v515, %v511
      %v564 = vpack.c.b16 %v516, %v512
      %v565 = vpack.c.b16 %v517, %v513
      %v566 = vpack.c.b16 %v518, %v514
      %v567 = vpack.c.b16 %v523, %v519
      %v568 = vpack.c.b16 %v524, %v520
      %v569 = vpack.c.b16 %v525, %v521
      %v570 = vpack.c.b16 %v526, %v522
      %v571 = vpack.c.b16 %v531, %v527
      %v572 = vpack.c.b16 %v532, %v528
      %v573 = vpack.c.b16 %v533, %v529
      %v574 = vpack.c.b16 %v534, %v530
      %v575 = vpack.c.b16 %v539, %v535
      %v576 = vpack.c.b16 %v540, %v536
      %v577 = vpack.c.b16 %v541, %v537
      %v578 = vpack.c.b16 %v542, %v538
      %v579 = vpack.c.b16 %v547, %v543
      %v580 = vpack.c.b16 %v548, %v544
      %v581 = vpack.c.b16 %v549, %v545
      %v582 = vpack.c.b16 %v550, %v546
      %615 = vmatprep.subr.bf16.mxu0 %v552
      %616 = vmatpush1.bf16.msra.mxu0 %v551
      %617 = vmatprep.subr.bf16.mxu0 %v556
      %618 = vmatpush1.bf16.msra.mxu0 %v555
      %619 = vmatprep.subr.bf16.mxu0 %v560
      %620 = vmatpush1.bf16.msra.mxu0 %v559
      %621 = vmatprep.subr.bf16.mxu0 %v564
      %622 = vmatpush1.bf16.msra.mxu0 %v563
      %623 = vmatprep.subr.bf16.mxu0 %v568
      %624 = vmatpush1.bf16.msra.mxu0 %v567
      %625 = vmatprep.subr.bf16.mxu0 %v572
      %626 = vmatpush1.bf16.msra.mxu0 %v571
      %627 = vmatprep.subr.bf16.mxu0 %v576
      %628 = vmatpush1.bf16.msra.mxu0 %v575
      %629 = vmatprep.subr.bf16.mxu0 %v580
      %630 = vmatpush1.bf16.msra.mxu0 %v579
      %631 = vmatprep.subr.bf16.mxu0 0
      %632 = vmatpush1.bf16.msra.mxu0 0
      %633 = vmatprep.subr.bf16.mxu0 0
      %634 = vmatpush1.bf16.msra.mxu0 0
      %635 = vmatprep.subr.bf16.mxu0 0
      %636 = vmatpush1.bf16.msra.mxu0 0
      %637 = vmatprep.subr.bf16.mxu0 0
      %638 = vmatpush1.bf16.msra.mxu0 0
      %639 = vmatprep.subr.bf16.mxu0 0
      %640 = vmatpush1.bf16.msra.mxu0 0
      %641 = vmatprep.subr.bf16.mxu0 0
      %642 = vmatpush1.bf16.msra.mxu0 0
      %643 = vmatprep.subr.bf16.mxu0 0
      %644 = vmatpush1.bf16.msra.mxu0 0
      %645 = vmatprep.subr.bf16.mxu0 0
      %646 = vmatpush1.bf16.msra.mxu0 0
      %647 = vmatprep.mubr.bf16.mxu0 0
      %648 = vmatmul.mubr.bf16.gmra.mrb[0].mxu0 %v145
      %v649 = vpop.f32.mrb[0].mxu0
      %v650 = vadd.f32 %v408, %v649
      %v651 = vpop.f32.mrb[0].mxu0
      %v652 = vadd.f32 %v410, %v651
      %v653 = vpop.f32.mrb[0].mxu0
      %v654 = vpop.f32.mrb[0].mxu0
      %655 = vdwg.mxu0
      %656 = vmatprep.subr.bf16.mxu0 %v554
      %657 = vmatpush1.bf16.msra.mxu0 %v553
      %658 = vmatprep.subr.bf16.mxu0 %v558
      %659 = vmatpush1.bf16.msra.mxu0 %v557
      %660 = vmatprep.subr.bf16.mxu0 %v562
      %661 = vmatpush1.bf16.msra.mxu0 %v561
      %662 = vmatprep.subr.bf16.mxu0 %v566
      %663 = vmatpush1.bf16.msra.mxu0 %v565
      %664 = vmatprep.subr.bf16.mxu0 %v570
      %665 = vmatpush1.bf16.msra.mxu0 %v569
      %666 = vmatprep.subr.bf16.mxu0 %v574
      %667 = vmatpush1.bf16.msra.mxu0 %v573
      %668 = vmatprep.subr.bf16.mxu0 %v578
      %669 = vmatpush1.bf16.msra.mxu0 %v577
      %670 = vmatprep.subr.bf16.mxu0 %v582
      %671 = vmatpush1.bf16.msra.mxu0 %v581
      %672 = vmatprep.subr.bf16.mxu0 0
      %673 = vmatpush1.bf16.msra.mxu0 0
      %674 = vmatprep.subr.bf16.mxu0 0
      %675 = vmatpush1.bf16.msra.mxu0 0
      %676 = vmatprep.subr.bf16.mxu0 0
      %677 = vmatpush1.bf16.msra.mxu0 0
      %678 = vmatprep.subr.bf16.mxu0 0
      %679 = vmatpush1.bf16.msra.mxu0 0
      %680 = vmatprep.subr.bf16.mxu0 0
      %681 = vmatpush1.bf16.msra.mxu0 0
      %682 = vmatprep.subr.bf16.mxu0 0
      %683 = vmatpush1.bf16.msra.mxu0 0
      %684 = vmatprep.subr.bf16.mxu0 0
      %685 = vmatpush1.bf16.msra.mxu0 0
      %686 = vmatprep.subr.bf16.mxu0 0
      %687 = vmatpush1.bf16.msra.mxu0 0
      %688 = vmatprep.mubr.bf16.mxu0 0
      %689 = vmatmul.mubr.bf16.gmra.mrb[0].mxu0 %v145
      %v690 = vpop.f32.mrb[0].mxu0
      %v691 = vadd.f32 %v449, %v690
      %v692 = vpop.f32.mrb[0].mxu0
      %v693 = vadd.f32 %v451, %v692
      %v694 = vpop.f32.mrb[0].mxu0
      %v695 = vpop.f32.mrb[0].mxu0
      %696 = vdwg.mxu0
      %v697 = vld [vmem:[#allocation14] sm:$0xf]
      %v699 = vlaneseq
      %v700 = vshrl.u32 %v699, 7
      %v701 = vsub.s32 0, %v700
      %v702 = vrot.slane %v697, %v701
      %v703 = vlaneseq
      %v704 = vshrl.u32 %v703, 7
      %v705 = vsub.s32 1, %v704
      %v706 = vrot.slane %v697, %v705
      %v707 = vlaneseq
      %v708 = vshrl.u32 %v707, 7
      %v709 = vsub.s32 2, %v708
      %v710 = vrot.slane %v697, %v709
      %v711 = vlaneseq
      %v712 = vshrl.u32 %v711, 7
      %v713 = vsub.s32 3, %v712
      %v714 = vrot.slane %v697, %v713
      %v719 = vadd.f32 %v650, %v702
      %v720 = vadd.f32 %v652, %v706
      %v721 = vadd.f32 %v691, %v710
      %v722 = vadd.f32 %v693, %v714
      %v723 = vxor.u32 %v719, 2147483648
      %v724 = vmul.f32 %v723, 1.442695
      %v725 = vpow.pop %v724
      %v726 = vadd.f32 %v725, 1.0
      %v727 = vrcp.pop %v726
      %v728 = vmul.f32 1.0, %v727
      %v729 = vxor.u32 %v720, 2147483648
      %v730 = vmul.f32 %v729, 1.442695
      %v731 = vpow.pop %v730
      %v732 = vadd.f32 %v731, 1.0
      %v733 = vrcp.pop %v732
      %v734 = vmul.f32 1.0, %v733
      %v735 = vtanh.pop %v721
      %v736 = vxor.u32 %v722, 2147483648
      %v737 = vmul.f32 %v736, 1.442695
      %v738 = vpow.pop %v737
      %v739 = vadd.f32 %v738, 1.0
      %v740 = vrcp.pop %v739
      %v741 = vmul.f32 1.0, %v740
      %v742 = vmul.f32 %v734, %v147
      %v743 = vmul.f32 %v728, %v735
      %v744 = vadd.f32 %v742, %v743
      %v745 = vtanh.pop %v744
      %v746 = vmul.f32 %v741, %v745
      %747 = vst [vmem:[#allocation20] sm:$0xff] %v746
      %748 = vst [vmem:[#allocation22] sm:$0xff] %v744
      %v749 = vpack.c.bf16 %v746, %v746
      %s750 = scalar_lea.vmem [#allocation8], 8
      %v751 = vld [vmem:[%s750] sm:$0xff]
      %s752 = scalar_lea.vmem [#allocation10], 8
      %v753 = vld [vmem:[%s752] sm:$0xff]
      %s754 = scalar_lea.vmem [#allocation11], 256
      %v755 = vld [vmem:[%s754] sm:$0xff]
      %v756 = vld [vmem:[%s754 + $0x8] sm:$0xff]
      %v757 = vld [vmem:[%s754 + $0x10] sm:$0xff]
      %v758 = vld [vmem:[%s754 + $0x18] sm:$0xff]
      %v759 = vld [vmem:[%s754 + $0x20] sm:$0xff]
      %v760 = vld [vmem:[%s754 + $0x28] sm:$0xff]
      %v761 = vld [vmem:[%s754 + $0x30] sm:$0xff]
      %v762 = vld [vmem:[%s754 + $0x38] sm:$0xff]
      %v763 = vld [vmem:[%s754 + $0x40] sm:$0xff]
      %v764 = vld [vmem:[%s754 + $0x48] sm:$0xff]
      %v765 = vld [vmem:[%s754 + $0x50] sm:$0xff]
      %v766 = vld [vmem:[%s754 + $0x58] sm:$0xff]
      %v767 = vld [vmem:[%s754 + $0x60] sm:$0xff]
      %v768 = vld [vmem:[%s754 + $0x68] sm:$0xff]
      %v769 = vld [vmem:[%s754 + $0x70] sm:$0xff]
      %v770 = vld [vmem:[%s754 + $0x78] sm:$0xff]
      %v771 = vld [vmem:[%s754 + $0x80] sm:$0xff]
      %v772 = vld [vmem:[%s754 + $0x88] sm:$0xff]
      %v773 = vld [vmem:[%s754 + $0x90] sm:$0xff]
      %v774 = vld [vmem:[%s754 + $0x98] sm:$0xff]
      %v775 = vld [vmem:[%s754 + $0xa0] sm:$0xff]
      %v776 = vld [vmem:[%s754 + $0xa8] sm:$0xff]
      %v777 = vld [vmem:[%s754 + $0xb0] sm:$0xff]
      %v778 = vld [vmem:[%s754 + $0xb8] sm:$0xff]
      %v779 = vld [vmem:[%s754 + $0xc0] sm:$0xff]
      %v780 = vld [vmem:[%s754 + $0xc8] sm:$0xff]
      %v781 = vld [vmem:[%s754 + $0xd0] sm:$0xff]
      %v782 = vld [vmem:[%s754 + $0xd8] sm:$0xff]
      %v783 = vld [vmem:[%s754 + $0xe0] sm:$0xff]
      %v784 = vld [vmem:[%s754 + $0xe8] sm:$0xff]
      %v785 = vld [vmem:[%s754 + $0xf0] sm:$0xff]
      %v786 = vld [vmem:[%s754 + $0xf8] sm:$0xff]
      %v787 = vpack.c.bf16 %v751, %v751
      %s788 = scalar_lea.vmem [#allocation13], 256
      %v789 = vld [vmem:[%s788] sm:$0xff]
      %v790 = vld [vmem:[%s788 + $0x8] sm:$0xff]
      %v791 = vld [vmem:[%s788 + $0x10] sm:$0xff]
      %v792 = vld [vmem:[%s788 + $0x18] sm:$0xff]
      %v793 = vld [vmem:[%s788 + $0x20] sm:$0xff]
      %v794 = vld [vmem:[%s788 + $0x28] sm:$0xff]
      %v795 = vld [vmem:[%s788 + $0x30] sm:$0xff]
      %v796 = vld [vmem:[%s788 + $0x38] sm:$0xff]
      %v797 = vld [vmem:[%s788 + $0x40] sm:$0xff]
      %v798 = vld [vmem:[%s788 + $0x48] sm:$0xff]
      %v799 = vld [vmem:[%s788 + $0x50] sm:$0xff]
      %v800 = vld [vmem:[%s788 + $0x58] sm:$0xff]
      %v801 = vld [vmem:[%s788 + $0x60] sm:$0xff]
      %v802 = vld [vmem:[%s788 + $0x68] sm:$0xff]
      %v803 = vld [vmem:[%s788 + $0x70] sm:$0xff]
      %v804 = vld [vmem:[%s788 + $0x78] sm:$0xff]
      %v805 = vld [vmem:[%s788 + $0x80] sm:$0xff]
      %v806 = vld [vmem:[%s788 + $0x88] sm:$0xff]
      %v807 = vld [vmem:[%s788 + $0x90] sm:$0xff]
      %v808 = vld [vmem:[%s788 + $0x98] sm:$0xff]
      %v809 = vld [vmem:[%s788 + $0xa0] sm:$0xff]
      %v810 = vld [vmem:[%s788 + $0xa8] sm:$0xff]
      %v811 = vld [vmem:[%s788 + $0xb0] sm:$0xff]
      %v812 = vld [vmem:[%s788 + $0xb8] sm:$0xff]
      %v813 = vld [vmem:[%s788 + $0xc0] sm:$0xff]
      %v814 = vld [vmem:[%s788 + $0xc8] sm:$0xff]
      %v815 = vld [vmem:[%s788 + $0xd0] sm:$0xff]
      %v816 = vld [vmem:[%s788 + $0xd8] sm:$0xff]
      %v817 = vld [vmem:[%s788 + $0xe0] sm:$0xff]
      %v818 = vld [vmem:[%s788 + $0xe8] sm:$0xff]
      %v819 = vld [vmem:[%s788 + $0xf0] sm:$0xff]
      %v820 = vld [vmem:[%s788 + $0xf8] sm:$0xff]
      %v853 = vunpack.c.l.b16 %v789
      %v854 = vunpack.c.h.b16 %v789
      %v855 = vunpack.c.l.b16 %v790
      %v856 = vunpack.c.h.b16 %v790
      %v857 = vunpack.c.l.b16 %v791
      %v858 = vunpack.c.h.b16 %v791
      %v859 = vunpack.c.l.b16 %v792
      %v860 = vunpack.c.h.b16 %v792
      %v861 = vunpack.c.l.b16 %v793
      %v862 = vunpack.c.h.b16 %v793
      %v863 = vunpack.c.l.b16 %v794
      %v864 = vunpack.c.h.b16 %v794
      %v865 = vunpack.c.l.b16 %v795
      %v866 = vunpack.c.h.b16 %v795
      %v867 = vunpack.c.l.b16 %v796
      %v868 = vunpack.c.h.b16 %v796
      %v869 = vunpack.c.l.b16 %v797
      %v870 = vunpack.c.h.b16 %v797
      %v871 = vunpack.c.l.b16 %v798
      %v872 = vunpack.c.h.b16 %v798
      %v873 = vunpack.c.l.b16 %v799
      %v874 = vunpack.c.h.b16 %v799
      %v875 = vunpack.c.l.b16 %v800
      %v876 = vunpack.c.h.b16 %v800
      %v877 = vunpack.c.l.b16 %v801
      %v878 = vunpack.c.h.b16 %v801
      %v879 = vunpack.c.l.b16 %v802
      %v880 = vunpack.c.h.b16 %v802
      %v881 = vunpack.c.l.b16 %v803
      %v882 = vunpack.c.h.b16 %v803
      %v883 = vunpack.c.l.b16 %v804
      %v884 = vunpack.c.h.b16 %v804
      %v885 = vunpack.c.l.b16 %v805
      %v886 = vunpack.c.h.b16 %v805
      %v887 = vunpack.c.l.b16 %v806
      %v888 = vunpack.c.h.b16 %v806
      %v889 = vunpack.c.l.b16 %v807
      %v890 = vunpack.c.h.b16 %v807
      %v891 = vunpack.c.l.b16 %v808
      %v892 = vunpack.c.h.b16 %v808
      %v893 = vunpack.c.l.b16 %v809
      %v894 = vunpack.c.h.b16 %v809
      %v895 = vunpack.c.l.b16 %v810
      %v896 = vunpack.c.h.b16 %v810
      %v897 = vunpack.c.l.b16 %v811
      %v898 = vunpack.c.h.b16 %v811
      %v899 = vunpack.c.l.b16 %v812
      %v900 = vunpack.c.h.b16 %v812
      %v901 = vunpack.c.l.b16 %v813
      %v902 = vunpack.c.h.b16 %v813
      %v903 = vunpack.c.l.b16 %v814
      %v904 = vunpack.c.h.b16 %v814
      %v905 = vunpack.c.l.b16 %v815
      %v906 = vunpack.c.h.b16 %v815
      %v907 = vunpack.c.l.b16 %v816
      %v908 = vunpack.c.h.b16 %v816
      %v909 = vunpack.c.l.b16 %v817
      %v910 = vunpack.c.h.b16 %v817
      %v911 = vunpack.c.l.b16 %v818
      %v912 = vunpack.c.h.b16 %v818
      %v913 = vunpack.c.l.b16 %v819
      %v914 = vunpack.c.h.b16 %v819
      %v915 = vunpack.c.l.b16 %v820
      %v916 = vunpack.c.h.b16 %v820
      %v917 = vpack.c.b16 %v857, %v853
      %v918 = vpack.c.b16 %v858, %v854
      %v919 = vpack.c.b16 %v859, %v855
      %v920 = vpack.c.b16 %v860, %v856
      %v921 = vpack.c.b16 %v865, %v861
      %v922 = vpack.c.b16 %v866, %v862
      %v923 = vpack.c.b16 %v867, %v863
      %v924 = vpack.c.b16 %v868, %v864
      %v925 = vpack.c.b16 %v873, %v869
      %v926 = vpack.c.b16 %v874, %v870
      %v927 = vpack.c.b16 %v875, %v871
      %v928 = vpack.c.b16 %v876, %v872
      %v929 = vpack.c.b16 %v881, %v877
      %v930 = vpack.c.b16 %v882, %v878
      %v931 = vpack.c.b16 %v883, %v879
      %v932 = vpack.c.b16 %v884, %v880
      %v933 = vpack.c.b16 %v889, %v885
      %v934 = vpack.c.b16 %v890, %v886
      %v935 = vpack.c.b16 %v891, %v887
      %v936 = vpack.c.b16 %v892, %v888
      %v937 = vpack.c.b16 %v897, %v893
      %v938 = vpack.c.b16 %v898, %v894
      %v939 = vpack.c.b16 %v899, %v895
      %v940 = vpack.c.b16 %v900, %v896
      %v941 = vpack.c.b16 %v905, %v901
      %v942 = vpack.c.b16 %v906, %v902
      %v943 = vpack.c.b16 %v907, %v903
      %v944 = vpack.c.b16 %v908, %v904
      %v945 = vpack.c.b16 %v913, %v909
      %v946 = vpack.c.b16 %v914, %v910
      %v947 = vpack.c.b16 %v915, %v911
      %v948 = vpack.c.b16 %v916, %v912
      %981 = vmatprep.subr.bf16.mxu0 %v918
      %982 = vmatpush1.bf16.msra.mxu0 %v917
      %983 = vmatprep.subr.bf16.mxu0 %v922
      %984 = vmatpush1.bf16.msra.mxu0 %v921
      %985 = vmatprep.subr.bf16.mxu0 %v926
      %986 = vmatpush1.bf16.msra.mxu0 %v925
      %987 = vmatprep.subr.bf16.mxu0 %v930
      %988 = vmatpush1.bf16.msra.mxu0 %v929
      %989 = vmatprep.subr.bf16.mxu0 %v934
      %990 = vmatpush1.bf16.msra.mxu0 %v933
      %991 = vmatprep.subr.bf16.mxu0 %v938
      %992 = vmatpush1.bf16.msra.mxu0 %v937
      %993 = vmatprep.subr.bf16.mxu0 %v942
      %994 = vmatpush1.bf16.msra.mxu0 %v941
      %995 = vmatprep.subr.bf16.mxu0 %v946
      %996 = vmatpush1.bf16.msra.mxu0 %v945
      %997 = vmatprep.subr.bf16.mxu0 0
      %998 = vmatpush1.bf16.msra.mxu0 0
      %999 = vmatprep.subr.bf16.mxu0 0
      %1000 = vmatpush1.bf16.msra.mxu0 0
      %1001 = vmatprep.subr.bf16.mxu0 0
      %1002 = vmatpush1.bf16.msra.mxu0 0
      %1003 = vmatprep.subr.bf16.mxu0 0
      %1004 = vmatpush1.bf16.msra.mxu0 0
      %1005 = vmatprep.subr.bf16.mxu0 0
      %1006 = vmatpush1.bf16.msra.mxu0 0
      %1007 = vmatprep.subr.bf16.mxu0 0
      %1008 = vmatpush1.bf16.msra.mxu0 0
      %1009 = vmatprep.subr.bf16.mxu0 0
      %1010 = vmatpush1.bf16.msra.mxu0 0
      %1011 = vmatprep.subr.bf16.mxu0 0
      %1012 = vmatpush1.bf16.msra.mxu0 0
      %1013 = vmatprep.mubr.bf16.mxu0 0
      %1014 = vmatmul.mubr.bf16.gmra.mrb[0].mxu0 %v787
      %v1015 = vpop.f32.mrb[0].mxu0
      %v1016 = vadd.f32 0.0, %v1015
      %v1017 = vpop.f32.mrb[0].mxu0
      %v1018 = vadd.f32 0.0, %v1017
      %v1019 = vpop.f32.mrb[0].mxu0
      %v1020 = vpop.f32.mrb[0].mxu0
      %1021 = vdwg.mxu0
      %1022 = vmatprep.subr.bf16.mxu0 %v920
      %1023 = vmatpush1.bf16.msra.mxu0 %v919
      %1024 = vmatprep.subr.bf16.mxu0 %v924
      %1025 = vmatpush1.bf16.msra.mxu0 %v923
      %1026 = vmatprep.subr.bf16.mxu0 %v928
      %1027 = vmatpush1.bf16.msra.mxu0 %v927
      %1028 = vmatprep.subr.bf16.mxu0 %v932
      %1029 = vmatpush1.bf16.msra.mxu0 %v931
      %1030 = vmatprep.subr.bf16.mxu0 %v936
      %1031 = vmatpush1.bf16.msra.mxu0 %v935
      %1032 = vmatprep.subr.bf16.mxu0 %v940
      %1033 = vmatpush1.bf16.msra.mxu0 %v939
      %1034 = vmatprep.subr.bf16.mxu0 %v944
      %1035 = vmatpush1.bf16.msra.mxu0 %v943
      %1036 = vmatprep.subr.bf16.mxu0 %v948
      %1037 = vmatpush1.bf16.msra.mxu0 %v947
      %1038 = vmatprep.subr.bf16.mxu0 0
      %1039 = vmatpush1.bf16.msra.mxu0 0
      %1040 = vmatprep.subr.bf16.mxu0 0
      %1041 = vmatpush1.bf16.msra.mxu0 0
      %1042 = vmatprep.subr.bf16.mxu0 0
      %1043 = vmatpush1.bf16.msra.mxu0 0
      %1044 = vmatprep.subr.bf16.mxu0 0
      %1045 = vmatpush1.bf16.msra.mxu0 0
      %1046 = vmatprep.subr.bf16.mxu0 0
      %1047 = vmatpush1.bf16.msra.mxu0 0
      %1048 = vmatprep.subr.bf16.mxu0 0
      %1049 = vmatpush1.bf16.msra.mxu0 0
      %1050 = vmatprep.subr.bf16.mxu0 0
      %1051 = vmatpush1.bf16.msra.mxu0 0
      %1052 = vmatprep.subr.bf16.mxu0 0
      %1053 = vmatpush1.bf16.msra.mxu0 0
      %1054 = vmatprep.mubr.bf16.mxu0 0
      %1055 = vmatmul.mubr.bf16.gmra.mrb[0].mxu0 %v787
      %v1056 = vpop.f32.mrb[0].mxu0
      %v1057 = vadd.f32 0.0, %v1056
      %v1058 = vpop.f32.mrb[0].mxu0
      %v1059 = vadd.f32 0.0, %v1058
      %v1060 = vpop.f32.mrb[0].mxu0
      %v1061 = vpop.f32.mrb[0].mxu0
      %1062 = vdwg.mxu0
      %v1095 = vunpack.c.l.b16 %v755
      %v1096 = vunpack.c.h.b16 %v755
      %v1097 = vunpack.c.l.b16 %v756
      %v1098 = vunpack.c.h.b16 %v756
      %v1099 = vunpack.c.l.b16 %v757
      %v1100 = vunpack.c.h.b16 %v757
      %v1101 = vunpack.c.l.b16 %v758
      %v1102 = vunpack.c.h.b16 %v758
      %v1103 = vunpack.c.l.b16 %v759
      %v1104 = vunpack.c.h.b16 %v759
      %v1105 = vunpack.c.l.b16 %v760
      %v1106 = vunpack.c.h.b16 %v760
      %v1107 = vunpack.c.l.b16 %v761
      %v1108 = vunpack.c.h.b16 %v761
      %v1109 = vunpack.c.l.b16 %v762
      %v1110 = vunpack.c.h.b16 %v762
      %v1111 = vunpack.c.l.b16 %v763
      %v1112 = vunpack.c.h.b16 %v763
      %v1113 = vunpack.c.l.b16 %v764
      %v1114 = vunpack.c.h.b16 %v764
      %v1115 = vunpack.c.l.b16 %v765
      %v1116 = vunpack.c.h.b16 %v765
      %v1117 = vunpack.c.l.b16 %v766
      %v1118 = vunpack.c.h.b16 %v766
      %v1119 = vunpack.c.l.b16 %v767
      %v1120 = vunpack.c.h.b16 %v767
      %v1121 = vunpack.c.l.b16 %v768
      %v1122 = vunpack.c.h.b16 %v768
      %v1123 = vunpack.c.l.b16 %v769
      %v1124 = vunpack.c.h.b16 %v769
      %v1125 = vunpack.c.l.b16 %v770
      %v1126 = vunpack.c.h.b16 %v770
      %v1127 = vunpack.c.l.b16 %v771
      %v1128 = vunpack.c.h.b16 %v771
      %v1129 = vunpack.c.l.b16 %v772
      %v1130 = vunpack.c.h.b16 %v772
      %v1131 = vunpack.c.l.b16 %v773
      %v1132 = vunpack.c.h.b16 %v773
      %v1133 = vunpack.c.l.b16 %v774
      %v1134 = vunpack.c.h.b16 %v774
      %v1135 = vunpack.c.l.b16 %v775
      %v1136 = vunpack.c.h.b16 %v775
      %v1137 = vunpack.c.l.b16 %v776
      %v1138 = vunpack.c.h.b16 %v776
      %v1139 = vunpack.c.l.b16 %v777
      %v1140 = vunpack.c.h.b16 %v777
      %v1141 = vunpack.c.l.b16 %v778
      %v1142 = vunpack.c.h.b16 %v778
      %v1143 = vunpack.c.l.b16 %v779
      %v1144 = vunpack.c.h.b16 %v779
      %v1145 = vunpack.c.l.b16 %v780
      %v1146 = vunpack.c.h.b16 %v780
      %v1147 = vunpack.c.l.b16 %v781
      %v1148 = vunpack.c.h.b16 %v781
      %v1149 = vunpack.c.l.b16 %v782
      %v1150 = vunpack.c.h.b16 %v782
      %v1151 = vunpack.c.l.b16 %v783
      %v1152 = vunpack.c.h.b16 %v783
      %v1153 = vunpack.c.l.b16 %v784
      %v1154 = vunpack.c.h.b16 %v784
      %v1155 = vunpack.c.l.b16 %v785
      %v1156 = vunpack.c.h.b16 %v785
      %v1157 = vunpack.c.l.b16 %v786
      %v1158 = vunpack.c.h.b16 %v786
      %v1159 = vpack.c.b16 %v1099, %v1095
      %v1160 = vpack.c.b16 %v1100, %v1096
      %v1161 = vpack.c.b16 %v1101, %v1097
      %v1162 = vpack.c.b16 %v1102, %v1098
      %v1163 = vpack.c.b16 %v1107, %v1103
      %v1164 = vpack.c.b16 %v1108, %v1104
      %v1165 = vpack.c.b16 %v1109, %v1105
      %v1166 = vpack.c.b16 %v1110, %v1106
      %v1167 = vpack.c.b16 %v1115, %v1111
      %v1168 = vpack.c.b16 %v1116, %v1112
      %v1169 = vpack.c.b16 %v1117, %v1113
      %v1170 = vpack.c.b16 %v1118, %v1114
      %v1171 = vpack.c.b16 %v1123, %v1119
      %v1172 = vpack.c.b16 %v1124, %v1120
      %v1173 = vpack.c.b16 %v1125, %v1121
      %v1174 = vpack.c.b16 %v1126, %v1122
      %v1175 = vpack.c.b16 %v1131, %v1127
      %v1176 = vpack.c.b16 %v1132, %v1128
      %v1177 = vpack.c.b16 %v1133, %v1129
      %v1178 = vpack.c.b16 %v1134, %v1130
      %v1179 = vpack.c.b16 %v1139, %v1135
      %v1180 = vpack.c.b16 %v1140, %v1136
      %v1181 = vpack.c.b16 %v1141, %v1137
      %v1182 = vpack.c.b16 %v1142, %v1138
      %v1183 = vpack.c.b16 %v1147, %v1143
      %v1184 = vpack.c.b16 %v1148, %v1144
      %v1185 = vpack.c.b16 %v1149, %v1145
      %v1186 = vpack.c.b16 %v1150, %v1146
      %v1187 = vpack.c.b16 %v1155, %v1151
      %v1188 = vpack.c.b16 %v1156, %v1152
      %v1189 = vpack.c.b16 %v1157, %v1153
      %v1190 = vpack.c.b16 %v1158, %v1154
      %1223 = vmatprep.subr.bf16.mxu0 %v1160
      %1224 = vmatpush1.bf16.msra.mxu0 %v1159
      %1225 = vmatprep.subr.bf16.mxu0 %v1164
      %1226 = vmatpush1.bf16.msra.mxu0 %v1163
      %1227 = vmatprep.subr.bf16.mxu0 %v1168
      %1228 = vmatpush1.bf16.msra.mxu0 %v1167
      %1229 = vmatprep.subr.bf16.mxu0 %v1172
      %1230 = vmatpush1.bf16.msra.mxu0 %v1171
      %1231 = vmatprep.subr.bf16.mxu0 %v1176
      %1232 = vmatpush1.bf16.msra.mxu0 %v1175
      %1233 = vmatprep.subr.bf16.mxu0 %v1180
      %1234 = vmatpush1.bf16.msra.mxu0 %v1179
      %1235 = vmatprep.subr.bf16.mxu0 %v1184
      %1236 = vmatpush1.bf16.msra.mxu0 %v1183
      %1237 = vmatprep.subr.bf16.mxu0 %v1188
      %1238 = vmatpush1.bf16.msra.mxu0 %v1187
      %1239 = vmatprep.subr.bf16.mxu0 0
      %1240 = vmatpush1.bf16.msra.mxu0 0
      %1241 = vmatprep.subr.bf16.mxu0 0
      %1242 = vmatpush1.bf16.msra.mxu0 0
      %1243 = vmatprep.subr.bf16.mxu0 0
      %1244 = vmatpush1.bf16.msra.mxu0 0
      %1245 = vmatprep.subr.bf16.mxu0 0
      %1246 = vmatpush1.bf16.msra.mxu0 0
      %1247 = vmatprep.subr.bf16.mxu0 0
      %1248 = vmatpush1.bf16.msra.mxu0 0
      %1249 = vmatprep.subr.bf16.mxu0 0
      %1250 = vmatpush1.bf16.msra.mxu0 0
      %1251 = vmatprep.subr.bf16.mxu0 0
      %1252 = vmatpush1.bf16.msra.mxu0 0
      %1253 = vmatprep.subr.bf16.mxu0 0
      %1254 = vmatpush1.bf16.msra.mxu0 0
      %1255 = vmatprep.mubr.bf16.mxu0 0
      %1256 = vmatmul.mubr.bf16.gmra.mrb[0].mxu0 %v749
      %v1257 = vpop.f32.mrb[0].mxu0
      %v1258 = vadd.f32 %v1016, %v1257
      %v1259 = vpop.f32.mrb[0].mxu0
      %v1260 = vadd.f32 %v1018, %v1259
      %v1261 = vpop.f32.mrb[0].mxu0
      %v1262 = vpop.f32.mrb[0].mxu0
      %1263 = vdwg.mxu0
      %1264 = vmatprep.subr.bf16.mxu0 %v1162
      %1265 = vmatpush1.bf16.msra.mxu0 %v1161
      %1266 = vmatprep.subr.bf16.mxu0 %v1166
      %1267 = vmatpush1.bf16.msra.mxu0 %v1165
      %1268 = vmatprep.subr.bf16.mxu0 %v1170
      %1269 = vmatpush1.bf16.msra.mxu0 %v1169
      %1270 = vmatprep.subr.bf16.mxu0 %v1174
      %1271 = vmatpush1.bf16.msra.mxu0 %v1173
      %1272 = vmatprep.subr.bf16.mxu0 %v1178
      %1273 = vmatpush1.bf16.msra.mxu0 %v1177
      %1274 = vmatprep.subr.bf16.mxu0 %v1182
      %1275 = vmatpush1.bf16.msra.mxu0 %v1181
      %1276 = vmatprep.subr.bf16.mxu0 %v1186
      %1277 = vmatpush1.bf16.msra.mxu0 %v1185
      %1278 = vmatprep.subr.bf16.mxu0 %v1190
      %1279 = vmatpush1.bf16.msra.mxu0 %v1189
      %1280 = vmatprep.subr.bf16.mxu0 0
      %1281 = vmatpush1.bf16.msra.mxu0 0
      %1282 = vmatprep.subr.bf16.mxu0 0
      %1283 = vmatpush1.bf16.msra.mxu0 0
      %1284 = vmatprep.subr.bf16.mxu0 0
      %1285 = vmatpush1.bf16.msra.mxu0 0
      %1286 = vmatprep.subr.bf16.mxu0 0
      %1287 = vmatpush1.bf16.msra.mxu0 0
      %1288 = vmatprep.subr.bf16.mxu0 0
      %1289 = vmatpush1.bf16.msra.mxu0 0
      %1290 = vmatprep.subr.bf16.mxu0 0
      %1291 = vmatpush1.bf16.msra.mxu0 0
      %1292 = vmatprep.subr.bf16.mxu0 0
      %1293 = vmatpush1.bf16.msra.mxu0 0
      %1294 = vmatprep.subr.bf16.mxu0 0
      %1295 = vmatpush1.bf16.msra.mxu0 0
      %1296 = vmatprep.mubr.bf16.mxu0 0
      %1297 = vmatmul.mubr.bf16.gmra.mrb[0].mxu0 %v749
      %v1298 = vpop.f32.mrb[0].mxu0
      %v1299 = vadd.f32 %v1057, %v1298
      %v1300 = vpop.f32.mrb[0].mxu0
      %v1301 = vadd.f32 %v1059, %v1300
      %v1302 = vpop.f32.mrb[0].mxu0
      %v1303 = vpop.f32.mrb[0].mxu0
      %1304 = vdwg.mxu0
      %s1305 = scalar_lea.vmem [#allocation14], 4
      %v1306 = vld [vmem:[%s1305] sm:$0xf]
      %v1308 = vlaneseq
      %v1309 = vshrl.u32 %v1308, 7
      %v1310 = vsub.s32 0, %v1309
      %v1311 = vrot.slane %v1306, %v1310
      %v1312 = vlaneseq
      %v1313 = vshrl.u32 %v1312, 7
      %v1314 = vsub.s32 1, %v1313
      %v1315 = vrot.slane %v1306, %v1314
      %v1316 = vlaneseq
      %v1317 = vshrl.u32 %v1316, 7
      %v1318 = vsub.s32 2, %v1317
      %v1319 = vrot.slane %v1306, %v1318
      %v1320 = vlaneseq
      %v1321 = vshrl.u32 %v1320, 7
      %v1322 = vsub.s32 3, %v1321
      %v1323 = vrot.slane %v1306, %v1322
      %v1328 = vadd.f32 %v1258, %v1311
      %v1329 = vadd.f32 %v1260, %v1315
      %v1330 = vadd.f32 %v1299, %v1319
      %v1331 = vadd.f32 %v1301, %v1323
      %v1332 = vxor.u32 %v1328, 2147483648
      %v1333 = vmul.f32 %v1332, 1.442695
      %v1334 = vpow.pop %v1333
      %v1335 = vadd.f32 %v1334, 1.0
      %v1336 = vrcp.pop %v1335
      %v1337 = vmul.f32 1.0, %v1336
      %v1338 = vxor.u32 %v1329, 2147483648
      %v1339 = vmul.f32 %v1338, 1.442695
      %v1340 = vpow.pop %v1339
      %v1341 = vadd.f32 %v1340, 1.0
      %v1342 = vrcp.pop %v1341
      %v1343 = vmul.f32 1.0, %v1342
      %v1344 = vtanh.pop %v1330
      %v1345 = vxor.u32 %v1331, 2147483648
      %v1346 = vmul.f32 %v1345, 1.442695
      %v1347 = vpow.pop %v1346
      %v1348 = vadd.f32 %v1347, 1.0
      %v1349 = vrcp.pop %v1348
      %v1350 = vmul.f32 1.0, %v1349
      %v1351 = vmul.f32 %v1343, %v753
      %v1352 = vmul.f32 %v1337, %v1344
      %v1353 = vadd.f32 %v1351, %v1352
      %v1354 = vtanh.pop %v1353
      %v1355 = vmul.f32 %v1350, %v1354
      %s1356 = scalar_lea.vmem [#allocation20], 8
      %1357 = vst [vmem:[%s1356] sm:$0xff] %v1355
      %s1358 = scalar_lea.vmem [#allocation22], 8
      %1359 = vst [vmem:[%s1358] sm:$0xff] %v1353
      %v1360 = vpack.c.bf16 %v1355, %v1355
      %s1361 = scalar_lea.vmem [#allocation8], 16
      %v1362 = vld [vmem:[%s1361] sm:$0xff]
      %s1363 = scalar_lea.vmem [#allocation10], 16
      %v1364 = vld [vmem:[%s1363] sm:$0xff]
      %s1365 = scalar_lea.vmem [#allocation11], 512
      %v1366 = vld [vmem:[%s1365] sm:$0xff]
      %v1367 = vld [vmem:[%s1365 + $0x8] sm:$0xff]
      %v1368 = vld [vmem:[%s1365 + $0x10] sm:$0xff]
      %v1369 = vld [vmem:[%s1365 + $0x18] sm:$0xff]
      %v1370 = vld [vmem:[%s1365 + $0x20] sm:$0xff]
      %v1371 = vld [vmem:[%s1365 + $0x28] sm:$0xff]
      %v1372 = vld [vmem:[%s1365 + $0x30] sm:$0xff]
      %v1373 = vld [vmem:[%s1365 + $0x38] sm:$0xff]
      %v1374 = vld [vmem:[%s1365 + $0x40] sm:$0xff]
      %v1375 = vld [vmem:[%s1365 + $0x48] sm:$0xff]
      %v1376 = vld [vmem:[%s1365 + $0x50] sm:$0xff]
      %v1377 = vld [vmem:[%s1365 + $0x58] sm:$0xff]
      %v1378 = vld [vmem:[%s1365 + $0x60] sm:$0xff]
      %v1379 = vld [vmem:[%s1365 + $0x68] sm:$0xff]
      %v1380 = vld [vmem:[%s1365 + $0x70] sm:$0xff]
      %v1381 = vld [vmem:[%s1365 + $0x78] sm:$0xff]
      %v1382 = vld [vmem:[%s1365 + $0x80] sm:$0xff]
      %v1383 = vld [vmem:[%s1365 + $0x88] sm:$0xff]
      %v1384 = vld [vmem:[%s1365 + $0x90] sm:$0xff]
      %v1385 = vld [vmem:[%s1365 + $0x98] sm:$0xff]
      %v1386 = vld [vmem:[%s1365 + $0xa0] sm:$0xff]
      %v1387 = vld [vmem:[%s1365 + $0xa8] sm:$0xff]
      %v1388 = vld [vmem:[%s1365 + $0xb0] sm:$0xff]
      %v1389 = vld [vmem:[%s1365 + $0xb8] sm:$0xff]
      %v1390 = vld [vmem:[%s1365 + $0xc0] sm:$0xff]
      %v1391 = vld [vmem:[%s1365 + $0xc8] sm:$0xff]
      %v1392 = vld [vmem:[%s1365 + $0xd0] sm:$0xff]
      %v1393 = vld [vmem:[%s1365 + $0xd8] sm:$0xff]
      %v1394 = vld [vmem:[%s1365 + $0xe0] sm:$0xff]
      %v1395 = vld [vmem:[%s1365 + $0xe8] sm:$0xff]
      %v1396 = vld [vmem:[%s1365 + $0xf0] sm:$0xff]
      %v1397 = vld [vmem:[%s1365 + $0xf8] sm:$0xff]
      %v1398 = vpack.c.bf16 %v1362, %v1362
      %s1399 = scalar_lea.vmem [#allocation13], 512
      %v1400 = vld [vmem:[%s1399] sm:$0xff]
      %v1401 = vld [vmem:[%s1399 + $0x8] sm:$0xff]
      %v1402 = vld [vmem:[%s1399 + $0x10] sm:$0xff]
      %v1403 = vld [vmem:[%s1399 + $0x18] sm:$0xff]
      %v1404 = vld [vmem:[%s1399 + $0x20] sm:$0xff]
      %v1405 = vld [vmem:[%s1399 + $0x28] sm:$0xff]
      %v1406 = vld [vmem:[%s1399 + $0x30] sm:$0xff]
      %v1407 = vld [vmem:[%s1399 + $0x38] sm:$0xff]
      %v1408 = vld [vmem:[%s1399 + $0x40] sm:$0xff]
      %v1409 = vld [vmem:[%s1399 + $0x48] sm:$0xff]
      %v1410 = vld [vmem:[%s1399 + $0x50] sm:$0xff]
      %v1411 = vld [vmem:[%s1399 + $0x58] sm:$0xff]
      %v1412 = vld [vmem:[%s1399 + $0x60] sm:$0xff]
      %v1413 = vld [vmem:[%s1399 + $0x68] sm:$0xff]
      %v1414 = vld [vmem:[%s1399 + $0x70] sm:$0xff]
      %v1415 = vld [vmem:[%s1399 + $0x78] sm:$0xff]
      %v1416 = vld [vmem:[%s1399 + $0x80] sm:$0xff]
      %v1417 = vld [vmem:[%s1399 + $0x88] sm:$0xff]
      %v1418 = vld [vmem:[%s1399 + $0x90] sm:$0xff]
      %v1419 = vld [vmem:[%s1399 + $0x98] sm:$0xff]
      %v1420 = vld [vmem:[%s1399 + $0xa0] sm:$0xff]
      %v1421 = vld [vmem:[%s1399 + $0xa8] sm:$0xff]
      %v1422 = vld [vmem:[%s1399 + $0xb0] sm:$0xff]
      %v1423 = vld [vmem:[%s1399 + $0xb8] sm:$0xff]
      %v1424 = vld [vmem:[%s1399 + $0xc0] sm:$0xff]
      %v1425 = vld [vmem:[%s1399 + $0xc8] sm:$0xff]
      %v1426 = vld [vmem:[%s1399 + $0xd0] sm:$0xff]
      %v1427 = vld [vmem:[%s1399 + $0xd8] sm:$0xff]
      %v1428 = vld [vmem:[%s1399 + $0xe0] sm:$0xff]
      %v1429 = vld [vmem:[%s1399 + $0xe8] sm:$0xff]
      %v1430 = vld [vmem:[%s1399 + $0xf0] sm:$0xff]
      %v1431 = vld [vmem:[%s1399 + $0xf8] sm:$0xff]
      %v1464 = vunpack.c.l.b16 %v1400
      %v1465 = vunpack.c.h.b16 %v1400
      %v1466 = vunpack.c.l.b16 %v1401
      %v1467 = vunpack.c.h.b16 %v1401
      %v1468 = vunpack.c.l.b16 %v1402
      %v1469 = vunpack.c.h.b16 %v1402
      %v1470 = vunpack.c.l.b16 %v1403
      %v1471 = vunpack.c.h.b16 %v1403
      %v1472 = vunpack.c.l.b16 %v1404
      %v1473 = vunpack.c.h.b16 %v1404
      %v1474 = vunpack.c.l.b16 %v1405
      %v1475 = vunpack.c.h.b16 %v1405
      %v1476 = vunpack.c.l.b16 %v1406
      %v1477 = vunpack.c.h.b16 %v1406
      %v1478 = vunpack.c.l.b16 %v1407
      %v1479 = vunpack.c.h.b16 %v1407
      %v1480 = vunpack.c.l.b16 %v1408
      %v1481 = vunpack.c.h.b16 %v1408
      %v1482 = vunpack.c.l.b16 %v1409
      %v1483 = vunpack.c.h.b16 %v1409
      %v1484 = vunpack.c.l.b16 %v1410
      %v1485 = vunpack.c.h.b16 %v1410
      %v1486 = vunpack.c.l.b16 %v1411
      %v1487 = vunpack.c.h.b16 %v1411
      %v1488 = vunpack.c.l.b16 %v1412
      %v1489 = vunpack.c.h.b16 %v1412
      %v1490 = vunpack.c.l.b16 %v1413
      %v1491 = vunpack.c.h.b16 %v1413
      %v1492 = vunpack.c.l.b16 %v1414
      %v1493 = vunpack.c.h.b16 %v1414
      %v1494 = vunpack.c.l.b16 %v1415
      %v1495 = vunpack.c.h.b16 %v1415
      %v1496 = vunpack.c.l.b16 %v1416
      %v1497 = vunpack.c.h.b16 %v1416
      %v1498 = vunpack.c.l.b16 %v1417
      %v1499 = vunpack.c.h.b16 %v1417
      %v1500 = vunpack.c.l.b16 %v1418
      %v1501 = vunpack.c.h.b16 %v1418
      %v1502 = vunpack.c.l.b16 %v1419
      %v1503 = vunpack.c.h.b16 %v1419
      %v1504 = vunpack.c.l.b16 %v1420
      %v1505 = vunpack.c.h.b16 %v1420
      %v1506 = vunpack.c.l.b16 %v1421
      %v1507 = vunpack.c.h.b16 %v1421
      %v1508 = vunpack.c.l.b16 %v1422
      %v1509 = vunpack.c.h.b16 %v1422
      %v1510 = vunpack.c.l.b16 %v1423
      %v1511 = vunpack.c.h.b16 %v1423
      %v1512 = vunpack.c.l.b16 %v1424
      %v1513 = vunpack.c.h.b16 %v1424
      %v1514 = vunpack.c.l.b16 %v1425
      %v1515 = vunpack.c.h.b16 %v1425
      %v1516 = vunpack.c.l.b16 %v1426
      %v1517 = vunpack.c.h.b16 %v1426
      %v1518 = vunpack.c.l.b16 %v1427
      %v1519 = vunpack.c.h.b16 %v1427
      %v1520 = vunpack.c.l.b16 %v1428
      %v1521 = vunpack.c.h.b16 %v1428
      %v1522 = vunpack.c.l.b16 %v1429
      %v1523 = vunpack.c.h.b16 %v1429
      %v1524 = vunpack.c.l.b16 %v1430
      %v1525 = vunpack.c.h.b16 %v1430
      %v1526 = vunpack.c.l.b16 %v1431
      %v1527 = vunpack.c.h.b16 %v1431
      %v1528 = vpack.c.b16 %v1468, %v1464
      %v1529 = vpack.c.b16 %v1469, %v1465
      %v1530 = vpack.c.b16 %v1470, %v1466
      %v1531 = vpack.c.b16 %v1471, %v1467
      %v1532 = vpack.c.b16 %v1476, %v1472
      %v1533 = vpack.c.b16 %v1477, %v1473
      %v1534 = vpack.c.b16 %v1478, %v1474
      %v1535 = vpack.c.b16 %v1479, %v1475
      %v1536 = vpack.c.b16 %v1484, %v1480
      %v1537 = vpack.c.b16 %v1485, %v1481
      %v1538 = vpack.c.b16 %v1486, %v1482
      %v1539 = vpack.c.b16 %v1487, %v1483
      %v1540 = vpack.c.b16 %v1492, %v1488
      %v1541 = vpack.c.b16 %v1493, %v1489
      %v1542 = vpack.c.b16 %v1494, %v1490
      %v1543 = vpack.c.b16 %v1495, %v1491
      %v1544 = vpack.c.b16 %v1500, %v1496
      %v1545 = vpack.c.b16 %v1501, %v1497
      %v1546 = vpack.c.b16 %v1502, %v1498
      %v1547 = vpack.c.b16 %v1503, %v1499
      %v1548 = vpack.c.b16 %v1508, %v1504
      %v1549 = vpack.c.b16 %v1509, %v1505
      %v1550 = vpack.c.b16 %v1510, %v1506
      %v1551 = vpack.c.b16 %v1511, %v1507
      %v1552 = vpack.c.b16 %v1516, %v1512
      %v1553 = vpack.c.b16 %v1517, %v1513
      %v1554 = vpack.c.b16 %v1518, %v1514
      %v1555 = vpack.c.b16 %v1519, %v1515
      %v1556 = vpack.c.b16 %v1524, %v1520
      %v1557 = vpack.c.b16 %v1525, %v1521
      %v1558 = vpack.c.b16 %v1526, %v1522
      %v1559 = vpack.c.b16 %v1527, %v1523
      %1592 = vmatprep.subr.bf16.mxu0 %v1529
      %1593 = vmatpush1.bf16.msra.mxu0 %v1528
      %1594 = vmatprep.subr.bf16.mxu0 %v1533
      %1595 = vmatpush1.bf16.msra.mxu0 %v1532
      %1596 = vmatprep.subr.bf16.mxu0 %v1537
      %1597 = vmatpush1.bf16.msra.mxu0 %v1536
      %1598 = vmatprep.subr.bf16.mxu0 %v1541
      %1599 = vmatpush1.bf16.msra.mxu0 %v1540
      %1600 = vmatprep.subr.bf16.mxu0 %v1545
      %1601 = vmatpush1.bf16.msra.mxu0 %v1544
      %1602 = vmatprep.subr.bf16.mxu0 %v1549
      %1603 = vmatpush1.bf16.msra.mxu0 %v1548
      %1604 = vmatprep.subr.bf16.mxu0 %v1553
      %1605 = vmatpush1.bf16.msra.mxu0 %v1552
      %1606 = vmatprep.subr.bf16.mxu0 %v1557
      %1607 = vmatpush1.bf16.msra.mxu0 %v1556
      %1608 = vmatprep.subr.bf16.mxu0 0
      %1609 = vmatpush1.bf16.msra.mxu0 0
      %1610 = vmatprep.subr.bf16.mxu0 0
      %1611 = vmatpush1.bf16.msra.mxu0 0
      %1612 = vmatprep.subr.bf16.mxu0 0
      %1613 = vmatpush1.bf16.msra.mxu0 0
      %1614 = vmatprep.subr.bf16.mxu0 0
      %1615 = vmatpush1.bf16.msra.mxu0 0
      %1616 = vmatprep.subr.bf16.mxu0 0
      %1617 = vmatpush1.bf16.msra.mxu0 0
      %1618 = vmatprep.subr.bf16.mxu0 0
      %1619 = vmatpush1.bf16.msra.mxu0 0
      %1620 = vmatprep.subr.bf16.mxu0 0
      %1621 = vmatpush1.bf16.msra.mxu0 0
      %1622 = vmatprep.subr.bf16.mxu0 0
      %1623 = vmatpush1.bf16.msra.mxu0 0
      %1624 = vmatprep.mubr.bf16.mxu0 0
      %1625 = vmatmul.mubr.bf16.gmra.mrb[0].mxu0 %v1398
      %v1626 = vpop.f32.mrb[0].mxu0
      %v1627 = vadd.f32 0.0, %v1626
      %v1628 = vpop.f32.mrb[0].mxu0
      %v1629 = vadd.f32 0.0, %v1628
      %v1630 = vpop.f32.mrb[0].mxu0
      %v1631 = vpop.f32.mrb[0].mxu0
      %1632 = vdwg.mxu0
      %1633 = vmatprep.subr.bf16.mxu0 %v1531
      %1634 = vmatpush1.bf16.msra.mxu0 %v1530
      %1635 = vmatprep.subr.bf16.mxu0 %v1535
      %1636 = vmatpush1.bf16.msra.mxu0 %v1534
      %1637 = vmatprep.subr.bf16.mxu0 %v1539
      %1638 = vmatpush1.bf16.msra.mxu0 %v1538
      %1639 = vmatprep.subr.bf16.mxu0 %v1543
      %1640 = vmatpush1.bf16.msra.mxu0 %v1542
      %1641 = vmatprep.subr.bf16.mxu0 %v1547
      %1642 = vmatpush1.bf16.msra.mxu0 %v1546
      %1643 = vmatprep.subr.bf16.mxu0 %v1551
      %1644 = vmatpush1.bf16.msra.mxu0 %v1550
      %1645 = vmatprep.subr.bf16.mxu0 %v1555
      %1646 = vmatpush1.bf16.msra.mxu0 %v1554
      %1647 = vmatprep.subr.bf16.mxu0 %v1559
      %1648 = vmatpush1.bf16.msra.mxu0 %v1558
      %1649 = vmatprep.subr.bf16.mxu0 0
      %1650 = vmatpush1.bf16.msra.mxu0 0
      %1651 = vmatprep.subr.bf16.mxu0 0
      %1652 = vmatpush1.bf16.msra.mxu0 0
      %1653 = vmatprep.subr.bf16.mxu0 0
      %1654 = vmatpush1.bf16.msra.mxu0 0
      %1655 = vmatprep.subr.bf16.mxu0 0
      %1656 = vmatpush1.bf16.msra.mxu0 0
      %1657 = vmatprep.subr.bf16.mxu0 0
      %1658 = vmatpush1.bf16.msra.mxu0 0
      %1659 = vmatprep.subr.bf16.mxu0 0
      %1660 = vmatpush1.bf16.msra.mxu0 0
      %1661 = vmatprep.subr.bf16.mxu0 0
      %1662 = vmatpush1.bf16.msra.mxu0 0
      %1663 = vmatprep.subr.bf16.mxu0 0
      %1664 = vmatpush1.bf16.msra.mxu0 0
      %1665 = vmatprep.mubr.bf16.mxu0 0
      %1666 = vmatmul.mubr.bf16.gmra.mrb[0].mxu0 %v1398
      %v1667 = vpop.f32.mrb[0].mxu0
      %v1668 = vadd.f32 0.0, %v1667
      %v1669 = vpop.f32.mrb[0].mxu0
      %v1670 = vadd.f32 0.0, %v1669
      %v1671 = vpop.f32.mrb[0].mxu0
      %v1672 = vpop.f32.mrb[0].mxu0
      %1673 = vdwg.mxu0
      %v1706 = vunpack.c.l.b16 %v1366
      %v1707 = vunpack.c.h.b16 %v1366
      %v1708 = vunpack.c.l.b16 %v1367
      %v1709 = vunpack.c.h.b16 %v1367
      %v1710 = vunpack.c.l.b16 %v1368
      %v1711 = vunpack.c.h.b16 %v1368
      %v1712 = vunpack.c.l.b16 %v1369
      %v1713 = vunpack.c.h.b16 %v1369
      %v1714 = vunpack.c.l.b16 %v1370
      %v1715 = vunpack.c.h.b16 %v1370
      %v1716 = vunpack.c.l.b16 %v1371
      %v1717 = vunpack.c.h.b16 %v1371
      %v1718 = vunpack.c.l.b16 %v1372
      %v1719 = vunpack.c.h.b16 %v1372
      %v1720 = vunpack.c.l.b16 %v1373
      %v1721 = vunpack.c.h.b16 %v1373
      %v1722 = vunpack.c.l.b16 %v1374
      %v1723 = vunpack.c.h.b16 %v1374
      %v1724 = vunpack.c.l.b16 %v1375
      %v1725 = vunpack.c.h.b16 %v1375
      %v1726 = vunpack.c.l.b16 %v1376
      %v1727 = vunpack.c.h.b16 %v1376
      %v1728 = vunpack.c.l.b16 %v1377
      %v1729 = vunpack.c.h.b16 %v1377
      %v1730 = vunpack.c.l.b16 %v1378
      %v1731 = vunpack.c.h.b16 %v1378
      %v1732 = vunpack.c.l.b16 %v1379
      %v1733 = vunpack.c.h.b16 %v1379
      %v1734 = vunpack.c.l.b16 %v1380
      %v1735 = vunpack.c.h.b16 %v1380
      %v1736 = vunpack.c.l.b16 %v1381
      %v1737 = vunpack.c.h.b16 %v1381
      %v1738 = vunpack.c.l.b16 %v1382
      %v1739 = vunpack.c.h.b16 %v1382
      %v1740 = vunpack.c.l.b16 %v1383
      %v1741 = vunpack.c.h.b16 %v1383
      %v1742 = vunpack.c.l.b16 %v1384
      %v1743 = vunpack.c.h.b16 %v1384
      %v1744 = vunpack.c.l.b16 %v1385
      %v1745 = vunpack.c.h.b16 %v1385
      %v1746 = vunpack.c.l.b16 %v1386
      %v1747 = vunpack.c.h.b16 %v1386
      %v1748 = vunpack.c.l.b16 %v1387
      %v1749 = vunpack.c.h.b16 %v1387
      %v1750 = vunpack.c.l.b16 %v1388
      %v1751 = vunpack.c.h.b16 %v1388
      %v1752 = vunpack.c.l.b16 %v1389
      %v1753 = vunpack.c.h.b16 %v1389
      %v1754 = vunpack.c.l.b16 %v1390
      %v1755 = vunpack.c.h.b16 %v1390
      %v1756 = vunpack.c.l.b16 %v1391
      %v1757 = vunpack.c.h.b16 %v1391
      %v1758 = vunpack.c.l.b16 %v1392
      %v1759 = vunpack.c.h.b16 %v1392
      %v1760 = vunpack.c.l.b16 %v1393
      %v1761 = vunpack.c.h.b16 %v1393
      %v1762 = vunpack.c.l.b16 %v1394
      %v1763 = vunpack.c.h.b16 %v1394
      %v1764 = vunpack.c.l.b16 %v1395
      %v1765 = vunpack.c.h.b16 %v1395
      %v1766 = vunpack.c.l.b16 %v1396
      %v1767 = vunpack.c.h.b16 %v1396
      %v1768 = vunpack.c.l.b16 %v1397
      %v1769 = vunpack.c.h.b16 %v1397
      %v1770 = vpack.c.b16 %v1710, %v1706
      %v1771 = vpack.c.b16 %v1711, %v1707
      %v1772 = vpack.c.b16 %v1712, %v1708
      %v1773 = vpack.c.b16 %v1713, %v1709
      %v1774 = vpack.c.b16 %v1718, %v1714
      %v1775 = vpack.c.b16 %v1719, %v1715
      %v1776 = vpack.c.b16 %v1720, %v1716
      %v1777 = vpack.c.b16 %v1721, %v1717
      %v1778 = vpack.c.b16 %v1726, %v1722
      %v1779 = vpack.c.b16 %v1727, %v1723
      %v1780 = vpack.c.b16 %v1728, %v1724
      %v1781 = vpack.c.b16 %v1729, %v1725
      %v1782 = vpack.c.b16 %v1734, %v1730
      %v1783 = vpack.c.b16 %v1735, %v1731
      %v1784 = vpack.c.b16 %v1736, %v1732
      %v1785 = vpack.c.b16 %v1737, %v1733
      %v1786 = vpack.c.b16 %v1742, %v1738
      %v1787 = vpack.c.b16 %v1743, %v1739
      %v1788 = vpack.c.b16 %v1744, %v1740
      %v1789 = vpack.c.b16 %v1745, %v1741
      %v1790 = vpack.c.b16 %v1750, %v1746
      %v1791 = vpack.c.b16 %v1751, %v1747
      %v1792 = vpack.c.b16 %v1752, %v1748
      %v1793 = vpack.c.b16 %v1753, %v1749
      %v1794 = vpack.c.b16 %v1758, %v1754
      %v1795 = vpack.c.b16 %v1759, %v1755
      %v1796 = vpack.c.b16 %v1760, %v1756
      %v1797 = vpack.c.b16 %v1761, %v1757
      %v1798 = vpack.c.b16 %v1766, %v1762
      %v1799 = vpack.c.b16 %v1767, %v1763
      %v1800 = vpack.c.b16 %v1768, %v1764
      %v1801 = vpack.c.b16 %v1769, %v1765
      %1834 = vmatprep.subr.bf16.mxu0 %v1771
      %1835 = vmatpush1.bf16.msra.mxu0 %v1770
      %1836 = vmatprep.subr.bf16.mxu0 %v1775
      %1837 = vmatpush1.bf16.msra.mxu0 %v1774
      %1838 = vmatprep.subr.bf16.mxu0 %v1779
      %1839 = vmatpush1.bf16.msra.mxu0 %v1778
      %1840 = vmatprep.subr.bf16.mxu0 %v1783
      %1841 = vmatpush1.bf16.msra.mxu0 %v1782
      %1842 = vmatprep.subr.bf16.mxu0 %v1787
      %1843 = vmatpush1.bf16.msra.mxu0 %v1786
      %1844 = vmatprep.subr.bf16.mxu0 %v1791
      %1845 = vmatpush1.bf16.msra.mxu0 %v1790
      %1846 = vmatprep.subr.bf16.mxu0 %v1795
      %1847 = vmatpush1.bf16.msra.mxu0 %v1794
      %1848 = vmatprep.subr.bf16.mxu0 %v1799
      %1849 = vmatpush1.bf16.msra.mxu0 %v1798
      %1850 = vmatprep.subr.bf16.mxu0 0
      %1851 = vmatpush1.bf16.msra.mxu0 0
      %1852 = vmatprep.subr.bf16.mxu0 0
      %1853 = vmatpush1.bf16.msra.mxu0 0
      %1854 = vmatprep.subr.bf16.mxu0 0
      %1855 = vmatpush1.bf16.msra.mxu0 0
      %1856 = vmatprep.subr.bf16.mxu0 0
      %1857 = vmatpush1.bf16.msra.mxu0 0
      %1858 = vmatprep.subr.bf16.mxu0 0
      %1859 = vmatpush1.bf16.msra.mxu0 0
      %1860 = vmatprep.subr.bf16.mxu0 0
      %1861 = vmatpush1.bf16.msra.mxu0 0
      %1862 = vmatprep.subr.bf16.mxu0 0
      %1863 = vmatpush1.bf16.msra.mxu0 0
      %1864 = vmatprep.subr.bf16.mxu0 0
      %1865 = vmatpush1.bf16.msra.mxu0 0
      %1866 = vmatprep.mubr.bf16.mxu0 0
      %1867 = vmatmul.mubr.bf16.gmra.mrb[0].mxu0 %v1360
      %v1868 = vpop.f32.mrb[0].mxu0
      %v1869 = vadd.f32 %v1627, %v1868
      %v1870 = vpop.f32.mrb[0].mxu0
      %v1871 = vadd.f32 %v1629, %v1870
      %v1872 = vpop.f32.mrb[0].mxu0
      %v1873 = vpop.f32.mrb[0].mxu0
      %1874 = vdwg.mxu0
      %1875 = vmatprep.subr.bf16.mxu0 %v1773
      %1876 = vmatpush1.bf16.msra.mxu0 %v1772
      %1877 = vmatprep.subr.bf16.mxu0 %v1777
      %1878 = vmatpush1.bf16.msra.mxu0 %v1776
      %1879 = vmatprep.subr.bf16.mxu0 %v1781
      %1880 = vmatpush1.bf16.msra.mxu0 %v1780
      %1881 = vmatprep.subr.bf16.mxu0 %v1785
      %1882 = vmatpush1.bf16.msra.mxu0 %v1784
      %1883 = vmatprep.subr.bf16.mxu0 %v1789
      %1884 = vmatpush1.bf16.msra.mxu0 %v1788
      %1885 = vmatprep.subr.bf16.mxu0 %v1793
      %1886 = vmatpush1.bf16.msra.mxu0 %v1792
      %1887 = vmatprep.subr.bf16.mxu0 %v1797
      %1888 = vmatpush1.bf16.msra.mxu0 %v1796
      %1889 = vmatprep.subr.bf16.mxu0 %v1801
      %1890 = vmatpush1.bf16.msra.mxu0 %v1800
      %1891 = vmatprep.subr.bf16.mxu0 0
      %1892 = vmatpush1.bf16.msra.mxu0 0
      %1893 = vmatprep.subr.bf16.mxu0 0
      %1894 = vmatpush1.bf16.msra.mxu0 0
      %1895 = vmatprep.subr.bf16.mxu0 0
      %1896 = vmatpush1.bf16.msra.mxu0 0
      %1897 = vmatprep.subr.bf16.mxu0 0
      %1898 = vmatpush1.bf16.msra.mxu0 0
      %1899 = vmatprep.subr.bf16.mxu0 0
      %1900 = vmatpush1.bf16.msra.mxu0 0
      %1901 = vmatprep.subr.bf16.mxu0 0
      %1902 = vmatpush1.bf16.msra.mxu0 0
      %1903 = vmatprep.subr.bf16.mxu0 0
      %1904 = vmatpush1.bf16.msra.mxu0 0
      %1905 = vmatprep.subr.bf16.mxu0 0
      %1906 = vmatpush1.bf16.msra.mxu0 0
      %1907 = vmatprep.mubr.bf16.mxu0 0
      %1908 = vmatmul.mubr.bf16.gmra.mrb[0].mxu0 %v1360
      %v1909 = vpop.f32.mrb[0].mxu0
      %v1910 = vadd.f32 %v1668, %v1909
      %v1911 = vpop.f32.mrb[0].mxu0
      %v1912 = vadd.f32 %v1670, %v1911
      %v1913 = vpop.f32.mrb[0].mxu0
      %v1914 = vpop.f32.mrb[0].mxu0
      %1915 = vdwg.mxu0
      %s1916 = scalar_lea.vmem [#allocation14], 8
      %v1917 = vld [vmem:[%s1916] sm:$0xf]
      %v1919 = vlaneseq
      %v1920 = vshrl.u32 %v1919, 7
      %v1921 = vsub.s32 0, %v1920
      %v1922 = vrot.slane %v1917, %v1921
      %v1923 = vlaneseq
      %v1924 = vshrl.u32 %v1923, 7
      %v1925 = vsub.s32 1, %v1924
      %v1926 = vrot.slane %v1917, %v1925
      %v1927 = vlaneseq
      %v1928 = vshrl.u32 %v1927, 7
      %v1929 = vsub.s32 2, %v1928
      %v1930 = vrot.slane %v1917, %v1929
      %v1931 = vlaneseq
      %v1932 = vshrl.u32 %v1931, 7
      %v1933 = vsub.s32 3, %v1932
      %v1934 = vrot.slane %v1917, %v1933
      %v1939 = vadd.f32 %v1869, %v1922
      %v1940 = vadd.f32 %v1871, %v1926
      %v1941 = vadd.f32 %v1910, %v1930
      %v1942 = vadd.f32 %v1912, %v1934
      %v1943 = vxor.u32 %v1939, 2147483648
      %v1944 = vmul.f32 %v1943, 1.442695
      %v1945 = vpow.pop %v1944
      %v1946 = vadd.f32 %v1945, 1.0
      %v1947 = vrcp.pop %v1946
      %v1948 = vmul.f32 1.0, %v1947
      %v1949 = vxor.u32 %v1940, 2147483648
      %v1950 = vmul.f32 %v1949, 1.442695
      %v1951 = vpow.pop %v1950
      %v1952 = vadd.f32 %v1951, 1.0
      %v1953 = vrcp.pop %v1952
      %v1954 = vmul.f32 1.0, %v1953
      %v1955 = vtanh.pop %v1941
      %v1956 = vxor.u32 %v1942, 2147483648
      %v1957 = vmul.f32 %v1956, 1.442695
      %v1958 = vpow.pop %v1957
      %v1959 = vadd.f32 %v1958, 1.0
      %v1960 = vrcp.pop %v1959
      %v1961 = vmul.f32 1.0, %v1960
      %v1962 = vmul.f32 %v1954, %v1364
      %v1963 = vmul.f32 %v1948, %v1955
      %v1964 = vadd.f32 %v1962, %v1963
      %v1965 = vtanh.pop %v1964
      %v1966 = vmul.f32 %v1961, %v1965
      %s1967 = scalar_lea.vmem [#allocation20], 16
      %1968 = vst [vmem:[%s1967] sm:$0xff] %v1966
      %s1969 = scalar_lea.vmem [#allocation22], 16
      %1970 = vst [vmem:[%s1969] sm:$0xff] %v1964
      %v1971 = vpack.c.bf16 %v1966, %v1966
      %s1972 = scalar_lea.vmem [#allocation8], 24
      %v1973 = vld [vmem:[%s1972] sm:$0xff]
      %s1974 = scalar_lea.vmem [#allocation10], 24
      %v1975 = vld [vmem:[%s1974] sm:$0xff]
      %s1976 = scalar_lea.vmem [#allocation11], 768
      %v1977 = vld [vmem:[%s1976] sm:$0xff]
      %v1978 = vld [vmem:[%s1976 + $0x8] sm:$0xff]
      %v1979 = vld [vmem:[%s1976 + $0x10] sm:$0xff]
      %v1980 = vld [vmem:[%s1976 + $0x18] sm:$0xff]
      %v1981 = vld [vmem:[%s1976 + $0x20] sm:$0xff]
      %v1982 = vld [vmem:[%s1976 + $0x28] sm:$0xff]
      %v1983 = vld [vmem:[%s1976 + $0x30] sm:$0xff]
      %v1984 = vld [vmem:[%s1976 + $0x38] sm:$0xff]
      %v1985 = vld [vmem:[%s1976 + $0x40] sm:$0xff]
      %v1986 = vld [vmem:[%s1976 + $0x48] sm:$0xff]
      %v1987 = vld [vmem:[%s1976 + $0x50] sm:$0xff]
      %v1988 = vld [vmem:[%s1976 + $0x58] sm:$0xff]
      %v1989 = vld [vmem:[%s1976 + $0x60] sm:$0xff]
      %v1990 = vld [vmem:[%s1976 + $0x68] sm:$0xff]
      %v1991 = vld [vmem:[%s1976 + $0x70] sm:$0xff]
      %v1992 = vld [vmem:[%s1976 + $0x78] sm:$0xff]
      %v1993 = vld [vmem:[%s1976 + $0x80] sm:$0xff]
      %v1994 = vld [vmem:[%s1976 + $0x88] sm:$0xff]
      %v1995 = vld [vmem:[%s1976 + $0x90] sm:$0xff]
      %v1996 = vld [vmem:[%s1976 + $0x98] sm:$0xff]
      %v1997 = vld [vmem:[%s1976 + $0xa0] sm:$0xff]
      %v1998 = vld [vmem:[%s1976 + $0xa8] sm:$0xff]
      %v1999 = vld [vmem:[%s1976 + $0xb0] sm:$0xff]
      %v2000 = vld [vmem:[%s1976 + $0xb8] sm:$0xff]
      %v2001 = vld [vmem:[%s1976 + $0xc0] sm:$0xff]
      %v2002 = vld [vmem:[%s1976 + $0xc8] sm:$0xff]
      %v2003 = vld [vmem:[%s1976 + $0xd0] sm:$0xff]
      %v2004 = vld [vmem:[%s1976 + $0xd8] sm:$0xff]
      %v2005 = vld [vmem:[%s1976 + $0xe0] sm:$0xff]
      %v2006 = vld [vmem:[%s1976 + $0xe8] sm:$0xff]
      %v2007 = vld [vmem:[%s1976 + $0xf0] sm:$0xff]
      %v2008 = vld [vmem:[%s1976 + $0xf8] sm:$0xff]
      %v2009 = vpack.c.bf16 %v1973, %v1973
      %s2010 = scalar_lea.vmem [#allocation13], 768
      %v2011 = vld [vmem:[%s2010] sm:$0xff]
      %v2012 = vld [vmem:[%s2010 + $0x8] sm:$0xff]
      %v2013 = vld [vmem:[%s2010 + $0x10] sm:$0xff]
      %v2014 = vld [vmem:[%s2010 + $0x18] sm:$0xff]
      %v2015 = vld [vmem:[%s2010 + $0x20] sm:$0xff]
      %v2016 = vld [vmem:[%s2010 + $0x28] sm:$0xff]
      %v2017 = vld [vmem:[%s2010 + $0x30] sm:$0xff]
      %v2018 = vld [vmem:[%s2010 + $0x38] sm:$0xff]
      %v2019 = vld [vmem:[%s2010 + $0x40] sm:$0xff]
      %v2020 = vld [vmem:[%s2010 + $0x48] sm:$0xff]
      %v2021 = vld [vmem:[%s2010 + $0x50] sm:$0xff]
      %v2022 = vld [vmem:[%s2010 + $0x58] sm:$0xff]
      %v2023 = vld [vmem:[%s2010 + $0x60] sm:$0xff]
      %v2024 = vld [vmem:[%s2010 + $0x68] sm:$0xff]
      %v2025 = vld [vmem:[%s2010 + $0x70] sm:$0xff]
      %v2026 = vld [vmem:[%s2010 + $0x78] sm:$0xff]
      %v2027 = vld [vmem:[%s2010 + $0x80] sm:$0xff]
      %v2028 = vld [vmem:[%s2010 + $0x88] sm:$0xff]
      %v2029 = vld [vmem:[%s2010 + $0x90] sm:$0xff]
      %v2030 = vld [vmem:[%s2010 + $0x98] sm:$0xff]
      %v2031 = vld [vmem:[%s2010 + $0xa0] sm:$0xff]
      %v2032 = vld [vmem:[%s2010 + $0xa8] sm:$0xff]
      %v2033 = vld [vmem:[%s2010 + $0xb0] sm:$0xff]
      %v2034 = vld [vmem:[%s2010 + $0xb8] sm:$0xff]
      %v2035 = vld [vmem:[%s2010 + $0xc0] sm:$0xff]
      %v2036 = vld [vmem:[%s2010 + $0xc8] sm:$0xff]
      %v2037 = vld [vmem:[%s2010 + $0xd0] sm:$0xff]
      %v2038 = vld [vmem:[%s2010 + $0xd8] sm:$0xff]
      %v2039 = vld [vmem:[%s2010 + $0xe0] sm:$0xff]
      %v2040 = vld [vmem:[%s2010 + $0xe8] sm:$0xff]
      %v2041 = vld [vmem:[%s2010 + $0xf0] sm:$0xff]
      %v2042 = vld [vmem:[%s2010 + $0xf8] sm:$0xff]
      %v2075 = vunpack.c.l.b16 %v2011
      %v2076 = vunpack.c.h.b16 %v2011
      %v2077 = vunpack.c.l.b16 %v2012
      %v2078 = vunpack.c.h.b16 %v2012
      %v2079 = vunpack.c.l.b16 %v2013
      %v2080 = vunpack.c.h.b16 %v2013
      %v2081 = vunpack.c.l.b16 %v2014
      %v2082 = vunpack.c.h.b16 %v2014
      %v2083 = vunpack.c.l.b16 %v2015
      %v2084 = vunpack.c.h.b16 %v2015
      %v2085 = vunpack.c.l.b16 %v2016
      %v2086 = vunpack.c.h.b16 %v2016
      %v2087 = vunpack.c.l.b16 %v2017
      %v2088 = vunpack.c.h.b16 %v2017
      %v2089 = vunpack.c.l.b16 %v2018
      %v2090 = vunpack.c.h.b16 %v2018
      %v2091 = vunpack.c.l.b16 %v2019
      %v2092 = vunpack.c.h.b16 %v2019
      %v2093 = vunpack.c.l.b16 %v2020
      %v2094 = vunpack.c.h.b16 %v2020
      %v2095 = vunpack.c.l.b16 %v2021
      %v2096 = vunpack.c.h.b16 %v2021
      %v2097 = vunpack.c.l.b16 %v2022
      %v2098 = vunpack.c.h.b16 %v2022
      %v2099 = vunpack.c.l.b16 %v2023
      %v2100 = vunpack.c.h.b16 %v2023
      %v2101 = vunpack.c.l.b16 %v2024
      %v2102 = vunpack.c.h.b16 %v2024
      %v2103 = vunpack.c.l.b16 %v2025
      %v2104 = vunpack.c.h.b16 %v2025
      %v2105 = vunpack.c.l.b16 %v2026
      %v2106 = vunpack.c.h.b16 %v2026
      %v2107 = vunpack.c.l.b16 %v2027
      %v2108 = vunpack.c.h.b16 %v2027
      %v2109 = vunpack.c.l.b16 %v2028
      %v2110 = vunpack.c.h.b16 %v2028
      %v2111 = vunpack.c.l.b16 %v2029
      %v2112 = vunpack.c.h.b16 %v2029
      %v2113 = vunpack.c.l.b16 %v2030
      %v2114 = vunpack.c.h.b16 %v2030
      %v2115 = vunpack.c.l.b16 %v2031
      %v2116 = vunpack.c.h.b16 %v2031
      %v2117 = vunpack.c.l.b16 %v2032
      %v2118 = vunpack.c.h.b16 %v2032
      %v2119 = vunpack.c.l.b16 %v2033
      %v2120 = vunpack.c.h.b16 %v2033
      %v2121 = vunpack.c.l.b16 %v2034
      %v2122 = vunpack.c.h.b16 %v2034
      %v2123 = vunpack.c.l.b16 %v2035
      %v2124 = vunpack.c.h.b16 %v2035
      %v2125 = vunpack.c.l.b16 %v2036
      %v2126 = vunpack.c.h.b16 %v2036
      %v2127 = vunpack.c.l.b16 %v2037
      %v2128 = vunpack.c.h.b16 %v2037
      %v2129 = vunpack.c.l.b16 %v2038
      %v2130 = vunpack.c.h.b16 %v2038
      %v2131 = vunpack.c.l.b16 %v2039
      %v2132 = vunpack.c.h.b16 %v2039
      %v2133 = vunpack.c.l.b16 %v2040
      %v2134 = vunpack.c.h.b16 %v2040
      %v2135 = vunpack.c.l.b16 %v2041
      %v2136 = vunpack.c.h.b16 %v2041
      %v2137 = vunpack.c.l.b16 %v2042
      %v2138 = vunpack.c.h.b16 %v2042
      %v2139 = vpack.c.b16 %v2079, %v2075
      %v2140 = vpack.c.b16 %v2080, %v2076
      %v2141 = vpack.c.b16 %v2081, %v2077
      %v2142 = vpack.c.b16 %v2082, %v2078
      %v2143 = vpack.c.b16 %v2087, %v2083
      %v2144 = vpack.c.b16 %v2088, %v2084
      %v2145 = vpack.c.b16 %v2089, %v2085
      %v2146 = vpack.c.b16 %v2090, %v2086
      %v2147 = vpack.c.b16 %v2095, %v2091
      %v2148 = vpack.c.b16 %v2096, %v2092
      %v2149 = vpack.c.b16 %v2097, %v2093
      %v2150 = vpack.c.b16 %v2098, %v2094
      %v2151 = vpack.c.b16 %v2103, %v2099
      %v2152 = vpack.c.b16 %v2104, %v2100
      %v2153 = vpack.c.b16 %v2105, %v2101
      %v2154 = vpack.c.b16 %v2106, %v2102
      %v2155 = vpack.c.b16 %v2111, %v2107
      %v2156 = vpack.c.b16 %v2112, %v2108
      %v2157 = vpack.c.b16 %v2113, %v2109
      %v2158 = vpack.c.b16 %v2114, %v2110
      %v2159 = vpack.c.b16 %v2119, %v2115
      %v2160 = vpack.c.b16 %v2120, %v2116
      %v2161 = vpack.c.b16 %v2121, %v2117
      %v2162 = vpack.c.b16 %v2122, %v2118
      %v2163 = vpack.c.b16 %v2127, %v2123
      %v2164 = vpack.c.b16 %v2128, %v2124
      %v2165 = vpack.c.b16 %v2129, %v2125
      %v2166 = vpack.c.b16 %v2130, %v2126
      %v2167 = vpack.c.b16 %v2135, %v2131
      %v2168 = vpack.c.b16 %v2136, %v2132
      %v2169 = vpack.c.b16 %v2137, %v2133
      %v2170 = vpack.c.b16 %v2138, %v2134
      %2203 = vmatprep.subr.bf16.mxu0 %v2140
      %2204 = vmatpush1.bf16.msra.mxu0 %v2139
      %2205 = vmatprep.subr.bf16.mxu0 %v2144
      %2206 = vmatpush1.bf16.msra.mxu0 %v2143
      %2207 = vmatprep.subr.bf16.mxu0 %v2148
      %2208 = vmatpush1.bf16.msra.mxu0 %v2147
      %2209 = vmatprep.subr.bf16.mxu0 %v2152
      %2210 = vmatpush1.bf16.msra.mxu0 %v2151
      %2211 = vmatprep.subr.bf16.mxu0 %v2156
      %2212 = vmatpush1.bf16.msra.mxu0 %v2155
      %2213 = vmatprep.subr.bf16.mxu0 %v2160
      %2214 = vmatpush1.bf16.msra.mxu0 %v2159
      %2215 = vmatprep.subr.bf16.mxu0 %v2164
      %2216 = vmatpush1.bf16.msra.mxu0 %v2163
      %2217 = vmatprep.subr.bf16.mxu0 %v2168
      %2218 = vmatpush1.bf16.msra.mxu0 %v2167
      %2219 = vmatprep.subr.bf16.mxu0 0
      %2220 = vmatpush1.bf16.msra.mxu0 0
      %2221 = vmatprep.subr.bf16.mxu0 0
      %2222 = vmatpush1.bf16.msra.mxu0 0
      %2223 = vmatprep.subr.bf16.mxu0 0
      %2224 = vmatpush1.bf16.msra.mxu0 0
      %2225 = vmatprep.subr.bf16.mxu0 0
      %2226 = vmatpush1.bf16.msra.mxu0 0
      %2227 = vmatprep.subr.bf16.mxu0 0
      %2228 = vmatpush1.bf16.msra.mxu0 0
      %2229 = vmatprep.subr.bf16.mxu0 0
      %2230 = vmatpush1.bf16.msra.mxu0 0
      %2231 = vmatprep.subr.bf16.mxu0 0
      %2232 = vmatpush1.bf16.msra.mxu0 0
      %2233 = vmatprep.subr.bf16.mxu0 0
      %2234 = vmatpush1.bf16.msra.mxu0 0
      %2235 = vmatprep.mubr.bf16.mxu0 0
      %2236 = vmatmul.mubr.bf16.gmra.mrb[0].mxu0 %v2009
      %v2237 = vpop.f32.mrb[0].mxu0
      %v2238 = vadd.f32 0.0, %v2237
      %v2239 = vpop.f32.mrb[0].mxu0
      %v2240 = vadd.f32 0.0, %v2239
      %v2241 = vpop.f32.mrb[0].mxu0
      %v2242 = vpop.f32.mrb[0].mxu0
      %2243 = vdwg.mxu0
      %2244 = vmatprep.subr.bf16.mxu0 %v2142
      %2245 = vmatpush1.bf16.msra.mxu0 %v2141
      %2246 = vmatprep.subr.bf16.mxu0 %v2146
      %2247 = vmatpush1.bf16.msra.mxu0 %v2145
      %2248 = vmatprep.subr.bf16.mxu0 %v2150
      %2249 = vmatpush1.bf16.msra.mxu0 %v2149
      %2250 = vmatprep.subr.bf16.mxu0 %v2154
      %2251 = vmatpush1.bf16.msra.mxu0 %v2153
      %2252 = vmatprep.subr.bf16.mxu0 %v2158
      %2253 = vmatpush1.bf16.msra.mxu0 %v2157
      %2254 = vmatprep.subr.bf16.mxu0 %v2162
      %2255 = vmatpush1.bf16.msra.mxu0 %v2161
      %2256 = vmatprep.subr.bf16.mxu0 %v2166
      %2257 = vmatpush1.bf16.msra.mxu0 %v2165
      %2258 = vmatprep.subr.bf16.mxu0 %v2170
      %2259 = vmatpush1.bf16.msra.mxu0 %v2169
      %2260 = vmatprep.subr.bf16.mxu0 0
      %2261 = vmatpush1.bf16.msra.mxu0 0
      %2262 = vmatprep.subr.bf16.mxu0 0
      %2263 = vmatpush1.bf16.msra.mxu0 0
      %2264 = vmatprep.subr.bf16.mxu0 0
      %2265 = vmatpush1.bf16.msra.mxu0 0
      %2266 = vmatprep.subr.bf16.mxu0 0
      %2267 = vmatpush1.bf16.msra.mxu0 0
      %2268 = vmatprep.subr.bf16.mxu0 0
      %2269 = vmatpush1.bf16.msra.mxu0 0
      %2270 = vmatprep.subr.bf16.mxu0 0
      %2271 = vmatpush1.bf16.msra.mxu0 0
      %2272 = vmatprep.subr.bf16.mxu0 0
      %2273 = vmatpush1.bf16.msra.mxu0 0
      %2274 = vmatprep.subr.bf16.mxu0 0
      %2275 = vmatpush1.bf16.msra.mxu0 0
      %2276 = vmatprep.mubr.bf16.mxu0 0
      %2277 = vmatmul.mubr.bf16.gmra.mrb[0].mxu0 %v2009
      %v2278 = vpop.f32.mrb[0].mxu0
      %v2279 = vadd.f32 0.0, %v2278
      %v2280 = vpop.f32.mrb[0].mxu0
      %v2281 = vadd.f32 0.0, %v2280
      %v2282 = vpop.f32.mrb[0].mxu0
      %v2283 = vpop.f32.mrb[0].mxu0
      %2284 = vdwg.mxu0
      %v2317 = vunpack.c.l.b16 %v1977
      %v2318 = vunpack.c.h.b16 %v1977
      %v2319 = vunpack.c.l.b16 %v1978
      %v2320 = vunpack.c.h.b16 %v1978
      %v2321 = vunpack.c.l.b16 %v1979
      %v2322 = vunpack.c.h.b16 %v1979
      %v2323 = vunpack.c.l.b16 %v1980
      %v2324 = vunpack.c.h.b16 %v1980
      %v2325 = vunpack.c.l.b16 %v1981
      %v2326 = vunpack.c.h.b16 %v1981
      %v2327 = vunpack.c.l.b16 %v1982
      %v2328 = vunpack.c.h.b16 %v1982
      %v2329 = vunpack.c.l.b16 %v1983
      %v2330 = vunpack.c.h.b16 %v1983
      %v2331 = vunpack.c.l.b16 %v1984
      %v2332 = vunpack.c.h.b16 %v1984
      %v2333 = vunpack.c.l.b16 %v1985
      %v2334 = vunpack.c.h.b16 %v1985
      %v2335 = vunpack.c.l.b16 %v1986
      %v2336 = vunpack.c.h.b16 %v1986
      %v2337 = vunpack.c.l.b16 %v1987
      %v2338 = vunpack.c.h.b16 %v1987
      %v2339 = vunpack.c.l.b16 %v1988
      %v2340 = vunpack.c.h.b16 %v1988
      %v2341 = vunpack.c.l.b16 %v1989
      %v2342 = vunpack.c.h.b16 %v1989
      %v2343 = vunpack.c.l.b16 %v1990
      %v2344 = vunpack.c.h.b16 %v1990
      %v2345 = vunpack.c.l.b16 %v1991
      %v2346 = vunpack.c.h.b16 %v1991
      %v2347 = vunpack.c.l.b16 %v1992
      %v2348 = vunpack.c.h.b16 %v1992
      %v2349 = vunpack.c.l.b16 %v1993
      %v2350 = vunpack.c.h.b16 %v1993
      %v2351 = vunpack.c.l.b16 %v1994
      %v2352 = vunpack.c.h.b16 %v1994
      %v2353 = vunpack.c.l.b16 %v1995
      %v2354 = vunpack.c.h.b16 %v1995
      %v2355 = vunpack.c.l.b16 %v1996
      %v2356 = vunpack.c.h.b16 %v1996
      %v2357 = vunpack.c.l.b16 %v1997
      %v2358 = vunpack.c.h.b16 %v1997
      %v2359 = vunpack.c.l.b16 %v1998
      %v2360 = vunpack.c.h.b16 %v1998
      %v2361 = vunpack.c.l.b16 %v1999
      %v2362 = vunpack.c.h.b16 %v1999
      %v2363 = vunpack.c.l.b16 %v2000
      %v2364 = vunpack.c.h.b16 %v2000
      %v2365 = vunpack.c.l.b16 %v2001
      %v2366 = vunpack.c.h.b16 %v2001
      %v2367 = vunpack.c.l.b16 %v2002
      %v2368 = vunpack.c.h.b16 %v2002
      %v2369 = vunpack.c.l.b16 %v2003
      %v2370 = vunpack.c.h.b16 %v2003
      %v2371 = vunpack.c.l.b16 %v2004
      %v2372 = vunpack.c.h.b16 %v2004
      %v2373 = vunpack.c.l.b16 %v2005
      %v2374 = vunpack.c.h.b16 %v2005
      %v2375 = vunpack.c.l.b16 %v2006
      %v2376 = vunpack.c.h.b16 %v2006
      %v2377 = vunpack.c.l.b16 %v2007
      %v2378 = vunpack.c.h.b16 %v2007
      %v2379 = vunpack.c.l.b16 %v2008
      %v2380 = vunpack.c.h.b16 %v2008
      %v2381 = vpack.c.b16 %v2321, %v2317
      %v2382 = vpack.c.b16 %v2322, %v2318
      %v2383 = vpack.c.b16 %v2323, %v2319
      %v2384 = vpack.c.b16 %v2324, %v2320
      %v2385 = vpack.c.b16 %v2329, %v2325
      %v2386 = vpack.c.b16 %v2330, %v2326
      %v2387 = vpack.c.b16 %v2331, %v2327
      %v2388 = vpack.c.b16 %v2332, %v2328
      %v2389 = vpack.c.b16 %v2337, %v2333
      %v2390 = vpack.c.b16 %v2338, %v2334
      %v2391 = vpack.c.b16 %v2339, %v2335
      %v2392 = vpack.c.b16 %v2340, %v2336
      %v2393 = vpack.c.b16 %v2345, %v2341
      %v2394 = vpack.c.b16 %v2346, %v2342
      %v2395 = vpack.c.b16 %v2347, %v2343
      %v2396 = vpack.c.b16 %v2348, %v2344
      %v2397 = vpack.c.b16 %v2353, %v2349
      %v2398 = vpack.c.b16 %v2354, %v2350
      %v2399 = vpack.c.b16 %v2355, %v2351
      %v2400 = vpack.c.b16 %v2356, %v2352
      %v2401 = vpack.c.b16 %v2361, %v2357
      %v2402 = vpack.c.b16 %v2362, %v2358
      %v2403 = vpack.c.b16 %v2363, %v2359
      %v2404 = vpack.c.b16 %v2364, %v2360
      %v2405 = vpack.c.b16 %v2369, %v2365
      %v2406 = vpack.c.b16 %v2370, %v2366
      %v2407 = vpack.c.b16 %v2371, %v2367
      %v2408 = vpack.c.b16 %v2372, %v2368
      %v2409 = vpack.c.b16 %v2377, %v2373
      %v2410 = vpack.c.b16 %v2378, %v2374
      %v2411 = vpack.c.b16 %v2379, %v2375
      %v2412 = vpack.c.b16 %v2380, %v2376
      %2445 = vmatprep.subr.bf16.mxu0 %v2382
      %2446 = vmatpush1.bf16.msra.mxu0 %v2381
      %2447 = vmatprep.subr.bf16.mxu0 %v2386
      %2448 = vmatpush1.bf16.msra.mxu0 %v2385
      %2449 = vmatprep.subr.bf16.mxu0 %v2390
      %2450 = vmatpush1.bf16.msra.mxu0 %v2389
      %2451 = vmatprep.subr.bf16.mxu0 %v2394
      %2452 = vmatpush1.bf16.msra.mxu0 %v2393
      %2453 = vmatprep.subr.bf16.mxu0 %v2398
      %2454 = vmatpush1.bf16.msra.mxu0 %v2397
      %2455 = vmatprep.subr.bf16.mxu0 %v2402
      %2456 = vmatpush1.bf16.msra.mxu0 %v2401
      %2457 = vmatprep.subr.bf16.mxu0 %v2406
      %2458 = vmatpush1.bf16.msra.mxu0 %v2405
      %2459 = vmatprep.subr.bf16.mxu0 %v2410
      %2460 = vmatpush1.bf16.msra.mxu0 %v2409
      %2461 = vmatprep.subr.bf16.mxu0 0
      %2462 = vmatpush1.bf16.msra.mxu0 0
      %2463 = vmatprep.subr.bf16.mxu0 0
      %2464 = vmatpush1.bf16.msra.mxu0 0
      %2465 = vmatprep.subr.bf16.mxu0 0
      %2466 = vmatpush1.bf16.msra.mxu0 0
      %2467 = vmatprep.subr.bf16.mxu0 0
      %2468 = vmatpush1.bf16.msra.mxu0 0
      %2469 = vmatprep.subr.bf16.mxu0 0
      %2470 = vmatpush1.bf16.msra.mxu0 0
      %2471 = vmatprep.subr.bf16.mxu0 0
      %2472 = vmatpush1.bf16.msra.mxu0 0
      %2473 = vmatprep.subr.bf16.mxu0 0
      %2474 = vmatpush1.bf16.msra.mxu0 0
      %2475 = vmatprep.subr.bf16.mxu0 0
      %2476 = vmatpush1.bf16.msra.mxu0 0
      %2477 = vmatprep.mubr.bf16.mxu0 0
      %2478 = vmatmul.mubr.bf16.gmra.mrb[0].mxu0 %v1971
      %v2479 = vpop.f32.mrb[0].mxu0
      %v2480 = vadd.f32 %v2238, %v2479
      %v2481 = vpop.f32.mrb[0].mxu0
      %v2482 = vadd.f32 %v2240, %v2481
      %v2483 = vpop.f32.mrb[0].mxu0
      %v2484 = vpop.f32.mrb[0].mxu0
      %2485 = vdwg.mxu0
      %2486 = vmatprep.subr.bf16.mxu0 %v2384
      %2487 = vmatpush1.bf16.msra.mxu0 %v2383
      %2488 = vmatprep.subr.bf16.mxu0 %v2388
      %2489 = vmatpush1.bf16.msra.mxu0 %v2387
      %2490 = vmatprep.subr.bf16.mxu0 %v2392
      %2491 = vmatpush1.bf16.msra.mxu0 %v2391
      %2492 = vmatprep.subr.bf16.mxu0 %v2396
      %2493 = vmatpush1.bf16.msra.mxu0 %v2395
      %2494 = vmatprep.subr.bf16.mxu0 %v2400
      %2495 = vmatpush1.bf16.msra.mxu0 %v2399
      %2496 = vmatprep.subr.bf16.mxu0 %v2404
      %2497 = vmatpush1.bf16.msra.mxu0 %v2403
      %2498 = vmatprep.subr.bf16.mxu0 %v2408
      %2499 = vmatpush1.bf16.msra.mxu0 %v2407
      %2500 = vmatprep.subr.bf16.mxu0 %v2412
      %2501 = vmatpush1.bf16.msra.mxu0 %v2411
      %2502 = vmatprep.subr.bf16.mxu0 0
      %2503 = vmatpush1.bf16.msra.mxu0 0
      %2504 = vmatprep.subr.bf16.mxu0 0
      %2505 = vmatpush1.bf16.msra.mxu0 0
      %2506 = vmatprep.subr.bf16.mxu0 0
      %2507 = vmatpush1.bf16.msra.mxu0 0
      %2508 = vmatprep.subr.bf16.mxu0 0
      %2509 = vmatpush1.bf16.msra.mxu0 0
      %2510 = vmatprep.subr.bf16.mxu0 0
      %2511 = vmatpush1.bf16.msra.mxu0 0
      %2512 = vmatprep.subr.bf16.mxu0 0
      %2513 = vmatpush1.bf16.msra.mxu0 0
      %2514 = vmatprep.subr.bf16.mxu0 0
      %2515 = vmatpush1.bf16.msra.mxu0 0
      %2516 = vmatprep.subr.bf16.mxu0 0
      %2517 = vmatpush1.bf16.msra.mxu0 0
      %2518 = vmatprep.mubr.bf16.mxu0 0
      %2519 = vmatmul.mubr.bf16.gmra.mrb[0].mxu0 %v1971
      %v2520 = vpop.f32.mrb[0].mxu0
      %v2521 = vadd.f32 %v2279, %v2520
      %v2522 = vpop.f32.mrb[0].mxu0
      %v2523 = vadd.f32 %v2281, %v2522
      %v2524 = vpop.f32.mrb[0].mxu0
      %v2525 = vpop.f32.mrb[0].mxu0
      %2526 = vdwg.mxu0
      %s2527 = scalar_lea.vmem [#allocation14], 12
      %v2528 = vld [vmem:[%s2527] sm:$0xf]
      %v2530 = vlaneseq
      %v2531 = vshrl.u32 %v2530, 7
      %v2532 = vsub.s32 0, %v2531
      %v2533 = vrot.slane %v2528, %v2532
      %v2534 = vlaneseq
      %v2535 = vshrl.u32 %v2534, 7
      %v2536 = vsub.s32 1, %v2535
      %v2537 = vrot.slane %v2528, %v2536
      %v2538 = vlaneseq
      %v2539 = vshrl.u32 %v2538, 7
      %v2540 = vsub.s32 2, %v2539
      %v2541 = vrot.slane %v2528, %v2540
      %v2542 = vlaneseq
      %v2543 = vshrl.u32 %v2542, 7
      %v2544 = vsub.s32 3, %v2543
      %v2545 = vrot.slane %v2528, %v2544
      %v2550 = vadd.f32 %v2480, %v2533
      %v2551 = vadd.f32 %v2482, %v2537
      %v2552 = vadd.f32 %v2521, %v2541
      %v2553 = vadd.f32 %v2523, %v2545
      %v2554 = vxor.u32 %v2550, 2147483648
      %v2555 = vmul.f32 %v2554, 1.442695
      %v2556 = vpow.pop %v2555
      %v2557 = vadd.f32 %v2556, 1.0
      %v2558 = vrcp.pop %v2557
      %v2559 = vmul.f32 1.0, %v2558
      %v2560 = vxor.u32 %v2551, 2147483648
      %v2561 = vmul.f32 %v2560, 1.442695
      %v2562 = vpow.pop %v2561
      %v2563 = vadd.f32 %v2562, 1.0
      %v2564 = vrcp.pop %v2563
      %v2565 = vmul.f32 1.0, %v2564
      %v2566 = vtanh.pop %v2552
      %v2567 = vxor.u32 %v2553, 2147483648
      %v2568 = vmul.f32 %v2567, 1.442695
      %v2569 = vpow.pop %v2568
      %v2570 = vadd.f32 %v2569, 1.0
      %v2571 = vrcp.pop %v2570
      %v2572 = vmul.f32 1.0, %v2571
      %v2573 = vmul.f32 %v2565, %v1975
      %v2574 = vmul.f32 %v2559, %v2566
      %v2575 = vadd.f32 %v2573, %v2574
      %v2576 = vtanh.pop %v2575
      %v2577 = vmul.f32 %v2572, %v2576
      %s2578 = scalar_lea.vmem [#allocation20], 24
      %2579 = vst [vmem:[%s2578] sm:$0xff] %v2577
      %s2580 = scalar_lea.vmem [#allocation22], 24
      %2581 = vst [vmem:[%s2580] sm:$0xff] %v2575
      %v2582 = vpack.c.bf16 %v2577, %v2577
      %2583 = vst [vmem:[#allocation2] sm:$0xf] %v2582
      %vm2584 = vcmask 7168
      %2585 = vst.msk [vmem:[#allocation3] sm:$0xff] %vm2584, -inf
      %2586 = vst.msk [vmem:[#allocation4] sm:$0xff] %vm2584, 0.0
    $region69: #{fwd.1} parent=1 // pred_fallthru
      _
    %v2587 = vld [vmem:[#allocation2] sm:$0xf]
    %v2588 = vld [vmem:[#allocation16] sm:$0xf]
    %v2589 = vld [vmem:[#allocation16 + $0x4] sm:$0xf]
    %v2590 = vld [vmem:[#allocation16 + $0x8] sm:$0xf]
    %v2591 = vld [vmem:[#allocation16 + $0xc] sm:$0xf]
    %v2592 = vld [vmem:[#allocation16 + $0x10] sm:$0xf]
    %v2593 = vld [vmem:[#allocation16 + $0x14] sm:$0xf]
    %v2594 = vld [vmem:[#allocation16 + $0x18] sm:$0xf]
    %v2595 = vld [vmem:[#allocation16 + $0x1c] sm:$0xf]
    %v2596 = vld [vmem:[#allocation16 + $0x20] sm:$0xf]
    %v2597 = vld [vmem:[#allocation16 + $0x24] sm:$0xf]
    %v2598 = vld [vmem:[#allocation16 + $0x28] sm:$0xf]
    %v2599 = vld [vmem:[#allocation16 + $0x2c] sm:$0xf]
    %v2600 = vld [vmem:[#allocation16 + $0x30] sm:$0xf]
    %v2601 = vld [vmem:[#allocation16 + $0x34] sm:$0xf]
    %v2602 = vld [vmem:[#allocation16 + $0x38] sm:$0xf]
    %v2603 = vld [vmem:[#allocation16 + $0x3c] sm:$0xf]
    %v2604 = vld [vmem:[#allocation17] sm:$0x1]
    %v2606 = vlaneseq
    %v2607 = vshrl.u32 %v2606, 7
    %v2608 = vsub.s32 0, %v2607
    %v2609 = vrot.slane %v2604, %v2608
    %v2627 = vunpack.c.l.b16 %v2588
    %v2628 = vunpack.c.l.b16 %v2589
    %v2629 = vunpack.c.l.b16 %v2590
    %v2630 = vunpack.c.l.b16 %v2591
    %v2631 = vunpack.c.l.b16 %v2592
    %v2632 = vunpack.c.l.b16 %v2593
    %v2633 = vunpack.c.l.b16 %v2594
    %v2634 = vunpack.c.l.b16 %v2595
    %v2635 = vunpack.c.l.b16 %v2596
    %v2636 = vunpack.c.l.b16 %v2597
    %v2637 = vunpack.c.l.b16 %v2598
    %v2638 = vunpack.c.l.b16 %v2599
    %v2639 = vunpack.c.l.b16 %v2600
    %v2640 = vunpack.c.l.b16 %v2601
    %v2641 = vunpack.c.l.b16 %v2602
    %v2642 = vunpack.c.l.b16 %v2603
    %v2643 = vpack.c.b16 %v2628, %v2627
    %v2644 = vpack.c.b16 %v2630, %v2629
    %v2645 = vpack.c.b16 %v2632, %v2631
    %v2646 = vpack.c.b16 %v2634, %v2633
    %v2647 = vpack.c.b16 %v2636, %v2635
    %v2648 = vpack.c.b16 %v2638, %v2637
    %v2649 = vpack.c.b16 %v2640, %v2639
    %v2650 = vpack.c.b16 %v2642, %v2641
    %2659 = vmatprep.subr.bf16.mxu0 0
    %2660 = vmatpush1.bf16.msra.mxu0 %v2643
    %2661 = vmatprep.subr.bf16.mxu0 0
    %2662 = vmatpush1.bf16.msra.mxu0 %v2644
    %2663 = vmatprep.subr.bf16.mxu0 0
    %2664 = vmatpush1.bf16.msra.mxu0 %v2645
    %2665 = vmatprep.subr.bf16.mxu0 0
    %2666 = vmatpush1.bf16.msra.mxu0 %v2646
    %2667 = vmatprep.subr.bf16.mxu0 0
    %2668 = vmatpush1.bf16.msra.mxu0 %v2647
    %2669 = vmatprep.subr.bf16.mxu0 0
    %2670 = vmatpush1.bf16.msra.mxu0 %v2648
    %2671 = vmatprep.subr.bf16.mxu0 0
    %2672 = vmatpush1.bf16.msra.mxu0 %v2649
    %2673 = vmatprep.subr.bf16.mxu0 0
    %2674 = vmatpush1.bf16.msra.mxu0 %v2650
    %2675 = vmatprep.subr.bf16.mxu0 0
    %2676 = vmatpush1.bf16.msra.mxu0 0
    %2677 = vmatprep.subr.bf16.mxu0 0
    %2678 = vmatpush1.bf16.msra.mxu0 0
    %2679 = vmatprep.subr.bf16.mxu0 0
    %2680 = vmatpush1.bf16.msra.mxu0 0
    %2681 = vmatprep.subr.bf16.mxu0 0
    %2682 = vmatpush1.bf16.msra.mxu0 0
    %2683 = vmatprep.subr.bf16.mxu0 0
    %2684 = vmatpush1.bf16.msra.mxu0 0
    %2685 = vmatprep.subr.bf16.mxu0 0
    %2686 = vmatpush1.bf16.msra.mxu0 0
    %2687 = vmatprep.subr.bf16.mxu0 0
    %2688 = vmatpush1.bf16.msra.mxu0 0
    %2689 = vmatprep.subr.bf16.mxu0 0
    %2690 = vmatpush1.bf16.msra.mxu0 0
    %2691 = vmatprep.mubr.bf16.mxu0 0
    %2692 = vmatmul.mubr.bf16.gmra.mrb[0].mxu0 %v2587
    %v2693 = vpop.f32.mrb[0].mxu0
    %v2694 = vadd.f32 %v2609, %v2693
    %v2695 = vpop.f32.mrb[0].mxu0
    %v2696 = vpop.f32.mrb[0].mxu0
    %v2697 = vpop.f32.mrb[0].mxu0
    %2698 = vdwg.mxu0
    %s2699 = smul.u32 0, 128
    %s2700 = sshra.s32 %s2699, 7
    %s2701 = sand.u32 %s2699, 127
    %s2702 = scalar_lea.vmem [#allocation19], %s2700
    %2703 = vst [vmem:[%s2702] sm:$0xff] %v2694
    %v2704 = vld [vmem:[#allocation3] sm:$0xff]
    %2705 = vmax.xlane.f32.xlu0 %v2694
    %v2706 = vpop.xlane.xlu0 %2705
    %v2707 = vmax.f32 %v2704, %v2706
    %v2708 = vld [vmem:[#allocation4] sm:$0xff]
    %v2709 = vsub.f32 %v2704, %v2707
    %v2710 = vmul.f32 %v2709, 1.442695
    %v2711 = vpow.pop %v2710
    %v2712 = vmul.f32 %v2708, %v2711
    %2714 = vset.pattern.permute.xlu0 0
    %2715 = vperm.xlu0 %2714, %v2707
    %v2716 = vpop.permute.xlu0 %2715
    %v2718 = vsub.f32 %v2694, %v2716
    %v2719 = vmul.f32 %v2718, 1.442695
    %v2720 = vpow.pop %v2719
    %2721 = vadd.xlane.f32.xlu0 %v2720
    %v2722 = vpop.xlane.xlu0 %2721
    %v2723 = vadd.f32 %v2712, %v2722
    %vm2724 = vcmask 7168
    %2725 = vst.msk [vmem:[#allocation4] sm:$0xff] %vm2724, %v2723
    %2726 = vst.msk [vmem:[#allocation3] sm:$0xff] %vm2724, %v2707
    // Predicated region
    $region70: #{fwd.1} parent=1 // pred_check
      %p2727 = pneg %p140
    $region71: #{fwd.1} parent=1 // pred_check_branch
      %2729 = sbr.rel (%p2727) target = $region73
    $region72: #{fwd.1} parent=1 // pred_region
      %v2730 = vld [vmem:[#allocation3] sm:$0xff]
      %v2731 = vld [vmem:[#allocation4] sm:$0xff]
      %v2732 = vlog2.pop %v2731
      %v2733 = vmul.f32 %v2732, 0.6931472
      %v2734 = vadd.f32 %v2730, %v2733
      %v2735 = vld [vmem:[#allocation19] sm:$0xff]
      %2737 = vset.pattern.permute.xlu0 0
      %2738 = vperm.xlu0 %2737, %v2734
      %v2739 = vpop.permute.xlu0 %2738
      %v2741 = vsub.f32 %v2735, %v2739
      %2742 = vst [vmem:[#allocation19] sm:$0xff] %v2741
    $region73: #{fwd.1} parent=1 // pred_fallthru
      _
    // Predicated region
    $region74: #{fwd.1} parent=1 // pred_check
      _
    $region75: #{fwd.1} parent=1 // pred_check_branch
      %2744 = sbr.rel (0) target = $region77
    $region76: #{fwd.1} parent=1 // pred_region
      %s2746 = ssub.s32 128, 128
      %2747 = vsyncadd [#allocation7], %s2746
      %s2749 = sshll.u32 [#allocation19], 4
      %s2750 = int_to_ptr.vmem [resolvable:$true] %s2749
      %2752 = dma.vmem_to_hbm [thread:$0]  %s2750, 128, %s8, [#allocation7]
    $region77: #{fwd.1} parent=1 // pred_fallthru
      _
    // Predicated region
    $region78: #{fwd.1} parent=1 // pred_check
      _
    $region79: #{fwd.1} parent=1 // pred_check_branch
      %2754 = sbr.rel (0) target = $region81
    $region80: #{fwd.1} parent=1 // pred_region
      %s2756 = ssub.s32 512, 512
      %2757 = vsyncadd [#allocation21], %s2756
      %s2758 = sshll.u32 [#allocation20], 4
      %s2759 = int_to_ptr.vmem [resolvable:$true] %s2758
      %2764 = dma.vmem_to_hbm [thread:$0]  %s2759, 512, %s9, [#allocation21], 128, 128, 8
    $region81: #{fwd.1} parent=1 // pred_fallthru
      _
    // Predicated region
    $region82: #{fwd.1} parent=1 // pred_check
      _
    $region83: #{fwd.1} parent=1 // pred_check_branch
      %2766 = sbr.rel (0) target = $region85
    $region84: #{fwd.1} parent=1 // pred_region
      %s2768 = ssub.s32 512, 512
      %2769 = vsyncadd [#allocation21], %s2768
      %s2770 = sshll.u32 [#allocation22], 4
      %s2771 = int_to_ptr.vmem [resolvable:$true] %s2770
      %2776 = dma.vmem_to_hbm [thread:$0]  %s2771, 512, %s10, [#allocation21], 128, 128, 8
    $region85: #{fwd.1} parent=1 // pred_fallthru
      _
    // Predicated region
    $region86: #{fwd.1} parent=1 // pred_check
      _
    $region87: #{fwd.1} parent=1 // pred_check_branch
      %2778 = sbr.rel (0) target = $region89
    $region88: #{fwd.1} parent=1 // pred_region
      %2779 = dma.done [#allocation7], 128
    $region89: #{fwd.1} parent=1 // pred_fallthru
      _
    // Predicated region
    $region90: #{fwd.1} parent=1 // pred_check
      _
    $region91: #{fwd.1} parent=1 // pred_check_branch
      %2781 = sbr.rel (0) target = $region93
    $region92: #{fwd.1} parent=1 // pred_region
      %2782 = dma.done [#allocation21], 512
    $region93: #{fwd.1} parent=1 // pred_fallthru
      _
    // Predicated region
    $region94: #{fwd.1} parent=1 // pred_check
      _
    $region95: #{fwd.1} parent=1 // pred_check_branch
      %2784 = sbr.rel (0) target = $region97
    $region96: #{fwd.1} parent=1 // pred_region
      %2785 = dma.done [#allocation21], 512
    $region97: #{fwd.1} parent=1 // pred_fallthru
      _
    %2786 = vsyncpa [#allocation6], 1
    %2787 = vsyncpa [#allocation9], 1
    %2788 = vsyncpa [#allocation12], 1
    %2789 = vsyncpa [#allocation15], 1
    %2790 = vsyncpa [#allocation18], 1
    %2791 = vsyncpa [#allocation7], 1
    %2792 = vsyncpa [#allocation21], 1

</llo_original>
